<compile_context>
chip_gen: v7x
topology: tpu7x:2x2x1
jax: 0.10.0
libtpu: 0.0.40
codegen_flags: <defaults>
</compile_context>

<pallas_src>
import functools
import math

import jax
import jax.numpy as jnp
import numpy as np
from jax import lax
from jax.experimental import pallas as pl
from jax.experimental.pallas import tpu as pltpu

# ----------------------------- model dims -----------------------------------
INPUT_SIZE = 2
HIDDEN = 100
NUM_LAYERS = 4
FC_DIMS = [(HIDDEN, HIDDEN), (HIDDEN, HIDDEN), (HIDDEN, HIDDEN), (HIDDEN, 1)]

# padded dims for TPU lane/sublane alignment
HP = 128          # hidden, padded to one vreg of lanes
GP = 4 * HP       # 4 gates (PyTorch order i|f|g|o), each 128 lanes wide
BP = 8            # batch, padded to a sublane multiple


def sigmoid_via_tanh(x):
    # sigmoid(x) == 0.5*(tanh(x/2)+1): single EUP tanh + VPU fma
    return 0.5 * (jnp.tanh(0.5 * x) + 1.0)


# ----------------------------- Pallas kernel --------------------------------
def lstm_net_kernel(pre0_ref, wih_ref, whh_ref, b_ref, fcw_ref, fcb_ref,
                    out_ref, seq_ref, pre_ref, *, seq_len):
    """One grid step == one LSTM layer.

    pre0_ref : (T*BP, GP) f32   layer-0 gate pre-activations (x@Wih0 + b0), padded
    wih_ref  : (1, HP, GP) bf16 this layer's input->gate weights (layers 1..3)
    whh_ref  : (1, HP, GP) bf16 this layer's hidden->gate weights
    b_ref    : (1, 1, GP) f32   combined bias b_ih+b_hh (layers 1..3)
    fcw_ref  : (4, HP, HP) bf16 FC weights (last one only uses col 0)
    fcb_ref  : (4, 1, HP) f32   FC biases
    out_ref  : (BP, HP) f32     padded output (col 0 is the scalar output)
    seq_ref  : (T*BP, HP) f32   VMEM scratch: this layer's output sequence
    pre_ref  : (T*BP, GP) f32   VMEM scratch: this layer's input projection
    """
    l = pl.program_id(0)
    num_layers = pl.num_programs(0)

    # ---- per-layer input projection: one big matmul, bias folded in once ----
    @pl.when(l == 0)
    def _():
        pre_ref[...] = pre0_ref[...]          # already contains bias

    @pl.when(l > 0)
    def _():
        seq_bf = seq_ref[...].astype(jnp.bfloat16)            # (T*BP, HP)
        pre_ref[...] = (
            jnp.dot(seq_bf, wih_ref[0], preferred_element_type=jnp.float32)
            + b_ref[0])

    # ---- serial recurrence: only pre[t] + h @ Whh on the critical path ------
    def step(t, carry):
        h, c = carry
        row = t * BP
        pre_t = pre_ref[pl.ds(row, BP), :]                    # (BP, GP)
        gates = pre_t + jnp.dot(h.astype(jnp.bfloat16), whh_ref[0],
                                preferred_element_type=jnp.float32)
        i_g = sigmoid_via_tanh(gates[:, 0 * HP:1 * HP])
        f_g = sigmoid_via_tanh(gates[:, 1 * HP:2 * HP])
        g_g = jnp.tanh(gates[:, 2 * HP:3 * HP])
        o_g = sigmoid_via_tanh(gates[:, 3 * HP:4 * HP])
        c = f_g * c + i_g * g_g
        h = o_g * jnp.tanh(c)
        seq_ref[pl.ds(row, BP), :] = h                        # next layer's input
        return h, c

    h0 = jnp.zeros((BP, HP), jnp.float32)
    c0 = jnp.zeros((BP, HP), jnp.float32)
    h, _ = lax.fori_loop(0, seq_len, step, (h0, c0), unroll=True)

    # ---- FC head on the final hidden state of the top layer -----------------
    @pl.when(l == num_layers - 1)
    def _():
        y = jnp.tanh(h)
        for k in range(3):
            y = jnp.tanh(
                jnp.dot(y.astype(jnp.bfloat16), fcw_ref[k],
                        preferred_element_type=jnp.float32) + fcb_ref[k])
        out_ref[...] = (
            jnp.dot(y.astype(jnp.bfloat16), fcw_ref[3],
                    preferred_element_type=jnp.float32) + fcb_ref[3])


# ----------------------------- wrapper ---------------------------------------
@jax.jit
def lstm_net_forward(x, wih0, b0, wih, whh, b, fcw, fcb):
    """x: (B, T, 2) f32 -> (B, 1) f32 (matches the PyTorch forward)."""
    B, T, F = x.shape
    assert B <= BP

    # Layer-0 input projection in XLA (K=2, trivially cheap): avoids DMAing a
    # 99%-zero (128, 512) weight slab into the kernel.
    pre0 = jnp.dot(x.reshape(B * T, F).astype(jnp.bfloat16), wih0,
                   preferred_element_type=jnp.float32) + b0    # (B*T, GP)
    pre0 = jnp.transpose(pre0.reshape(B, T, GP), (1, 0, 2))    # (T, B, GP)
    pre0 = jnp.zeros((T, BP, GP), jnp.float32).at[:, :B, :].set(pre0)
    pre0 = pre0.reshape(T * BP, GP)

    grid_spec = pltpu.PrefetchScalarGridSpec(
        num_scalar_prefetch=0,
        grid=(NUM_LAYERS,),
        in_specs=[
            pl.BlockSpec((T * BP, GP), lambda l: (0, 0)),                    # pre0
            pl.BlockSpec((1, HP, GP), lambda l: (jnp.maximum(l - 1, 0), 0, 0)),  # wih (layers 1..3)
            pl.BlockSpec((1, HP, GP), lambda l: (l, 0, 0)),                  # whh
            pl.BlockSpec((1, 1, GP), lambda l: (jnp.maximum(l - 1, 0), 0, 0)),   # bias (layers 1..3)
            pl.BlockSpec((4, HP, HP), lambda l: (0, 0, 0)),                  # fcw
            pl.BlockSpec((4, 1, HP), lambda l: (0, 0, 0)),                   # fcb
        ],
        out_specs=pl.BlockSpec((BP, HP), lambda l: (0, 0)),
        scratch_shapes=[
            pltpu.VMEM((T * BP, HP), jnp.float32),   # running sequence
            pltpu.VMEM((T * BP, GP), jnp.float32),   # per-layer input projection
        ])

    out_pad = pl.pallas_call(
        functools.partial(lstm_net_kernel, seq_len=T),
        out_shape=jax.ShapeDtypeStruct((BP, HP), jnp.float32),
        grid_spec=grid_spec,
        compiler_params=pltpu.CompilerParams(
            dimension_semantics=("arbitrary",)),
    )(pre0, wih, whh, b, fcw, fcb)
    return out_pad[:B, :1]


# ----------------------------- parameter init --------------------------------
def init_params(key):
    """Deterministic synthetic parameters, padded into the kernel layout."""
    scale = 1.0 / math.sqrt(HIDDEN)   # PyTorch nn.LSTM default uniform bound
    keys = list(jax.random.split(key, 128))
    it = iter(keys)

    def u(shape, bound):
        return jax.random.uniform(next(it), shape, jnp.float32, -bound, bound)

    wih0 = jnp.zeros((INPUT_SIZE, GP), jnp.float32)        # layer 0, compact K=2
    b0 = jnp.zeros((GP,), jnp.float32)
    wih = jnp.zeros((NUM_LAYERS - 1, HP, GP), jnp.float32)  # layers 1..3
    b = jnp.zeros((NUM_LAYERS - 1, 1, GP), jnp.float32)
    whh = jnp.zeros((NUM_LAYERS, HP, GP), jnp.float32)

    for l in range(NUM_LAYERS):
        in_dim = INPUT_SIZE if l == 0 else HIDDEN
        for g in range(4):
            w_i = u((in_dim, HIDDEN), scale)
            w_h = u((HIDDEN, HIDDEN), scale)
            bias = u((HIDDEN,), scale) + u((HIDDEN,), scale)  # b_ih + b_hh folded
            c0, c1 = g * HP, g * HP + HIDDEN
            if l == 0:
                wih0 = wih0.at[:, c0:c1].set(w_i)
                b0 = b0.at[c0:c1].set(bias)
            else:
                wih = wih.at[l - 1, :HIDDEN, c0:c1].set(w_i)
                b = b.at[l - 1, 0, c0:c1].set(bias)
            whh = whh.at[l, :HIDDEN, c0:c1].set(w_h)

    fcw = jnp.zeros((4, HP, HP), jnp.float32)
    fcb = jnp.zeros((4, 1, HP), jnp.float32)
    for k, (din, dout) in enumerate(FC_DIMS):
        bound = 1.0 / math.sqrt(din)   # PyTorch nn.Linear default
        fcw = fcw.at[k, :din, :dout].set(u((din, dout), bound))
        fcb = fcb.at[k, 0, :dout].set(u((dout,), bound))

    # weights in bf16 (halved HBM traffic, native MXU dtype); biases stay f32
    return (wih0.astype(jnp.bfloat16), b0,
            wih.astype(jnp.bfloat16), whh.astype(jnp.bfloat16), b,
            fcw.astype(jnp.bfloat16), fcb)


# ----------------------------- pure-JAX reference ----------------------------
def ref_forward(x, wih0, b0, wih, whh, b, fcw, fcb):
    B, T, F = x.shape
    pre = (jnp.dot(x.reshape(B * T, F).astype(jnp.bfloat16), wih0,
                   preferred_element_type=jnp.float32).reshape(B, T, GP) + b0)
    h = jnp.zeros((B, HP), jnp.float32)
    seq = None
    for l in range(NUM_LAYERS):
        if l > 0:
            pre = (jnp.dot(seq.reshape(B * T, HP).astype(jnp.bfloat16), wih[l - 1],
                           preferred_element_type=jnp.float32).reshape(B, T, GP)
                   + b[l - 1])
        h = jnp.zeros((B, HP), jnp.float32)
        c = jnp.zeros((B, HP), jnp.float32)
        hs = []
        for t in range(T):
            gates = pre[:, t, :] + jnp.dot(h.astype(jnp.bfloat16), whh[l],
                                           preferred_element_type=jnp.float32)
            i_g = sigmoid_via_tanh(gates[:, 0 * HP:1 * HP])
            f_g = sigmoid_via_tanh(gates[:, 1 * HP:2 * HP])
            g_g = jnp.tanh(gates[:, 2 * HP:3 * HP])
            o_g = sigmoid_via_tanh(gates[:, 3 * HP:4 * HP])
            c = f_g * c + i_g * g_g
            h = o_g * jnp.tanh(c)
            hs.append(h)
        seq = jnp.stack(hs, axis=1)   # (B, T, HP)
    y = jnp.tanh(h)
    for k in range(3):
        y = jnp.tanh(jnp.dot(y.astype(jnp.bfloat16), fcw[k],
                             preferred_element_type=jnp.float32) + fcb[k])
    out = jnp.dot(y.astype(jnp.bfloat16), fcw[3],
                  preferred_element_type=jnp.float32) + fcb[3]
    return out[:, :1]


# ----------------------------- main -------------------------------------------
if __name__ == "__main__":
    key = jax.random.PRNGKey(0)
    pkey, xkey = jax.random.split(key)
    params = init_params(pkey)

    B, T = 2, 8
    x = jax.random.normal(xkey, (B, T, INPUT_SIZE), jnp.float32)

    out = lstm_net_forward(x, *params)
    out = jax.block_until_ready(out)

    ref = ref_forward(x, *params)
    np.testing.assert_allclose(np.asarray(out), np.asarray(ref),
                               rtol=2e-3, atol=1e-4)
    assert out.shape == (B, 1)
    print("KERNEL_OK")
</pallas_src>

<mosaic_0001>
module attributes {stable_mosaic.version = 11 : i64} {
  func.func @lstm_net_kernel(%arg0: i32, %arg1: memref<64x512xf32, #tpu.memory_space<vmem>>, %arg2: memref<1x128x512xbf16, #tpu.memory_space<vmem>>, %arg3: memref<1x128x512xbf16, #tpu.memory_space<vmem>>, %arg4: memref<1x1x512xf32, #tpu.memory_space<vmem>>, %arg5: memref<4x128x128xbf16, #tpu.memory_space<vmem>>, %arg6: memref<4x1x128xf32, #tpu.memory_space<vmem>>, %arg7: memref<8x128xf32, #tpu.memory_space<vmem>>, %arg8: memref<64x128xf32, #tpu.memory_space<vmem>>, %arg9: memref<64x512xf32, #tpu.memory_space<vmem>>) attributes {dimension_semantics = [#tpu.dimension_semantics<arbitrary>], iteration_bounds = array<i64: 4>, scalar_prefetch = 0 : i64, scratch_operands = 2 : i64, tpu.core_type = #tpu.core_type<tc>, window_params = [{pipeline_mode = #tpu.pipeline_mode<synchronous>, transform_indices = @transform_0, window_bounds = array<i64: 64, 512>}, {transform_indices = @transform_1, window_bounds = array<i64: 1, 128, 512>}, {transform_indices = @transform_2, window_bounds = array<i64: 1, 128, 512>}, {transform_indices = @transform_3, window_bounds = array<i64: 1, 1, 512>}, {pipeline_mode = #tpu.pipeline_mode<synchronous>, transform_indices = @transform_4, window_bounds = array<i64: 4, 128, 128>}, {pipeline_mode = #tpu.pipeline_mode<synchronous>, transform_indices = @transform_5, window_bounds = array<i64: 4, 1, 128>}, {pipeline_mode = #tpu.pipeline_mode<synchronous>, transform_indices = @transform_6, window_bounds = array<i64: 8, 128>}]} {
    %c0_i32 = arith.constant 0 : i32
    %0 = arith.cmpi eq, %arg0, %c0_i32 : i32
    %1 = arith.extui %0 : i1 to i32
    %c0_i32_0 = arith.constant 0 : i32
    %2 = arith.cmpi ne, %1, %c0_i32_0 : i32
    scf.if %2 {
      %c0_134 = arith.constant 0 : index
      %c0_135 = arith.constant 0 : index
      %339 = vector.load %arg1[%c0_134, %c0_135] : memref<64x512xf32, #tpu.memory_space<vmem>>, vector<64x512xf32>
      %c0_136 = arith.constant 0 : index
      %c0_137 = arith.constant 0 : index
      %340 = vector.load %arg9[%c0_136, %c0_137] : memref<64x512xf32, #tpu.memory_space<vmem>>, vector<64x512xf32>
      tpu.vector_store %arg9[%c0_136, %c0_137], %339 {strides = array<i32>} : memref<64x512xf32, #tpu.memory_space<vmem>>, vector<64x512xf32>,
    } else {
    }
    %c0_i32_1 = arith.constant 0 : i32
    %3 = arith.cmpi sgt, %arg0, %c0_i32_1 : i32
    %4 = arith.extui %3 : i1 to i32
    %c0_i32_2 = arith.constant 0 : i32
    %5 = arith.cmpi ne, %4, %c0_i32_2 : i32
    scf.if %5 {
      %c0_134 = arith.constant 0 : index
      %c0_135 = arith.constant 0 : index
      %339 = vector.load %arg8[%c0_134, %c0_135] : memref<64x128xf32, #tpu.memory_space<vmem>>, vector<64x128xf32>
      %340 = arith.truncf %339 : vector<64x128xf32> to vector<64x128xbf16>
      %c0_136 = arith.constant 0 : index
      %c0_137 = arith.constant 0 : index
      %c0_138 = arith.constant 0 : index
      %341 = vector.load %arg2[%c0_136, %c0_137, %c0_138] : memref<1x128x512xbf16, #tpu.memory_space<vmem>>, vector<1x128x512xbf16>
      %342 = vector.shape_cast %341 : vector<1x128x512xbf16> to vector<128x512xbf16>
      %cst_139 = arith.constant dense<0.000000e+00> : vector<64x512xf32>
      %343 = tpu.matmul %340, %342, %cst_139 {dimension_numbers = #tpu.dot_dimension_numbers<[1], [0], [0], [1], [0, 0, 1, 1], [], []>} : vector<64x128xbf16>, vector<128x512xbf16>, vector<64x512xf32> -> vector<64x512xf32>
      %c0_140 = arith.constant 0 : index
      %c0_141 = arith.constant 0 : index
      %c0_142 = arith.constant 0 : index
      %344 = vector.load %arg4[%c0_140, %c0_141, %c0_142] : memref<1x1x512xf32, #tpu.memory_space<vmem>>, vector<1x1x512xf32>
      %345 = vector.shape_cast %344 : vector<1x1x512xf32> to vector<1x512xf32>
      %346 = vector.broadcast %345 : vector<1x512xf32> to vector<64x512xf32>
      %347 = arith.addf %343, %346 : vector<64x512xf32>
      %c0_143 = arith.constant 0 : index
      %c0_144 = arith.constant 0 : index
      %348 = vector.load %arg9[%c0_143, %c0_144] : memref<64x512xf32, #tpu.memory_space<vmem>>, vector<64x512xf32>
      tpu.vector_store %arg9[%c0_143, %c0_144], %347 {strides = array<i32>} : memref<64x512xf32, #tpu.memory_space<vmem>>, vector<64x512xf32>,
    } else {
    }
    %cst = arith.constant 0.000000e+00 : f32
    %6 = vector.broadcast %cst : f32 to vector<8x128xf32>
    %cst_3 = arith.constant 0.000000e+00 : f32
    %7 = vector.broadcast %cst_3 : f32 to vector<8x128xf32>
    %c0_i32_4 = arith.constant 0 : i32
    %c8_i32 = arith.constant 8 : i32
    %8 = arith.muli %c0_i32_4, %c8_i32 : i32
    %9 = arith.index_cast %8 : i32 to index
    %c0 = arith.constant 0 : index
    %10 = vector.load %arg9[%9, %c0] : memref<64x512xf32, #tpu.memory_space<vmem>>, vector<8x512xf32>
    %11 = arith.truncf %6 : vector<8x128xf32> to vector<8x128xbf16>
    %c0_5 = arith.constant 0 : index
    %c0_6 = arith.constant 0 : index
    %c0_7 = arith.constant 0 : index
    %12 = vector.load %arg3[%c0_5, %c0_6, %c0_7] : memref<1x128x512xbf16, #tpu.memory_space<vmem>>, vector<1x128x512xbf16>
    %13 = vector.shape_cast %12 : vector<1x128x512xbf16> to vector<128x512xbf16>
    %cst_8 = arith.constant dense<0.000000e+00> : vector<8x512xf32>
    %14 = tpu.matmul %11, %13, %cst_8 {dimension_numbers = #tpu.dot_dimension_numbers<[1], [0], [0], [1], [0, 0, 1, 1], [], []>} : vector<8x128xbf16>, vector<128x512xbf16>, vector<8x512xf32> -> vector<8x512xf32>
    %15 = arith.addf %10, %14 : vector<8x512xf32>
    %16 = vector.extract_strided_slice %15 {offsets = [0, 0], sizes = [8, 128], strides = [1, 1]} : vector<8x512xf32> to vector<8x128xf32>
    %cst_9 = arith.constant 5.000000e-01 : f32
    %17 = vector.broadcast %cst_9 : f32 to vector<8x128xf32>
    %18 = arith.mulf %17, %16 : vector<8x128xf32>
    %19 = math.tanh %18 : vector<8x128xf32>
    %cst_10 = arith.constant 1.000000e+00 : f32
    %20 = vector.broadcast %cst_10 : f32 to vector<8x128xf32>
    %21 = arith.addf %19, %20 : vector<8x128xf32>
    %cst_11 = arith.constant 5.000000e-01 : f32
    %22 = vector.broadcast %cst_11 : f32 to vector<8x128xf32>
    %23 = arith.mulf %22, %21 : vector<8x128xf32>
    %24 = vector.extract_strided_slice %15 {offsets = [0, 128], sizes = [8, 128], strides = [1, 1]} : vector<8x512xf32> to vector<8x128xf32>
    %cst_12 = arith.constant 5.000000e-01 : f32
    %25 = vector.broadcast %cst_12 : f32 to vector<8x128xf32>
    %26 = arith.mulf %25, %24 : vector<8x128xf32>
    %27 = math.tanh %26 : vector<8x128xf32>
    %cst_13 = arith.constant 1.000000e+00 : f32
    %28 = vector.broadcast %cst_13 : f32 to vector<8x128xf32>
    %29 = arith.addf %27, %28 : vector<8x128xf32>
    %cst_14 = arith.constant 5.000000e-01 : f32
    %30 = vector.broadcast %cst_14 : f32 to vector<8x128xf32>
    %31 = arith.mulf %30, %29 : vector<8x128xf32>
    %32 = vector.extract_strided_slice %15 {offsets = [0, 256], sizes = [8, 128], strides = [1, 1]} : vector<8x512xf32> to vector<8x128xf32>
    %33 = math.tanh %32 : vector<8x128xf32>
    %34 = vector.extract_strided_slice %15 {offsets = [0, 384], sizes = [8, 128], strides = [1, 1]} : vector<8x512xf32> to vector<8x128xf32>
    %cst_15 = arith.constant 5.000000e-01 : f32
    %35 = vector.broadcast %cst_15 : f32 to vector<8x128xf32>
    %36 = arith.mulf %35, %34 : vector<8x128xf32>
    %37 = math.tanh %36 : vector<8x128xf32>
    %cst_16 = arith.constant 1.000000e+00 : f32
    %38 = vector.broadcast %cst_16 : f32 to vector<8x128xf32>
    %39 = arith.addf %37, %38 : vector<8x128xf32>
    %cst_17 = arith.constant 5.000000e-01 : f32
    %40 = vector.broadcast %cst_17 : f32 to vector<8x128xf32>
    %41 = arith.mulf %40, %39 : vector<8x128xf32>
    %42 = arith.mulf %31, %7 : vector<8x128xf32>
    %43 = arith.mulf %23, %33 : vector<8x128xf32>
    %44 = arith.addf %42, %43 : vector<8x128xf32>
    %45 = math.tanh %44 : vector<8x128xf32>
    %46 = arith.mulf %41, %45 : vector<8x128xf32>
    %47 = arith.index_cast %8 : i32 to index
    %c0_18 = arith.constant 0 : index
    %48 = vector.load %arg8[%47, %c0_18] : memref<64x128xf32, #tpu.memory_space<vmem>>, vector<8x128xf32>
    tpu.vector_store %arg8[%47, %c0_18], %46 {strides = array<i32>} : memref<64x128xf32, #tpu.memory_space<vmem>>, vector<8x128xf32>,
    %c1_i32 = arith.constant 1 : i32
    %c8_i32_19 = arith.constant 8 : i32
    %49 = arith.muli %c1_i32, %c8_i32_19 : i32
    %50 = arith.index_cast %49 : i32 to index
    %c0_20 = arith.constant 0 : index
    %51 = vector.load %arg9[%50, %c0_20] : memref<64x512xf32, #tpu.memory_space<vmem>>, vector<8x512xf32>
    %52 = arith.truncf %46 : vector<8x128xf32> to vector<8x128xbf16>
    %c0_21 = arith.constant 0 : index
    %c0_22 = arith.constant 0 : index
    %c0_23 = arith.constant 0 : index
    %53 = vector.load %arg3[%c0_21, %c0_22, %c0_23] : memref<1x128x512xbf16, #tpu.memory_space<vmem>>, vector<1x128x512xbf16>
    %54 = vector.shape_cast %53 : vector<1x128x512xbf16> to vector<128x512xbf16>
    %cst_24 = arith.constant dense<0.000000e+00> : vector<8x512xf32>
    %55 = tpu.matmul %52, %54, %cst_24 {dimension_numbers = #tpu.dot_dimension_numbers<[1], [0], [0], [1], [0, 0, 1, 1], [], []>} : vector<8x128xbf16>, vector<128x512xbf16>, vector<8x512xf32> -> vector<8x512xf32>
    %56 = arith.addf %51, %55 : vector<8x512xf32>
    %57 = vector.extract_strided_slice %56 {offsets = [0, 0], sizes = [8, 128], strides = [1, 1]} : vector<8x512xf32> to vector<8x128xf32>
    %cst_25 = arith.constant 5.000000e-01 : f32
    %58 = vector.broadcast %cst_25 : f32 to vector<8x128xf32>
    %59 = arith.mulf %58, %57 : vector<8x128xf32>
    %60 = math.tanh %59 : vector<8x128xf32>
    %cst_26 = arith.constant 1.000000e+00 : f32
    %61 = vector.broadcast %cst_26 : f32 to vector<8x128xf32>
    %62 = arith.addf %60, %61 : vector<8x128xf32>
    %cst_27 = arith.constant 5.000000e-01 : f32
    %63 = vector.broadcast %cst_27 : f32 to vector<8x128xf32>
    %64 = arith.mulf %63, %62 : vector<8x128xf32>
    %65 = vector.extract_strided_slice %56 {offsets = [0, 128], sizes = [8, 128], strides = [1, 1]} : vector<8x512xf32> to vector<8x128xf32>
    %cst_28 = arith.constant 5.000000e-01 : f32
    %66 = vector.broadcast %cst_28 : f32 to vector<8x128xf32>
    %67 = arith.mulf %66, %65 : vector<8x128xf32>
    %68 = math.tanh %67 : vector<8x128xf32>
    %cst_29 = arith.constant 1.000000e+00 : f32
    %69 = vector.broadcast %cst_29 : f32 to vector<8x128xf32>
    %70 = arith.addf %68, %69 : vector<8x128xf32>
    %cst_30 = arith.constant 5.000000e-01 : f32
    %71 = vector.broadcast %cst_30 : f32 to vector<8x128xf32>
    %72 = arith.mulf %71, %70 : vector<8x128xf32>
    %73 = vector.extract_strided_slice %56 {offsets = [0, 256], sizes = [8, 128], strides = [1, 1]} : vector<8x512xf32> to vector<8x128xf32>
    %74 = math.tanh %73 : vector<8x128xf32>
    %75 = vector.extract_strided_slice %56 {offsets = [0, 384], sizes = [8, 128], strides = [1, 1]} : vector<8x512xf32> to vector<8x128xf32>
    %cst_31 = arith.constant 5.000000e-01 : f32
    %76 = vector.broadcast %cst_31 : f32 to vector<8x128xf32>
    %77 = arith.mulf %76, %75 : vector<8x128xf32>
    %78 = math.tanh %77 : vector<8x128xf32>
    %cst_32 = arith.constant 1.000000e+00 : f32
    %79 = vector.broadcast %cst_32 : f32 to vector<8x128xf32>
    %80 = arith.addf %78, %79 : vector<8x128xf32>
    %cst_33 = arith.constant 5.000000e-01 : f32
    %81 = vector.broadcast %cst_33 : f32 to vector<8x128xf32>
    %82 = arith.mulf %81, %80 : vector<8x128xf32>
    %83 = arith.mulf %72, %44 : vector<8x128xf32>
    %84 = arith.mulf %64, %74 : vector<8x128xf32>
    %85 = arith.addf %83, %84 : vector<8x128xf32>
    %86 = math.tanh %85 : vector<8x128xf32>
    %87 = arith.mulf %82, %86 : vector<8x128xf32>
    %88 = arith.index_cast %49 : i32 to index
    %c0_34 = arith.constant 0 : index
    %89 = vector.load %arg8[%88, %c0_34] : memref<64x128xf32, #tpu.memory_space<vmem>>, vector<8x128xf32>
    tpu.vector_store %arg8[%88, %c0_34], %87 {strides = array<i32>} : memref<64x128xf32, #tpu.memory_space<vmem>>, vector<8x128xf32>,
    %c2_i32 = arith.constant 2 : i32
    %c8_i32_35 = arith.constant 8 : i32
    %90 = arith.muli %c2_i32, %c8_i32_35 : i32
    %91 = arith.index_cast %90 : i32 to index
    %c0_36 = arith.constant 0 : index
    %92 = vector.load %arg9[%91, %c0_36] : memref<64x512xf32, #tpu.memory_space<vmem>>, vector<8x512xf32>
    %93 = arith.truncf %87 : vector<8x128xf32> to vector<8x128xbf16>
    %c0_37 = arith.constant 0 : index
    %c0_38 = arith.constant 0 : index
    %c0_39 = arith.constant 0 : index
    %94 = vector.load %arg3[%c0_37, %c0_38, %c0_39] : memref<1x128x512xbf16, #tpu.memory_space<vmem>>, vector<1x128x512xbf16>
    %95 = vector.shape_cast %94 : vector<1x128x512xbf16> to vector<128x512xbf16>
    %cst_40 = arith.constant dense<0.000000e+00> : vector<8x512xf32>
    %96 = tpu.matmul %93, %95, %cst_40 {dimension_numbers = #tpu.dot_dimension_numbers<[1], [0], [0], [1], [0, 0, 1, 1], [], []>} : vector<8x128xbf16>, vector<128x512xbf16>, vector<8x512xf32> -> vector<8x512xf32>
    %97 = arith.addf %92, %96 : vector<8x512xf32>
    %98 = vector.extract_strided_slice %97 {offsets = [0, 0], sizes = [8, 128], strides = [1, 1]} : vector<8x512xf32> to vector<8x128xf32>
    %cst_41 = arith.constant 5.000000e-01 : f32
    %99 = vector.broadcast %cst_41 : f32 to vector<8x128xf32>
    %100 = arith.mulf %99, %98 : vector<8x128xf32>
    %101 = math.tanh %100 : vector<8x128xf32>
    %cst_42 = arith.constant 1.000000e+00 : f32
    %102 = vector.broadcast %cst_42 : f32 to vector<8x128xf32>
    %103 = arith.addf %101, %102 : vector<8x128xf32>
    %cst_43 = arith.constant 5.000000e-01 : f32
    %104 = vector.broadcast %cst_43 : f32 to vector<8x128xf32>
    %105 = arith.mulf %104, %103 : vector<8x128xf32>
    %106 = vector.extract_strided_slice %97 {offsets = [0, 128], sizes = [8, 128], strides = [1, 1]} : vector<8x512xf32> to vector<8x128xf32>
    %cst_44 = arith.constant 5.000000e-01 : f32
    %107 = vector.broadcast %cst_44 : f32 to vector<8x128xf32>
    %108 = arith.mulf %107, %106 : vector<8x128xf32>
    %109 = math.tanh %108 : vector<8x128xf32>
    %cst_45 = arith.constant 1.000000e+00 : f32
    %110 = vector.broadcast %cst_45 : f32 to vector<8x128xf32>
    %111 = arith.addf %109, %110 : vector<8x128xf32>
    %cst_46 = arith.constant 5.000000e-01 : f32
    %112 = vector.broadcast %cst_46 : f32 to vector<8x128xf32>
    %113 = arith.mulf %112, %111 : vector<8x128xf32>
    %114 = vector.extract_strided_slice %97 {offsets = [0, 256], sizes = [8, 128], strides = [1, 1]} : vector<8x512xf32> to vector<8x128xf32>
    %115 = math.tanh %114 : vector<8x128xf32>
    %116 = vector.extract_strided_slice %97 {offsets = [0, 384], sizes = [8, 128], strides = [1, 1]} : vector<8x512xf32> to vector<8x128xf32>
    %cst_47 = arith.constant 5.000000e-01 : f32
    %117 = vector.broadcast %cst_47 : f32 to vector<8x128xf32>
    %118 = arith.mulf %117, %116 : vector<8x128xf32>
    %119 = math.tanh %118 : vector<8x128xf32>
    %cst_48 = arith.constant 1.000000e+00 : f32
    %120 = vector.broadcast %cst_48 : f32 to vector<8x128xf32>
    %121 = arith.addf %119, %120 : vector<8x128xf32>
    %cst_49 = arith.constant 5.000000e-01 : f32
    %122 = vector.broadcast %cst_49 : f32 to vector<8x128xf32>
    %123 = arith.mulf %122, %121 : vector<8x128xf32>
    %124 = arith.mulf %113, %85 : vector<8x128xf32>
    %125 = arith.mulf %105, %115 : vector<8x128xf32>
    %126 = arith.addf %124, %125 : vector<8x128xf32>
    %127 = math.tanh %126 : vector<8x128xf32>
    %128 = arith.mulf %123, %127 : vector<8x128xf32>
    %129 = arith.index_cast %90 : i32 to index
    %c0_50 = arith.constant 0 : index
    %130 = vector.load %arg8[%129, %c0_50] : memref<64x128xf32, #tpu.memory_space<vmem>>, vector<8x128xf32>
    tpu.vector_store %arg8[%129, %c0_50], %128 {strides = array<i32>} : memref<64x128xf32, #tpu.memory_space<vmem>>, vector<8x128xf32>,
    %c3_i32 = arith.constant 3 : i32
    %c8_i32_51 = arith.constant 8 : i32
    %131 = arith.muli %c3_i32, %c8_i32_51 : i32
    %132 = arith.index_cast %131 : i32 to index
    %c0_52 = arith.constant 0 : index
    %133 = vector.load %arg9[%132, %c0_52] : memref<64x512xf32, #tpu.memory_space<vmem>>, vector<8x512xf32>
    %134 = arith.truncf %128 : vector<8x128xf32> to vector<8x128xbf16>
    %c0_53 = arith.constant 0 : index
    %c0_54 = arith.constant 0 : index
    %c0_55 = arith.constant 0 : index
    %135 = vector.load %arg3[%c0_53, %c0_54, %c0_55] : memref<1x128x512xbf16, #tpu.memory_space<vmem>>, vector<1x128x512xbf16>
    %136 = vector.shape_cast %135 : vector<1x128x512xbf16> to vector<128x512xbf16>
    %cst_56 = arith.constant dense<0.000000e+00> : vector<8x512xf32>
    %137 = tpu.matmul %134, %136, %cst_56 {dimension_numbers = #tpu.dot_dimension_numbers<[1], [0], [0], [1], [0, 0, 1, 1], [], []>} : vector<8x128xbf16>, vector<128x512xbf16>, vector<8x512xf32> -> vector<8x512xf32>
    %138 = arith.addf %133, %137 : vector<8x512xf32>
    %139 = vector.extract_strided_slice %138 {offsets = [0, 0], sizes = [8, 128], strides = [1, 1]} : vector<8x512xf32> to vector<8x128xf32>
    %cst_57 = arith.constant 5.000000e-01 : f32
    %140 = vector.broadcast %cst_57 : f32 to vector<8x128xf32>
    %141 = arith.mulf %140, %139 : vector<8x128xf32>
    %142 = math.tanh %141 : vector<8x128xf32>
    %cst_58 = arith.constant 1.000000e+00 : f32
    %143 = vector.broadcast %cst_58 : f32 to vector<8x128xf32>
    %144 = arith.addf %142, %143 : vector<8x128xf32>
    %cst_59 = arith.constant 5.000000e-01 : f32
    %145 = vector.broadcast %cst_59 : f32 to vector<8x128xf32>
    %146 = arith.mulf %145, %144 : vector<8x128xf32>
    %147 = vector.extract_strided_slice %138 {offsets = [0, 128], sizes = [8, 128], strides = [1, 1]} : vector<8x512xf32> to vector<8x128xf32>
    %cst_60 = arith.constant 5.000000e-01 : f32
    %148 = vector.broadcast %cst_60 : f32 to vector<8x128xf32>
    %149 = arith.mulf %148, %147 : vector<8x128xf32>
    %150 = math.tanh %149 : vector<8x128xf32>
    %cst_61 = arith.constant 1.000000e+00 : f32
    %151 = vector.broadcast %cst_61 : f32 to vector<8x128xf32>
    %152 = arith.addf %150, %151 : vector<8x128xf32>
    %cst_62 = arith.constant 5.000000e-01 : f32
    %153 = vector.broadcast %cst_62 : f32 to vector<8x128xf32>
    %154 = arith.mulf %153, %152 : vector<8x128xf32>
    %155 = vector.extract_strided_slice %138 {offsets = [0, 256], sizes = [8, 128], strides = [1, 1]} : vector<8x512xf32> to vector<8x128xf32>
    %156 = math.tanh %155 : vector<8x128xf32>
    %157 = vector.extract_strided_slice %138 {offsets = [0, 384], sizes = [8, 128], strides = [1, 1]} : vector<8x512xf32> to vector<8x128xf32>
    %cst_63 = arith.constant 5.000000e-01 : f32
    %158 = vector.broadcast %cst_63 : f32 to vector<8x128xf32>
    %159 = arith.mulf %158, %157 : vector<8x128xf32>
    %160 = math.tanh %159 : vector<8x128xf32>
    %cst_64 = arith.constant 1.000000e+00 : f32
    %161 = vector.broadcast %cst_64 : f32 to vector<8x128xf32>
    %162 = arith.addf %160, %161 : vector<8x128xf32>
    %cst_65 = arith.constant 5.000000e-01 : f32
    %163 = vector.broadcast %cst_65 : f32 to vector<8x128xf32>
    %164 = arith.mulf %163, %162 : vector<8x128xf32>
    %165 = arith.mulf %154, %126 : vector<8x128xf32>
    %166 = arith.mulf %146, %156 : vector<8x128xf32>
    %167 = arith.addf %165, %166 : vector<8x128xf32>
    %168 = math.tanh %167 : vector<8x128xf32>
    %169 = arith.mulf %164, %168 : vector<8x128xf32>
    %170 = arith.index_cast %131 : i32 to index
    %c0_66 = arith.constant 0 : index
    %171 = vector.load %arg8[%170, %c0_66] : memref<64x128xf32, #tpu.memory_space<vmem>>, vector<8x128xf32>
    tpu.vector_store %arg8[%170, %c0_66], %169 {strides = array<i32>} : memref<64x128xf32, #tpu.memory_space<vmem>>, vector<8x128xf32>,
    %c4_i32 = arith.constant 4 : i32
    %c8_i32_67 = arith.constant 8 : i32
    %172 = arith.muli %c4_i32, %c8_i32_67 : i32
    %173 = arith.index_cast %172 : i32 to index
    %c0_68 = arith.constant 0 : index
    %174 = vector.load %arg9[%173, %c0_68] : memref<64x512xf32, #tpu.memory_space<vmem>>, vector<8x512xf32>
    %175 = arith.truncf %169 : vector<8x128xf32> to vector<8x128xbf16>
    %c0_69 = arith.constant 0 : index
    %c0_70 = arith.constant 0 : index
    %c0_71 = arith.constant 0 : index
    %176 = vector.load %arg3[%c0_69, %c0_70, %c0_71] : memref<1x128x512xbf16, #tpu.memory_space<vmem>>, vector<1x128x512xbf16>
    %177 = vector.shape_cast %176 : vector<1x128x512xbf16> to vector<128x512xbf16>
    %cst_72 = arith.constant dense<0.000000e+00> : vector<8x512xf32>
    %178 = tpu.matmul %175, %177, %cst_72 {dimension_numbers = #tpu.dot_dimension_numbers<[1], [0], [0], [1], [0, 0, 1, 1], [], []>} : vector<8x128xbf16>, vector<128x512xbf16>, vector<8x512xf32> -> vector<8x512xf32>
    %179 = arith.addf %174, %178 : vector<8x512xf32>
    %180 = vector.extract_strided_slice %179 {offsets = [0, 0], sizes = [8, 128], strides = [1, 1]} : vector<8x512xf32> to vector<8x128xf32>
    %cst_73 = arith.constant 5.000000e-01 : f32
    %181 = vector.broadcast %cst_73 : f32 to vector<8x128xf32>
    %182 = arith.mulf %181, %180 : vector<8x128xf32>
    %183 = math.tanh %182 : vector<8x128xf32>
    %cst_74 = arith.constant 1.000000e+00 : f32
    %184 = vector.broadcast %cst_74 : f32 to vector<8x128xf32>
    %185 = arith.addf %183, %184 : vector<8x128xf32>
    %cst_75 = arith.constant 5.000000e-01 : f32
    %186 = vector.broadcast %cst_75 : f32 to vector<8x128xf32>
    %187 = arith.mulf %186, %185 : vector<8x128xf32>
    %188 = vector.extract_strided_slice %179 {offsets = [0, 128], sizes = [8, 128], strides = [1, 1]} : vector<8x512xf32> to vector<8x128xf32>
    %cst_76 = arith.constant 5.000000e-01 : f32
    %189 = vector.broadcast %cst_76 : f32 to vector<8x128xf32>
    %190 = arith.mulf %189, %188 : vector<8x128xf32>
    %191 = math.tanh %190 : vector<8x128xf32>
    %cst_77 = arith.constant 1.000000e+00 : f32
    %192 = vector.broadcast %cst_77 : f32 to vector<8x128xf32>
    %193 = arith.addf %191, %192 : vector<8x128xf32>
    %cst_78 = arith.constant 5.000000e-01 : f32
    %194 = vector.broadcast %cst_78 : f32 to vector<8x128xf32>
    %195 = arith.mulf %194, %193 : vector<8x128xf32>
    %196 = vector.extract_strided_slice %179 {offsets = [0, 256], sizes = [8, 128], strides = [1, 1]} : vector<8x512xf32> to vector<8x128xf32>
    %197 = math.tanh %196 : vector<8x128xf32>
    %198 = vector.extract_strided_slice %179 {offsets = [0, 384], sizes = [8, 128], strides = [1, 1]} : vector<8x512xf32> to vector<8x128xf32>
    %cst_79 = arith.constant 5.000000e-01 : f32
    %199 = vector.broadcast %cst_79 : f32 to vector<8x128xf32>
    %200 = arith.mulf %199, %198 : vector<8x128xf32>
    %201 = math.tanh %200 : vector<8x128xf32>
    %cst_80 = arith.constant 1.000000e+00 : f32
    %202 = vector.broadcast %cst_80 : f32 to vector<8x128xf32>
    %203 = arith.addf %201, %202 : vector<8x128xf32>
    %cst_81 = arith.constant 5.000000e-01 : f32
    %204 = vector.broadcast %cst_81 : f32 to vector<8x128xf32>
    %205 = arith.mulf %204, %203 : vector<8x128xf32>
    %206 = arith.mulf %195, %167 : vector<8x128xf32>
    %207 = arith.mulf %187, %197 : vector<8x128xf32>
    %208 = arith.addf %206, %207 : vector<8x128xf32>
    %209 = math.tanh %208 : vector<8x128xf32>
    %210 = arith.mulf %205, %209 : vector<8x128xf32>
    %211 = arith.index_cast %172 : i32 to index
    %c0_82 = arith.constant 0 : index
    %212 = vector.load %arg8[%211, %c0_82] : memref<64x128xf32, #tpu.memory_space<vmem>>, vector<8x128xf32>
    tpu.vector_store %arg8[%211, %c0_82], %210 {strides = array<i32>} : memref<64x128xf32, #tpu.memory_space<vmem>>, vector<8x128xf32>,
    %c5_i32 = arith.constant 5 : i32
    %c8_i32_83 = arith.constant 8 : i32
    %213 = arith.muli %c5_i32, %c8_i32_83 : i32
    %214 = arith.index_cast %213 : i32 to index
    %c0_84 = arith.constant 0 : index
    %215 = vector.load %arg9[%214, %c0_84] : memref<64x512xf32, #tpu.memory_space<vmem>>, vector<8x512xf32>
    %216 = arith.truncf %210 : vector<8x128xf32> to vector<8x128xbf16>
    %c0_85 = arith.constant 0 : index
    %c0_86 = arith.constant 0 : index
    %c0_87 = arith.constant 0 : index
    %217 = vector.load %arg3[%c0_85, %c0_86, %c0_87] : memref<1x128x512xbf16, #tpu.memory_space<vmem>>, vector<1x128x512xbf16>
    %218 = vector.shape_cast %217 : vector<1x128x512xbf16> to vector<128x512xbf16>
    %cst_88 = arith.constant dense<0.000000e+00> : vector<8x512xf32>
    %219 = tpu.matmul %216, %218, %cst_88 {dimension_numbers = #tpu.dot_dimension_numbers<[1], [0], [0], [1], [0, 0, 1, 1], [], []>} : vector<8x128xbf16>, vector<128x512xbf16>, vector<8x512xf32> -> vector<8x512xf32>
    %220 = arith.addf %215, %219 : vector<8x512xf32>
    %221 = vector.extract_strided_slice %220 {offsets = [0, 0], sizes = [8, 128], strides = [1, 1]} : vector<8x512xf32> to vector<8x128xf32>
    %cst_89 = arith.constant 5.000000e-01 : f32
    %222 = vector.broadcast %cst_89 : f32 to vector<8x128xf32>
    %223 = arith.mulf %222, %221 : vector<8x128xf32>
    %224 = math.tanh %223 : vector<8x128xf32>
    %cst_90 = arith.constant 1.000000e+00 : f32
    %225 = vector.broadcast %cst_90 : f32 to vector<8x128xf32>
    %226 = arith.addf %224, %225 : vector<8x128xf32>
    %cst_91 = arith.constant 5.000000e-01 : f32
    %227 = vector.broadcast %cst_91 : f32 to vector<8x128xf32>
    %228 = arith.mulf %227, %226 : vector<8x128xf32>
    %229 = vector.extract_strided_slice %220 {offsets = [0, 128], sizes = [8, 128], strides = [1, 1]} : vector<8x512xf32> to vector<8x128xf32>
    %cst_92 = arith.constant 5.000000e-01 : f32
    %230 = vector.broadcast %cst_92 : f32 to vector<8x128xf32>
    %231 = arith.mulf %230, %229 : vector<8x128xf32>
    %232 = math.tanh %231 : vector<8x128xf32>
    %cst_93 = arith.constant 1.000000e+00 : f32
    %233 = vector.broadcast %cst_93 : f32 to vector<8x128xf32>
    %234 = arith.addf %232, %233 : vector<8x128xf32>
    %cst_94 = arith.constant 5.000000e-01 : f32
    %235 = vector.broadcast %cst_94 : f32 to vector<8x128xf32>
    %236 = arith.mulf %235, %234 : vector<8x128xf32>
    %237 = vector.extract_strided_slice %220 {offsets = [0, 256], sizes = [8, 128], strides = [1, 1]} : vector<8x512xf32> to vector<8x128xf32>
    %238 = math.tanh %237 : vector<8x128xf32>
    %239 = vector.extract_strided_slice %220 {offsets = [0, 384], sizes = [8, 128], strides = [1, 1]} : vector<8x512xf32> to vector<8x128xf32>
    %cst_95 = arith.constant 5.000000e-01 : f32
    %240 = vector.broadcast %cst_95 : f32 to vector<8x128xf32>
    %241 = arith.mulf %240, %239 : vector<8x128xf32>
    %242 = math.tanh %241 : vector<8x128xf32>
    %cst_96 = arith.constant 1.000000e+00 : f32
    %243 = vector.broadcast %cst_96 : f32 to vector<8x128xf32>
    %244 = arith.addf %242, %243 : vector<8x128xf32>
    %cst_97 = arith.constant 5.000000e-01 : f32
    %245 = vector.broadcast %cst_97 : f32 to vector<8x128xf32>
    %246 = arith.mulf %245, %244 : vector<8x128xf32>
    %247 = arith.mulf %236, %208 : vector<8x128xf32>
    %248 = arith.mulf %228, %238 : vector<8x128xf32>
    %249 = arith.addf %247, %248 : vector<8x128xf32>
    %250 = math.tanh %249 : vector<8x128xf32>
    %251 = arith.mulf %246, %250 : vector<8x128xf32>
    %252 = arith.index_cast %213 : i32 to index
    %c0_98 = arith.constant 0 : index
    %253 = vector.load %arg8[%252, %c0_98] : memref<64x128xf32, #tpu.memory_space<vmem>>, vector<8x128xf32>
    tpu.vector_store %arg8[%252, %c0_98], %251 {strides = array<i32>} : memref<64x128xf32, #tpu.memory_space<vmem>>, vector<8x128xf32>,
    %c6_i32 = arith.constant 6 : i32
    %c8_i32_99 = arith.constant 8 : i32
    %254 = arith.muli %c6_i32, %c8_i32_99 : i32
    %255 = arith.index_cast %254 : i32 to index
    %c0_100 = arith.constant 0 : index
    %256 = vector.load %arg9[%255, %c0_100] : memref<64x512xf32, #tpu.memory_space<vmem>>, vector<8x512xf32>
    %257 = arith.truncf %251 : vector<8x128xf32> to vector<8x128xbf16>
    %c0_101 = arith.constant 0 : index
    %c0_102 = arith.constant 0 : index
    %c0_103 = arith.constant 0 : index
    %258 = vector.load %arg3[%c0_101, %c0_102, %c0_103] : memref<1x128x512xbf16, #tpu.memory_space<vmem>>, vector<1x128x512xbf16>
    %259 = vector.shape_cast %258 : vector<1x128x512xbf16> to vector<128x512xbf16>
    %cst_104 = arith.constant dense<0.000000e+00> : vector<8x512xf32>
    %260 = tpu.matmul %257, %259, %cst_104 {dimension_numbers = #tpu.dot_dimension_numbers<[1], [0], [0], [1], [0, 0, 1, 1], [], []>} : vector<8x128xbf16>, vector<128x512xbf16>, vector<8x512xf32> -> vector<8x512xf32>
    %261 = arith.addf %256, %260 : vector<8x512xf32>
    %262 = vector.extract_strided_slice %261 {offsets = [0, 0], sizes = [8, 128], strides = [1, 1]} : vector<8x512xf32> to vector<8x128xf32>
    %cst_105 = arith.constant 5.000000e-01 : f32
    %263 = vector.broadcast %cst_105 : f32 to vector<8x128xf32>
    %264 = arith.mulf %263, %262 : vector<8x128xf32>
    %265 = math.tanh %264 : vector<8x128xf32>
    %cst_106 = arith.constant 1.000000e+00 : f32
    %266 = vector.broadcast %cst_106 : f32 to vector<8x128xf32>
    %267 = arith.addf %265, %266 : vector<8x128xf32>
    %cst_107 = arith.constant 5.000000e-01 : f32
    %268 = vector.broadcast %cst_107 : f32 to vector<8x128xf32>
    %269 = arith.mulf %268, %267 : vector<8x128xf32>
    %270 = vector.extract_strided_slice %261 {offsets = [0, 128], sizes = [8, 128], strides = [1, 1]} : vector<8x512xf32> to vector<8x128xf32>
    %cst_108 = arith.constant 5.000000e-01 : f32
    %271 = vector.broadcast %cst_108 : f32 to vector<8x128xf32>
    %272 = arith.mulf %271, %270 : vector<8x128xf32>
    %273 = math.tanh %272 : vector<8x128xf32>
    %cst_109 = arith.constant 1.000000e+00 : f32
    %274 = vector.broadcast %cst_109 : f32 to vector<8x128xf32>
    %275 = arith.addf %273, %274 : vector<8x128xf32>
    %cst_110 = arith.constant 5.000000e-01 : f32
    %276 = vector.broadcast %cst_110 : f32 to vector<8x128xf32>
    %277 = arith.mulf %276, %275 : vector<8x128xf32>
    %278 = vector.extract_strided_slice %261 {offsets = [0, 256], sizes = [8, 128], strides = [1, 1]} : vector<8x512xf32> to vector<8x128xf32>
    %279 = math.tanh %278 : vector<8x128xf32>
    %280 = vector.extract_strided_slice %261 {offsets = [0, 384], sizes = [8, 128], strides = [1, 1]} : vector<8x512xf32> to vector<8x128xf32>
    %cst_111 = arith.constant 5.000000e-01 : f32
    %281 = vector.broadcast %cst_111 : f32 to vector<8x128xf32>
    %282 = arith.mulf %281, %280 : vector<8x128xf32>
    %283 = math.tanh %282 : vector<8x128xf32>
    %cst_112 = arith.constant 1.000000e+00 : f32
    %284 = vector.broadcast %cst_112 : f32 to vector<8x128xf32>
    %285 = arith.addf %283, %284 : vector<8x128xf32>
    %cst_113 = arith.constant 5.000000e-01 : f32
    %286 = vector.broadcast %cst_113 : f32 to vector<8x128xf32>
    %287 = arith.mulf %286, %285 : vector<8x128xf32>
    %288 = arith.mulf %277, %249 : vector<8x128xf32>
    %289 = arith.mulf %269, %279 : vector<8x128xf32>
    %290 = arith.addf %288, %289 : vector<8x128xf32>
    %291 = math.tanh %290 : vector<8x128xf32>
    %292 = arith.mulf %287, %291 : vector<8x128xf32>
    %293 = arith.index_cast %254 : i32 to index
    %c0_114 = arith.constant 0 : index
    %294 = vector.load %arg8[%293, %c0_114] : memref<64x128xf32, #tpu.memory_space<vmem>>, vector<8x128xf32>
    tpu.vector_store %arg8[%293, %c0_114], %292 {strides = array<i32>} : memref<64x128xf32, #tpu.memory_space<vmem>>, vector<8x128xf32>,
    %c7_i32 = arith.constant 7 : i32
    %c8_i32_115 = arith.constant 8 : i32
    %295 = arith.muli %c7_i32, %c8_i32_115 : i32
    %296 = arith.index_cast %295 : i32 to index
    %c0_116 = arith.constant 0 : index
    %297 = vector.load %arg9[%296, %c0_116] : memref<64x512xf32, #tpu.memory_space<vmem>>, vector<8x512xf32>
    %298 = arith.truncf %292 : vector<8x128xf32> to vector<8x128xbf16>
    %c0_117 = arith.constant 0 : index
    %c0_118 = arith.constant 0 : index
    %c0_119 = arith.constant 0 : index
    %299 = vector.load %arg3[%c0_117, %c0_118, %c0_119] : memref<1x128x512xbf16, #tpu.memory_space<vmem>>, vector<1x128x512xbf16>
    %300 = vector.shape_cast %299 : vector<1x128x512xbf16> to vector<128x512xbf16>
    %cst_120 = arith.constant dense<0.000000e+00> : vector<8x512xf32>
    %301 = tpu.matmul %298, %300, %cst_120 {dimension_numbers = #tpu.dot_dimension_numbers<[1], [0], [0], [1], [0, 0, 1, 1], [], []>} : vector<8x128xbf16>, vector<128x512xbf16>, vector<8x512xf32> -> vector<8x512xf32>
    %302 = arith.addf %297, %301 : vector<8x512xf32>
    %303 = vector.extract_strided_slice %302 {offsets = [0, 0], sizes = [8, 128], strides = [1, 1]} : vector<8x512xf32> to vector<8x128xf32>
    %cst_121 = arith.constant 5.000000e-01 : f32
    %304 = vector.broadcast %cst_121 : f32 to vector<8x128xf32>
    %305 = arith.mulf %304, %303 : vector<8x128xf32>
    %306 = math.tanh %305 : vector<8x128xf32>
    %cst_122 = arith.constant 1.000000e+00 : f32
    %307 = vector.broadcast %cst_122 : f32 to vector<8x128xf32>
    %308 = arith.addf %306, %307 : vector<8x128xf32>
    %cst_123 = arith.constant 5.000000e-01 : f32
    %309 = vector.broadcast %cst_123 : f32 to vector<8x128xf32>
    %310 = arith.mulf %309, %308 : vector<8x128xf32>
    %311 = vector.extract_strided_slice %302 {offsets = [0, 128], sizes = [8, 128], strides = [1, 1]} : vector<8x512xf32> to vector<8x128xf32>
    %cst_124 = arith.constant 5.000000e-01 : f32
    %312 = vector.broadcast %cst_124 : f32 to vector<8x128xf32>
    %313 = arith.mulf %312, %311 : vector<8x128xf32>
    %314 = math.tanh %313 : vector<8x128xf32>
    %cst_125 = arith.constant 1.000000e+00 : f32
    %315 = vector.broadcast %cst_125 : f32 to vector<8x128xf32>
    %316 = arith.addf %314, %315 : vector<8x128xf32>
    %cst_126 = arith.constant 5.000000e-01 : f32
    %317 = vector.broadcast %cst_126 : f32 to vector<8x128xf32>
    %318 = arith.mulf %317, %316 : vector<8x128xf32>
    %319 = vector.extract_strided_slice %302 {offsets = [0, 256], sizes = [8, 128], strides = [1, 1]} : vector<8x512xf32> to vector<8x128xf32>
    %320 = math.tanh %319 : vector<8x128xf32>
    %321 = vector.extract_strided_slice %302 {offsets = [0, 384], sizes = [8, 128], strides = [1, 1]} : vector<8x512xf32> to vector<8x128xf32>
    %cst_127 = arith.constant 5.000000e-01 : f32
    %322 = vector.broadcast %cst_127 : f32 to vector<8x128xf32>
    %323 = arith.mulf %322, %321 : vector<8x128xf32>
    %324 = math.tanh %323 : vector<8x128xf32>
    %cst_128 = arith.constant 1.000000e+00 : f32
    %325 = vector.broadcast %cst_128 : f32 to vector<8x128xf32>
    %326 = arith.addf %324, %325 : vector<8x128xf32>
    %cst_129 = arith.constant 5.000000e-01 : f32
    %327 = vector.broadcast %cst_129 : f32 to vector<8x128xf32>
    %328 = arith.mulf %327, %326 : vector<8x128xf32>
    %329 = arith.mulf %318, %290 : vector<8x128xf32>
    %330 = arith.mulf %310, %320 : vector<8x128xf32>
    %331 = arith.addf %329, %330 : vector<8x128xf32>
    %332 = math.tanh %331 : vector<8x128xf32>
    %333 = arith.mulf %328, %332 : vector<8x128xf32>
    %334 = arith.index_cast %295 : i32 to index
    %c0_130 = arith.constant 0 : index
    %335 = vector.load %arg8[%334, %c0_130] : memref<64x128xf32, #tpu.memory_space<vmem>>, vector<8x128xf32>
    tpu.vector_store %arg8[%334, %c0_130], %333 {strides = array<i32>} : memref<64x128xf32, #tpu.memory_space<vmem>>, vector<8x128xf32>,
    %c8_i32_131 = arith.constant 8 : i32
    %c3_i32_132 = arith.constant 3 : i32
    %336 = arith.cmpi eq, %arg0, %c3_i32_132 : i32
    %337 = arith.extui %336 : i1 to i32
    %c0_i32_133 = arith.constant 0 : i32
    %338 = arith.cmpi ne, %337, %c0_i32_133 : i32
    scf.if %338 {
      %339 = math.tanh %333 : vector<8x128xf32>
      %340 = arith.truncf %339 : vector<8x128xf32> to vector<8x128xbf16>
      %c0_134 = arith.constant 0 : index
      %c0_135 = arith.constant 0 : index
      %c0_136 = arith.constant 0 : index
      %341 = vector.load %arg5[%c0_134, %c0_135, %c0_136] : memref<4x128x128xbf16, #tpu.memory_space<vmem>>, vector<1x128x128xbf16>
      %342 = vector.shape_cast %341 : vector<1x128x128xbf16> to vector<128x128xbf16>
      %cst_137 = arith.constant dense<0.000000e+00> : vector<8x128xf32>
      %343 = tpu.matmul %340, %342, %cst_137 {dimension_numbers = #tpu.dot_dimension_numbers<[1], [0], [0], [1], [0, 0, 1, 1], [], []>} : vector<8x128xbf16>, vector<128x128xbf16>, vector<8x128xf32> -> vector<8x128xf32>
      %c0_138 = arith.constant 0 : index
      %c0_139 = arith.constant 0 : index
      %c0_140 = arith.constant 0 : index
      %344 = vector.load %arg6[%c0_138, %c0_139, %c0_140] : memref<4x1x128xf32, #tpu.memory_space<vmem>>, vector<1x1x128xf32>
      %345 = vector.shape_cast %344 : vector<1x1x128xf32> to vector<1x128xf32>
      %346 = vector.broadcast %345 : vector<1x128xf32> to vector<8x128xf32>
      %347 = arith.addf %343, %346 : vector<8x128xf32>
      %348 = math.tanh %347 : vector<8x128xf32>
      %349 = arith.truncf %348 : vector<8x128xf32> to vector<8x128xbf16>
      %c1 = arith.constant 1 : index
      %c0_141 = arith.constant 0 : index
      %c0_142 = arith.constant 0 : index
      %350 = vector.load %arg5[%c1, %c0_141, %c0_142] : memref<4x128x128xbf16, #tpu.memory_space<vmem>>, vector<1x128x128xbf16>
      %351 = vector.shape_cast %350 : vector<1x128x128xbf16> to vector<128x128xbf16>
      %cst_143 = arith.constant dense<0.000000e+00> : vector<8x128xf32>
      %352 = tpu.matmul %349, %351, %cst_143 {dimension_numbers = #tpu.dot_dimension_numbers<[1], [0], [0], [1], [0, 0, 1, 1], [], []>} : vector<8x128xbf16>, vector<128x128xbf16>, vector<8x128xf32> -> vector<8x128xf32>
      %c1_144 = arith.constant 1 : index
      %c0_145 = arith.constant 0 : index
      %c0_146 = arith.constant 0 : index
      %353 = vector.load %arg6[%c1_144, %c0_145, %c0_146] : memref<4x1x128xf32, #tpu.memory_space<vmem>>, vector<1x1x128xf32>
      %354 = vector.shape_cast %353 : vector<1x1x128xf32> to vector<1x128xf32>
      %355 = vector.broadcast %354 : vector<1x128xf32> to vector<8x128xf32>
      %356 = arith.addf %352, %355 : vector<8x128xf32>
      %357 = math.tanh %356 : vector<8x128xf32>
      %358 = arith.truncf %357 : vector<8x128xf32> to vector<8x128xbf16>
      %c2 = arith.constant 2 : index
      %c0_147 = arith.constant 0 : index
      %c0_148 = arith.constant 0 : index
      %359 = vector.load %arg5[%c2, %c0_147, %c0_148] : memref<4x128x128xbf16, #tpu.memory_space<vmem>>, vector<1x128x128xbf16>
      %360 = vector.shape_cast %359 : vector<1x128x128xbf16> to vector<128x128xbf16>
      %cst_149 = arith.constant dense<0.000000e+00> : vector<8x128xf32>
      %361 = tpu.matmul %358, %360, %cst_149 {dimension_numbers = #tpu.dot_dimension_numbers<[1], [0], [0], [1], [0, 0, 1, 1], [], []>} : vector<8x128xbf16>, vector<128x128xbf16>, vector<8x128xf32> -> vector<8x128xf32>
      %c2_150 = arith.constant 2 : index
      %c0_151 = arith.constant 0 : index
      %c0_152 = arith.constant 0 : index
      %362 = vector.load %arg6[%c2_150, %c0_151, %c0_152] : memref<4x1x128xf32, #tpu.memory_space<vmem>>, vector<1x1x128xf32>
      %363 = vector.shape_cast %362 : vector<1x1x128xf32> to vector<1x128xf32>
      %364 = vector.broadcast %363 : vector<1x128xf32> to vector<8x128xf32>
      %365 = arith.addf %361, %364 : vector<8x128xf32>
      %366 = math.tanh %365 : vector<8x128xf32>
      %367 = arith.truncf %366 : vector<8x128xf32> to vector<8x128xbf16>
      %c3 = arith.constant 3 : index
      %c0_153 = arith.constant 0 : index
      %c0_154 = arith.constant 0 : index
      %368 = vector.load %arg5[%c3, %c0_153, %c0_154] : memref<4x128x128xbf16, #tpu.memory_space<vmem>>, vector<1x128x128xbf16>
      %369 = vector.shape_cast %368 : vector<1x128x128xbf16> to vector<128x128xbf16>
      %cst_155 = arith.constant dense<0.000000e+00> : vector<8x128xf32>
      %370 = tpu.matmul %367, %369, %cst_155 {dimension_numbers = #tpu.dot_dimension_numbers<[1], [0], [0], [1], [0, 0, 1, 1], [], []>} : vector<8x128xbf16>, vector<128x128xbf16>, vector<8x128xf32> -> vector<8x128xf32>
      %c3_156 = arith.constant 3 : index
      %c0_157 = arith.constant 0 : index
      %c0_158 = arith.constant 0 : index
      %371 = vector.load %arg6[%c3_156, %c0_157, %c0_158] : memref<4x1x128xf32, #tpu.memory_space<vmem>>, vector<1x1x128xf32>
      %372 = vector.shape_cast %371 : vector<1x1x128xf32> to vector<1x128xf32>
      %373 = vector.broadcast %372 : vector<1x128xf32> to vector<8x128xf32>
      %374 = arith.addf %370, %373 : vector<8x128xf32>
      %c0_159 = arith.constant 0 : index
      %c0_160 = arith.constant 0 : index
      %375 = vector.load %arg7[%c0_159, %c0_160] : memref<8x128xf32, #tpu.memory_space<vmem>>, vector<8x128xf32>
      tpu.vector_store %arg7[%c0_159, %c0_160], %374 {strides = array<i32>} : memref<8x128xf32, #tpu.memory_space<vmem>>, vector<8x128xf32>,
    } else {
    }
    return
  }
  func.func @transform_0(%arg0: i32) -> (i32, i32) {
    %c0_i32 = arith.constant 0 : i32
    %c0_i32_0 = arith.constant 0 : i32
    %c0_i32_1 = arith.constant 0 : i32
    return %c0_i32, %c0_i32_0 : i32, i32
  }
  func.func @transform_1(%arg0: i32) -> (i32, i32, i32) {
    %c1_i32 = arith.constant 1 : i32
    %0 = arith.subi %arg0, %c1_i32 : i32
    %c0_i32 = arith.constant 0 : i32
    %1 = arith.maxsi %0, %c0_i32 : i32
    %c0_i32_0 = arith.constant 0 : i32
    %c0_i32_1 = arith.constant 0 : i32
    %c0_i32_2 = arith.constant 0 : i32
    return %1, %c0_i32_0, %c0_i32_1 : i32, i32, i32
  }
  func.func @transform_2(%arg0: i32) -> (i32, i32, i32) {
    %c0_i32 = arith.constant 0 : i32
    %c0_i32_0 = arith.constant 0 : i32
    %c0_i32_1 = arith.constant 0 : i32
    return %arg0, %c0_i32, %c0_i32_0 : i32, i32, i32
  }
  func.func @transform_3(%arg0: i32) -> (i32, i32, i32) {
    %c1_i32 = arith.constant 1 : i32
    %0 = arith.subi %arg0, %c1_i32 : i32
    %c0_i32 = arith.constant 0 : i32
    %1 = arith.maxsi %0, %c0_i32 : i32
    %c0_i32_0 = arith.constant 0 : i32
    %c0_i32_1 = arith.constant 0 : i32
    %c0_i32_2 = arith.constant 0 : i32
    return %1, %c0_i32_0, %c0_i32_1 : i32, i32, i32
  }
  func.func @transform_4(%arg0: i32) -> (i32, i32, i32) {
    %c0_i32 = arith.constant 0 : i32
    %c0_i32_0 = arith.constant 0 : i32
    %c0_i32_1 = arith.constant 0 : i32
    %c0_i32_2 = arith.constant 0 : i32
    return %c0_i32, %c0_i32_0, %c0_i32_1 : i32, i32, i32
  }
  func.func @transform_5(%arg0: i32) -> (i32, i32, i32) {
    %c0_i32 = arith.constant 0 : i32
    %c0_i32_0 = arith.constant 0 : i32
    %c0_i32_1 = arith.constant 0 : i32
    %c0_i32_2 = arith.constant 0 : i32
    return %c0_i32, %c0_i32_0, %c0_i32_1 : i32, i32, i32
  }
  func.func @transform_6(%arg0: i32) -> (i32, i32) {
    %c0_i32 = arith.constant 0 : i32
    %c0_i32_0 = arith.constant 0 : i32
    %c0_i32_1 = arith.constant 0 : i32
    return %c0_i32, %c0_i32_0 : i32, i32
  }
}

</mosaic_0001>

<llo_original>
// kernel: lstm_net_forward.1
$region0: #{lstm_net_forward.1}
  #allocation0 [shape = 'u32[]', space=smem, size = 0x4, offset = 0x4, fixed_abs, tag = 'smem constant byte address 0x4 - core index']
  #allocation1 [shape = 'u32[144,128]{1,0:T(1,128)}', space=vmem, size = 0x12000, scoped, tag = 'internal scratch']
  #allocation2 [shape = 'f32[64,128]{1,0:T(8,128)}', space=vmem, size = 0x8000, scoped, tag = 'scratch operand']
  #allocation3 [shape = 'f32[64,512]{1,0:T(8,128)}', space=vmem, size = 0x20000, scoped, tag = 'scratch operand']
  %s0 = inlined_call_operand.vmem [shape: f32[64,512], index: 0, kind: input, shape index: {}]
  %s1 = inlined_call_operand.hbm [shape: bf16[3,128,512], index: 1, kind: input, shape index: {}]
  %s2 = inlined_call_operand.hbm [shape: bf16[4,128,512], index: 2, kind: input, shape index: {}]
  %s3 = inlined_call_operand.vmem [shape: f32[3,1,512], index: 3, kind: input, shape index: {}]
  %s4 = inlined_call_operand.vmem [shape: bf16[4,128,128], index: 4, kind: input, shape index: {}]
  %s5 = inlined_call_operand.vmem [shape: f32[4,1,128], index: 5, kind: input, shape index: {}]
  %s6 = inlined_call_operand.vmem [shape: f32[8,128], index: 6, kind: output, shape index: {}]
  %s7 = sld [smem:[#allocation0]]
  $region77: #{lstm_net_forward.1} parent=0
    _
  %s9 = ssub.s32 1, %s7
  %s10 = scalar_select 0, %s9, %s7
  $region1: #{lstm_net_forward.1} parent=0
    #allocation4 [shape = 'u8[262144]{0}', space=vmem, size = 0x40000, scoped, tag = 'input window, operand 1']
    #allocation5 [shape = 's32[2]{0}', space=sflag, size = 0x8, scoped, tag = 'scoped memory for lstm_net_forward.1']
    #allocation6 [shape = 'u8[262144]{0}', space=vmem, size = 0x40000, scoped, tag = 'input window, operand 2']
    #allocation7 [shape = 's32[2]{0}', space=sflag, size = 0x8, scoped, tag = 'scoped memory for lstm_net_forward.1']
    %11 = vsyncpa [#allocation5], 0
    %s12 = scalar_lea.sflag [#allocation5], 1
    %13 = vsyncpa %s12, 0
    %14 = vsyncpa [#allocation7], 0
    %s15 = scalar_lea.sflag [#allocation7], 1
    %16 = vsyncpa %s15, 0
    loop: start=0, step=1, limit=6
    $region2: #{lstm_net_forward.1} parent=1 // loop_pre_header
      _
    $region3: #{lstm_net_forward.1} parent=1 // loop_header
      %s18 = sphi 0, %s22
      %p19 = scmp.ge.s32.totalorder %s18, 6
      %s26 = sphi 0, %s26
      %s28 = sphi 0, %s26
      %s29 = sphi 0, %s28
      %s43 = sphi 0, %s29
      %s55 = sphi 0, %s57
      %s58 = sphi 0, %s55
      %s59 = sphi 0, %s58
      %s75 = sphi 0, %s59
      %s81 = sphi 0, %s83
      %s84 = sphi 0, %s81
      %s85 = sphi 0, %s84
      %s101 = sphi 0, %s85
      %s113 = sphi 0, %s115
      %s116 = sphi 0, %s113
      %s117 = sphi 0, %s116
      %s133 = sphi 0, %s117
      %s137 = sphi 0, %s137
      %s139 = sphi 0, %s137
      %s140 = sphi 0, %s139
      %s154 = sphi 0, %s140
      %s158 = sphi 0, %s158
      %s160 = sphi 0, %s158
      %s161 = sphi 0, %s160
      %s175 = sphi 0, %s161
      %s179 = sphi 0, %s179
      %s181 = sphi 0, %s179
      %s182 = sphi 0, %s181
      %s196 = sphi 0, %s182
    $region4: #{lstm_net_forward.1} parent=1 // loop_header_branch
      %21 = sbr.rel (%p19) target = $region8
    $region5: #{lstm_net_forward.1} parent=1 // loop_body
      %s23 = ssub.s32 %s18, 1
      %s24 = ssub.s32 %s18, 2
      %s25 = sadd.s32 %s18, 1
      %s27 = sadd.s32 %s26, 1
      %p30 = scmp.eq.s32.totalorder %s18, 3
      %p31 = scmp.ne.s32.totalorder %s26, %s28
      %p32 = scmp.eq.s32.totalorder %s18, 0
      %p33 = por %p31, %p32
      %p34 = scmp.ne.s32.totalorder %s26, %s28
      %p35 = scmp.eq.s32.totalorder %s23, 3
      %p36 = por %p34, %p35
      %p37 = scmp.ne.s32.totalorder %s28, %s29
      %p38 = scmp.eq.s32.totalorder %s23, 0
      %p39 = por %p37, %p38
      %p40 = scmp.ne.s32.totalorder %s28, %s29
      %p41 = scmp.eq.s32.totalorder %s24, 3
      %p42 = por %p40, %p41
      %p44 = scmp.ne.s32.totalorder %s29, %s43
      %p45 = scmp.eq.s32.totalorder %s24, 0
      %p46 = por %p44, %p45
      %s47 = ssub.s32 %s18, 1
      %p48 = scmp.gt.s32.totalorder %s47, 0
      %s49 = scalar_select %p48, %s47, 0
      %s50 = ssub.s32 %s25, 1
      %p51 = scmp.gt.s32.totalorder %s50, 0
      %s52 = scalar_select %p51, %s50, 0
      %s53 = ssub.s32 %s49, %s52
      %p54 = scmp.eq.s32.totalorder %s53, 0
      %s56 = sadd.s32 %s55, 1
      %s57 = scalar_select %p54, %s55, %s56
      %p60 = pneg %p54
      %p61 = scmp.eq.s32.totalorder %s18, 3
      %p62 = por %p60, %p61
      %p63 = scmp.ne.s32.totalorder %s55, %s58
      %p64 = scmp.eq.s32.totalorder %s18, 0
      %p65 = por %p63, %p64
      %p66 = scmp.ne.s32.totalorder %s55, %s58
      %p67 = scmp.eq.s32.totalorder %s23, 3
      %p68 = por %p66, %p67
      %p69 = scmp.ne.s32.totalorder %s58, %s59
      %p70 = scmp.eq.s32.totalorder %s23, 0
      %p71 = por %p69, %p70
      %p72 = scmp.ne.s32.totalorder %s58, %s59
      %p73 = scmp.eq.s32.totalorder %s24, 3
      %p74 = por %p72, %p73
      %p76 = scmp.ne.s32.totalorder %s59, %s75
      %p77 = scmp.eq.s32.totalorder %s24, 0
      %p78 = por %p76, %p77
      %s79 = ssub.s32 %s18, %s25
      %p80 = scmp.eq.s32.totalorder %s79, 0
      %s82 = sadd.s32 %s81, 1
      %s83 = scalar_select %p80, %s81, %s82
      %p86 = pneg %p80
      %p87 = scmp.eq.s32.totalorder %s18, 3
      %p88 = por %p86, %p87
      %p89 = scmp.ne.s32.totalorder %s81, %s84
      %p90 = scmp.eq.s32.totalorder %s18, 0
      %p91 = por %p89, %p90
      %p92 = scmp.ne.s32.totalorder %s81, %s84
      %p93 = scmp.eq.s32.totalorder %s23, 3
      %p94 = por %p92, %p93
      %p95 = scmp.ne.s32.totalorder %s84, %s85
      %p96 = scmp.eq.s32.totalorder %s23, 0
      %p97 = por %p95, %p96
      %p98 = scmp.ne.s32.totalorder %s84, %s85
      %p99 = scmp.eq.s32.totalorder %s24, 3
      %p100 = por %p98, %p99
      %p102 = scmp.ne.s32.totalorder %s85, %s101
      %p103 = scmp.eq.s32.totalorder %s24, 0
      %p104 = por %p102, %p103
      %s105 = ssub.s32 %s18, 1
      %p106 = scmp.gt.s32.totalorder %s105, 0
      %s107 = scalar_select %p106, %s105, 0
      %s108 = ssub.s32 %s25, 1
      %p109 = scmp.gt.s32.totalorder %s108, 0
      %s110 = scalar_select %p109, %s108, 0
      %s111 = ssub.s32 %s107, %s110
      %p112 = scmp.eq.s32.totalorder %s111, 0
      %s114 = sadd.s32 %s113, 1
      %s115 = scalar_select %p112, %s113, %s114
      %p118 = pneg %p112
      %p119 = scmp.eq.s32.totalorder %s18, 3
      %p120 = por %p118, %p119
      %p121 = scmp.ne.s32.totalorder %s113, %s116
      %p122 = scmp.eq.s32.totalorder %s18, 0
      %p123 = por %p121, %p122
      %p124 = scmp.ne.s32.totalorder %s113, %s116
      %p125 = scmp.eq.s32.totalorder %s23, 3
      %p126 = por %p124, %p125
      %p127 = scmp.ne.s32.totalorder %s116, %s117
      %p128 = scmp.eq.s32.totalorder %s23, 0
      %p129 = por %p127, %p128
      %p130 = scmp.ne.s32.totalorder %s116, %s117
      %p131 = scmp.eq.s32.totalorder %s24, 3
      %p132 = por %p130, %p131
      %p134 = scmp.ne.s32.totalorder %s117, %s133
      %p135 = scmp.eq.s32.totalorder %s24, 0
      %p136 = por %p134, %p135
      %s138 = sadd.s32 %s137, 1
      %p141 = scmp.eq.s32.totalorder %s18, 3
      %p142 = scmp.ne.s32.totalorder %s137, %s139
      %p143 = scmp.eq.s32.totalorder %s18, 0
      %p144 = por %p142, %p143
      %p145 = scmp.ne.s32.totalorder %s137, %s139
      %p146 = scmp.eq.s32.totalorder %s23, 3
      %p147 = por %p145, %p146
      %p148 = scmp.ne.s32.totalorder %s139, %s140
      %p149 = scmp.eq.s32.totalorder %s23, 0
      %p150 = por %p148, %p149
      %p151 = scmp.ne.s32.totalorder %s139, %s140
      %p152 = scmp.eq.s32.totalorder %s24, 3
      %p153 = por %p151, %p152
      %p155 = scmp.ne.s32.totalorder %s140, %s154
      %p156 = scmp.eq.s32.totalorder %s24, 0
      %p157 = por %p155, %p156
      %s159 = sadd.s32 %s158, 1
      %p162 = scmp.eq.s32.totalorder %s18, 3
      %p163 = scmp.ne.s32.totalorder %s158, %s160
      %p164 = scmp.eq.s32.totalorder %s18, 0
      %p165 = por %p163, %p164
      %p166 = scmp.ne.s32.totalorder %s158, %s160
      %p167 = scmp.eq.s32.totalorder %s23, 3
      %p168 = por %p166, %p167
      %p169 = scmp.ne.s32.totalorder %s160, %s161
      %p170 = scmp.eq.s32.totalorder %s23, 0
      %p171 = por %p169, %p170
      %p172 = scmp.ne.s32.totalorder %s160, %s161
      %p173 = scmp.eq.s32.totalorder %s24, 3
      %p174 = por %p172, %p173
      %p176 = scmp.ne.s32.totalorder %s161, %s175
      %p177 = scmp.eq.s32.totalorder %s24, 0
      %p178 = por %p176, %p177
      %s180 = sadd.s32 %s179, 1
      %p183 = scmp.eq.s32.totalorder %s18, 3
      %p184 = scmp.ne.s32.totalorder %s179, %s181
      %p185 = scmp.eq.s32.totalorder %s18, 0
      %p186 = por %p184, %p185
      %p187 = scmp.ne.s32.totalorder %s179, %s181
      %p188 = scmp.eq.s32.totalorder %s23, 3
      %p189 = por %p187, %p188
      %p190 = scmp.ne.s32.totalorder %s181, %s182
      %p191 = scmp.eq.s32.totalorder %s23, 0
      %p192 = por %p190, %p191
      %p193 = scmp.ne.s32.totalorder %s181, %s182
      %p194 = scmp.eq.s32.totalorder %s24, 3
      %p195 = por %p193, %p194
      %p197 = scmp.ne.s32.totalorder %s182, %s196
      %p198 = scmp.eq.s32.totalorder %s24, 0
      %p199 = por %p197, %p198
      %p200 = scmp.le.s32.totalorder 1, %s18
      %p201 = scmp.lt.s32.totalorder %s18, 5
      %p202 = pnand %p200, %p201
      %p203 = pneg %p202
      // Predicated region
      $region9: #{lstm_net_forward.1} parent=5 // pred_check
        _
      $region10: #{lstm_net_forward.1} parent=5 // pred_check_branch
        %205 = sbr.rel (%p202) target = $region12
      $region11: #{lstm_net_forward.1} parent=5 // pred_region
        %s206 = ssub.s32 %s18, 1
        // Predicated region
        $region13: #{lstm_net_forward.1} parent=11 // pred_check
          %p207 = pneg %p39
        $region14: #{lstm_net_forward.1} parent=11 // pred_check_branch
          %209 = sbr.rel (%p207) target = $region16
        $region15: #{lstm_net_forward.1} parent=11 // pred_region
          _
        $region16: #{lstm_net_forward.1} parent=11 // pred_fallthru
          _
        // Predicated region
        $region17: #{lstm_net_forward.1} parent=11 // pred_check
          %p210 = pneg %p150
        $region18: #{lstm_net_forward.1} parent=11 // pred_check_branch
          %212 = sbr.rel (%p210) target = $region20
        $region19: #{lstm_net_forward.1} parent=11 // pred_region
          _
        $region20: #{lstm_net_forward.1} parent=11 // pred_fallthru
          _
        // Predicated region
        $region21: #{lstm_net_forward.1} parent=11 // pred_check
          %p213 = pneg %p171
        $region22: #{lstm_net_forward.1} parent=11 // pred_check_branch
          %215 = sbr.rel (%p213) target = $region24
        $region23: #{lstm_net_forward.1} parent=11 // pred_region
          _
        $region24: #{lstm_net_forward.1} parent=11 // pred_fallthru
          _
      $region12: #{lstm_net_forward.1} parent=5 // pred_fallthru
        _
      %p216 = scmp.lt.s32.totalorder %s18, 4
      // Predicated region
      $region25: #{lstm_net_forward.1} parent=5 // pred_check
        %p217 = pneg %p216
      $region26: #{lstm_net_forward.1} parent=5 // pred_check_branch
        %219 = sbr.rel (%p217) target = $region28
      $region27: #{lstm_net_forward.1} parent=5 // pred_region
        // Predicated region
        $region29: #{lstm_net_forward.1} parent=27 // pred_check
          %p220 = pneg %p65
        $region30: #{lstm_net_forward.1} parent=27 // pred_check_branch
          %222 = sbr.rel (%p220) target = $region32
        $region31: #{lstm_net_forward.1} parent=27 // pred_region
          %s223 = sand.u32 %s55, 1
          %s224 = scalar_lea.sflag [#allocation5], %s223
          %s225 = sand.u32 %s55, 1
          %s226 = smul.addr %s225, 256
          %s227 = scalar_lea.vmem [#allocation4], %s226
          %s228 = ssub.s32 %s18, 1
          %p229 = scmp.gt.s32.totalorder %s228, 0
          %s230 = scalar_select %p229, %s228, 0
          %s232 = ssub.s32 4096, 4096
          %233 = vsyncadd %s224, %s232
          %s234 = smul.addr %s230, 64
          %s235 = smul.addr %s234, 64
          %s236 = scalar_lea.hbm %s1, %s235
          %s237 = sshll.u32 %s227, 4
          %s238 = int_to_ptr.vmem [resolvable:$true] %s237
          %243 = dma.hbm_to_vmem [thread:$0]  %s236, 4096, %s238, %s224, 256, 256, 16
        $region32: #{lstm_net_forward.1} parent=27 // pred_fallthru
          _
        // Predicated region
        $region33: #{lstm_net_forward.1} parent=27 // pred_check
          %p244 = pneg %p91
        $region34: #{lstm_net_forward.1} parent=27 // pred_check_branch
          %246 = sbr.rel (%p244) target = $region36
        $region35: #{lstm_net_forward.1} parent=27 // pred_region
          %s247 = sand.u32 %s81, 1
          %s248 = scalar_lea.sflag [#allocation7], %s247
          %s249 = sand.u32 %s81, 1
          %s250 = smul.addr %s249, 256
          %s251 = scalar_lea.vmem [#allocation6], %s250
          %s253 = ssub.s32 4096, 4096
          %254 = vsyncadd %s248, %s253
          %s255 = smul.addr %s18, 64
          %s256 = smul.addr %s255, 64
          %s257 = scalar_lea.hbm %s2, %s256
          %s258 = sshll.u32 %s251, 4
          %s259 = int_to_ptr.vmem [resolvable:$true] %s258
          %264 = dma.hbm_to_vmem [thread:$0]  %s257, 4096, %s259, %s248, 256, 256, 16
        $region36: #{lstm_net_forward.1} parent=27 // pred_fallthru
          _
        // Predicated region
        $region37: #{lstm_net_forward.1} parent=27 // pred_check
          %p265 = pneg %p123
        $region38: #{lstm_net_forward.1} parent=27 // pred_check_branch
          %267 = sbr.rel (%p265) target = $region40
        $region39: #{lstm_net_forward.1} parent=27 // pred_region
          %s268 = ssub.s32 %s18, 1
          %p269 = scmp.gt.s32.totalorder %s268, 0
          %s270 = scalar_select %p269, %s268, 0
          %p271 = scmp.lt.s32.totalorder %s270, 2
          %s272 = scalar_select %p271, %s270, 2
          %s273 = smul.addr %s272, 4
          %s274 = scalar_lea.vmem %s3, %s273
          %s275 = ssub.s32 %s18, 1
          %p276 = scmp.gt.s32.totalorder %s275, 0
          %s277 = scalar_select %p276, %s275, 0
        $region40: #{lstm_net_forward.1} parent=27 // pred_fallthru
          _
      $region28: #{lstm_net_forward.1} parent=5 // pred_fallthru
        _
      %p278 = scmp.le.s32.totalorder 1, %s18
      %p279 = scmp.lt.s32.totalorder %s18, 5
      %p280 = pnand %p278, %p279
      %p281 = pneg %p280
      // Predicated region
      $region41: #{lstm_net_forward.1} parent=5 // pred_check
        _
      $region42: #{lstm_net_forward.1} parent=5 // pred_check_branch
        %283 = sbr.rel (%p280) target = $region44
      $region43: #{lstm_net_forward.1} parent=5 // pred_region
        %s284 = ssub.s32 %s18, 1
        %s285 = sand.u32 %s58, 1
        %s286 = scalar_lea.sflag [#allocation5], %s285
        %s287 = sand.u32 %s58, 1
        %s288 = smul.addr %s287, 256
        %s289 = scalar_lea.vmem [#allocation4], %s288
        // Predicated region
        $region45: #{lstm_net_forward.1} parent=43 // pred_check
          %p290 = pneg %p71
        $region46: #{lstm_net_forward.1} parent=43 // pred_check_branch
          %292 = sbr.rel (%p290) target = $region48
        $region47: #{lstm_net_forward.1} parent=43 // pred_region
          %293 = dma.done %s286, 4096
        $region48: #{lstm_net_forward.1} parent=43 // pred_fallthru
          _
        %s294 = sand.u32 %s84, 1
        %s295 = scalar_lea.sflag [#allocation7], %s294
        %s296 = sand.u32 %s84, 1
        %s297 = smul.addr %s296, 256
        %s298 = scalar_lea.vmem [#allocation6], %s297
        // Predicated region
        $region49: #{lstm_net_forward.1} parent=43 // pred_check
          %p299 = pneg %p97
        $region50: #{lstm_net_forward.1} parent=43 // pred_check_branch
          %301 = sbr.rel (%p299) target = $region52
        $region51: #{lstm_net_forward.1} parent=43 // pred_region
          %302 = dma.done %s295, 4096
        $region52: #{lstm_net_forward.1} parent=43 // pred_fallthru
          _
        %p303 = pneg %p39
        %p304 = pneg %p36
        %s305 = sand.u32 %s58, 1
        %s306 = scalar_lea.sflag [#allocation5], %s305
        %s307 = sand.u32 %s58, 1
        %s308 = smul.addr %s307, 256
        %s309 = scalar_lea.vmem [#allocation4], %s308
        %p310 = pneg %p71
        %p311 = pneg %p68
        %s312 = sand.u32 %s84, 1
        %s313 = scalar_lea.sflag [#allocation7], %s312
        %s314 = sand.u32 %s84, 1
        %s315 = smul.addr %s314, 256
        %s316 = scalar_lea.vmem [#allocation6], %s315
        %p317 = pneg %p97
        %p318 = pneg %p94
        %s319 = ssub.s32 %s23, 1
        %p320 = scmp.gt.s32.totalorder %s319, 0
        %s321 = scalar_select %p320, %s319, 0
        %p322 = scmp.lt.s32.totalorder %s321, 2
        %s323 = scalar_select %p322, %s321, 2
        %s324 = smul.addr %s323, 4
        %s325 = scalar_lea.vmem %s3, %s324
        %p326 = pneg %p129
        %p327 = pneg %p126
        %p328 = pneg %p150
        %p329 = pneg %p147
        %p330 = pneg %p171
        %p331 = pneg %p168
        %p332 = pneg %p192
        %p333 = pneg %p189
        %s334 = ssub.s32 %s23, 1
        %p335 = scmp.gt.s32.totalorder %s334, 0
        %s336 = scalar_select %p335, %s334, 0
        %s337 = ssub.s32 %s23, 1
        %p338 = scmp.gt.s32.totalorder %s337, 0
        %s339 = scalar_select %p338, %s337, 0
        %p340 = scmp.lt.s32.totalorder %s339, 2
        %s341 = scalar_select %p340, %s339, 2
        %s342 = smul.addr %s341, 4
        %s343 = scalar_lea.vmem %s3, %s342
        %s344 = ssub.s32 %s23, 1
        %p345 = scmp.gt.s32.totalorder %s344, 0
        %s346 = scalar_select %p345, %s344, 0
        %p348 = scmp.eq.s32.totalorder %s23, 0
        // Predicated region
        $region53: #{lstm_net_forward.1} parent=43 // pred_check
          %p349 = pneg %p348
        $region54: #{lstm_net_forward.1} parent=43 // pred_check_branch
          %351 = sbr.rel (%p349) target = $region56
        $region55: #{lstm_net_forward.1} parent=43 // pred_region
          %v352 = vld [vmem:[%s0] sm:$0xff]
          %v353 = vld [vmem:[%s0 + $0x8] sm:$0xff]
          %v354 = vld [vmem:[%s0 + $0x10] sm:$0xff]
          %v355 = vld [vmem:[%s0 + $0x18] sm:$0xff]
          %v356 = vld [vmem:[%s0 + $0x20] sm:$0xff]
          %v357 = vld [vmem:[%s0 + $0x28] sm:$0xff]
          %v358 = vld [vmem:[%s0 + $0x30] sm:$0xff]
          %v359 = vld [vmem:[%s0 + $0x38] sm:$0xff]
          %v360 = vld [vmem:[%s0 + $0x40] sm:$0xff]
          %v361 = vld [vmem:[%s0 + $0x48] sm:$0xff]
          %v362 = vld [vmem:[%s0 + $0x50] sm:$0xff]
          %v363 = vld [vmem:[%s0 + $0x58] sm:$0xff]
          %v364 = vld [vmem:[%s0 + $0x60] sm:$0xff]
          %v365 = vld [vmem:[%s0 + $0x68] sm:$0xff]
          %v366 = vld [vmem:[%s0 + $0x70] sm:$0xff]
          %v367 = vld [vmem:[%s0 + $0x78] sm:$0xff]
          %v368 = vld [vmem:[%s0 + $0x80] sm:$0xff]
          %v369 = vld [vmem:[%s0 + $0x88] sm:$0xff]
          %v370 = vld [vmem:[%s0 + $0x90] sm:$0xff]
          %v371 = vld [vmem:[%s0 + $0x98] sm:$0xff]
          %v372 = vld [vmem:[%s0 + $0xa0] sm:$0xff]
          %v373 = vld [vmem:[%s0 + $0xa8] sm:$0xff]
          %v374 = vld [vmem:[%s0 + $0xb0] sm:$0xff]
          %v375 = vld [vmem:[%s0 + $0xb8] sm:$0xff]
          %v376 = vld [vmem:[%s0 + $0xc0] sm:$0xff]
          %v377 = vld [vmem:[%s0 + $0xc8] sm:$0xff]
          %v378 = vld [vmem:[%s0 + $0xd0] sm:$0xff]
          %v379 = vld [vmem:[%s0 + $0xd8] sm:$0xff]
          %v380 = vld [vmem:[%s0 + $0xe0] sm:$0xff]
          %v381 = vld [vmem:[%s0 + $0xe8] sm:$0xff]
          %v382 = vld [vmem:[%s0 + $0xf0] sm:$0xff]
          %v383 = vld [vmem:[%s0 + $0xf8] sm:$0xff]
          %384 = vst [vmem:[#allocation3] sm:$0xff] %v352
          %385 = vst [vmem:[#allocation3 + $0x8] sm:$0xff] %v353
          %386 = vst [vmem:[#allocation3 + $0x10] sm:$0xff] %v354
          %387 = vst [vmem:[#allocation3 + $0x18] sm:$0xff] %v355
          %388 = vst [vmem:[#allocation3 + $0x20] sm:$0xff] %v356
          %389 = vst [vmem:[#allocation3 + $0x28] sm:$0xff] %v357
          %390 = vst [vmem:[#allocation3 + $0x30] sm:$0xff] %v358
          %391 = vst [vmem:[#allocation3 + $0x38] sm:$0xff] %v359
          %392 = vst [vmem:[#allocation3 + $0x40] sm:$0xff] %v360
          %393 = vst [vmem:[#allocation3 + $0x48] sm:$0xff] %v361
          %394 = vst [vmem:[#allocation3 + $0x50] sm:$0xff] %v362
          %395 = vst [vmem:[#allocation3 + $0x58] sm:$0xff] %v363
          %396 = vst [vmem:[#allocation3 + $0x60] sm:$0xff] %v364
          %397 = vst [vmem:[#allocation3 + $0x68] sm:$0xff] %v365
          %398 = vst [vmem:[#allocation3 + $0x70] sm:$0xff] %v366
          %399 = vst [vmem:[#allocation3 + $0x78] sm:$0xff] %v367
          %400 = vst [vmem:[#allocation3 + $0x80] sm:$0xff] %v368
          %401 = vst [vmem:[#allocation3 + $0x88] sm:$0xff] %v369
          %402 = vst [vmem:[#allocation3 + $0x90] sm:$0xff] %v370
          %403 = vst [vmem:[#allocation3 + $0x98] sm:$0xff] %v371
          %404 = vst [vmem:[#allocation3 + $0xa0] sm:$0xff] %v372
          %405 = vst [vmem:[#allocation3 + $0xa8] sm:$0xff] %v373
          %406 = vst [vmem:[#allocation3 + $0xb0] sm:$0xff] %v374
          %407 = vst [vmem:[#allocation3 + $0xb8] sm:$0xff] %v375
          %408 = vst [vmem:[#allocation3 + $0xc0] sm:$0xff] %v376
          %409 = vst [vmem:[#allocation3 + $0xc8] sm:$0xff] %v377
          %410 = vst [vmem:[#allocation3 + $0xd0] sm:$0xff] %v378
          %411 = vst [vmem:[#allocation3 + $0xd8] sm:$0xff] %v379
          %412 = vst [vmem:[#allocation3 + $0xe0] sm:$0xff] %v380
          %413 = vst [vmem:[#allocation3 + $0xe8] sm:$0xff] %v381
          %414 = vst [vmem:[#allocation3 + $0xf0] sm:$0xff] %v382
          %415 = vst [vmem:[#allocation3 + $0xf8] sm:$0xff] %v383
        $region56: #{lstm_net_forward.1} parent=43 // pred_fallthru
          _
        %p416 = scmp.gt.s32.totalorder %s23, 0
        // Predicated region
        $region57: #{lstm_net_forward.1} parent=43 // pred_check
          %p417 = pneg %p416
        $region58: #{lstm_net_forward.1} parent=43 // pred_check_branch
          %419 = sbr.rel (%p417) target = $region60
        $region59: #{lstm_net_forward.1} parent=43 // pred_region
          %v420 = vld [vmem:[#allocation2] sm:$0xff]
          %v421 = vld [vmem:[#allocation2 + $0x8] sm:$0xff]
          %v422 = vld [vmem:[#allocation2 + $0x10] sm:$0xff]
          %v423 = vld [vmem:[#allocation2 + $0x18] sm:$0xff]
          %v424 = vld [vmem:[#allocation2 + $0x20] sm:$0xff]
          %v425 = vld [vmem:[#allocation2 + $0x28] sm:$0xff]
          %v426 = vld [vmem:[#allocation2 + $0x30] sm:$0xff]
          %v427 = vld [vmem:[#allocation2 + $0x38] sm:$0xff]
          %v428 = vpack.c.bf16 %v421, %v420
          %v429 = vpack.c.bf16 %v423, %v422
          %v430 = vpack.c.bf16 %v425, %v424
          %v431 = vpack.c.bf16 %v427, %v426
          %v432 = vld [vmem:[%s289] sm:$0xff]
          %v433 = vld [vmem:[%s289 + $0x8] sm:$0xff]
          %v434 = vld [vmem:[%s289 + $0x10] sm:$0xff]
          %v435 = vld [vmem:[%s289 + $0x18] sm:$0xff]
          %v436 = vld [vmem:[%s289 + $0x20] sm:$0xff]
          %v437 = vld [vmem:[%s289 + $0x28] sm:$0xff]
          %v438 = vld [vmem:[%s289 + $0x30] sm:$0xff]
          %v439 = vld [vmem:[%s289 + $0x38] sm:$0xff]
          %v440 = vld [vmem:[%s289 + $0x40] sm:$0xff]
          %v441 = vld [vmem:[%s289 + $0x48] sm:$0xff]
          %v442 = vld [vmem:[%s289 + $0x50] sm:$0xff]
          %v443 = vld [vmem:[%s289 + $0x58] sm:$0xff]
          %v444 = vld [vmem:[%s289 + $0x60] sm:$0xff]
          %v445 = vld [vmem:[%s289 + $0x68] sm:$0xff]
          %v446 = vld [vmem:[%s289 + $0x70] sm:$0xff]
          %v447 = vld [vmem:[%s289 + $0x78] sm:$0xff]
          %v448 = vld [vmem:[%s289 + $0x80] sm:$0xff]
          %v449 = vld [vmem:[%s289 + $0x88] sm:$0xff]
          %v450 = vld [vmem:[%s289 + $0x90] sm:$0xff]
          %v451 = vld [vmem:[%s289 + $0x98] sm:$0xff]
          %v452 = vld [vmem:[%s289 + $0xa0] sm:$0xff]
          %v453 = vld [vmem:[%s289 + $0xa8] sm:$0xff]
          %v454 = vld [vmem:[%s289 + $0xb0] sm:$0xff]
          %v455 = vld [vmem:[%s289 + $0xb8] sm:$0xff]
          %v456 = vld [vmem:[%s289 + $0xc0] sm:$0xff]
          %v457 = vld [vmem:[%s289 + $0xc8] sm:$0xff]
          %v458 = vld [vmem:[%s289 + $0xd0] sm:$0xff]
          %v459 = vld [vmem:[%s289 + $0xd8] sm:$0xff]
          %v460 = vld [vmem:[%s289 + $0xe0] sm:$0xff]
          %v461 = vld [vmem:[%s289 + $0xe8] sm:$0xff]
          %v462 = vld [vmem:[%s289 + $0xf0] sm:$0xff]
          %v463 = vld [vmem:[%s289 + $0xf8] sm:$0xff]
          %v464 = vld [vmem:[%s343] sm:$0xf]
          %v466 = vlaneseq
          %v467 = vshrl.u32 %v466, 7
          %v468 = vsub.s32 0, %v467
          %v469 = vrot.slane %v464, %v468
          %v470 = vlaneseq
          %v471 = vshrl.u32 %v470, 7
          %v472 = vsub.s32 1, %v471
          %v473 = vrot.slane %v464, %v472
          %v474 = vlaneseq
          %v475 = vshrl.u32 %v474, 7
          %v476 = vsub.s32 2, %v475
          %v477 = vrot.slane %v464, %v476
          %v478 = vlaneseq
          %v479 = vshrl.u32 %v478, 7
          %v480 = vsub.s32 3, %v479
          %v481 = vrot.slane %v464, %v480
          %v518 = vunpack.c.l.b16 %v432
          %v519 = vunpack.c.h.b16 %v432
          %v520 = vunpack.c.l.b16 %v433
          %v521 = vunpack.c.h.b16 %v433
          %v522 = vunpack.c.l.b16 %v434
          %v523 = vunpack.c.h.b16 %v434
          %v524 = vunpack.c.l.b16 %v435
          %v525 = vunpack.c.h.b16 %v435
          %v526 = vunpack.c.l.b16 %v436
          %v527 = vunpack.c.h.b16 %v436
          %v528 = vunpack.c.l.b16 %v437
          %v529 = vunpack.c.h.b16 %v437
          %v530 = vunpack.c.l.b16 %v438
          %v531 = vunpack.c.h.b16 %v438
          %v532 = vunpack.c.l.b16 %v439
          %v533 = vunpack.c.h.b16 %v439
          %v534 = vunpack.c.l.b16 %v440
          %v535 = vunpack.c.h.b16 %v440
          %v536 = vunpack.c.l.b16 %v441
          %v537 = vunpack.c.h.b16 %v441
          %v538 = vunpack.c.l.b16 %v442
          %v539 = vunpack.c.h.b16 %v442
          %v540 = vunpack.c.l.b16 %v443
          %v541 = vunpack.c.h.b16 %v443
          %v542 = vunpack.c.l.b16 %v444
          %v543 = vunpack.c.h.b16 %v444
          %v544 = vunpack.c.l.b16 %v445
          %v545 = vunpack.c.h.b16 %v445
          %v546 = vunpack.c.l.b16 %v446
          %v547 = vunpack.c.h.b16 %v446
          %v548 = vunpack.c.l.b16 %v447
          %v549 = vunpack.c.h.b16 %v447
          %v550 = vunpack.c.l.b16 %v448
          %v551 = vunpack.c.h.b16 %v448
          %v552 = vunpack.c.l.b16 %v449
          %v553 = vunpack.c.h.b16 %v449
          %v554 = vunpack.c.l.b16 %v450
          %v555 = vunpack.c.h.b16 %v450
          %v556 = vunpack.c.l.b16 %v451
          %v557 = vunpack.c.h.b16 %v451
          %v558 = vunpack.c.l.b16 %v452
          %v559 = vunpack.c.h.b16 %v452
          %v560 = vunpack.c.l.b16 %v453
          %v561 = vunpack.c.h.b16 %v453
          %v562 = vunpack.c.l.b16 %v454
          %v563 = vunpack.c.h.b16 %v454
          %v564 = vunpack.c.l.b16 %v455
          %v565 = vunpack.c.h.b16 %v455
          %v566 = vunpack.c.l.b16 %v456
          %v567 = vunpack.c.h.b16 %v456
          %v568 = vunpack.c.l.b16 %v457
          %v569 = vunpack.c.h.b16 %v457
          %v570 = vunpack.c.l.b16 %v458
          %v571 = vunpack.c.h.b16 %v458
          %v572 = vunpack.c.l.b16 %v459
          %v573 = vunpack.c.h.b16 %v459
          %v574 = vunpack.c.l.b16 %v460
          %v575 = vunpack.c.h.b16 %v460
          %v576 = vunpack.c.l.b16 %v461
          %v577 = vunpack.c.h.b16 %v461
          %v578 = vunpack.c.l.b16 %v462
          %v579 = vunpack.c.h.b16 %v462
          %v580 = vunpack.c.l.b16 %v463
          %v581 = vunpack.c.h.b16 %v463
          %v582 = vpack.c.b16 %v522, %v518
          %v583 = vpack.c.b16 %v523, %v519
          %v584 = vpack.c.b16 %v524, %v520
          %v585 = vpack.c.b16 %v525, %v521
          %v586 = vpack.c.b16 %v530, %v526
          %v587 = vpack.c.b16 %v531, %v527
          %v588 = vpack.c.b16 %v532, %v528
          %v589 = vpack.c.b16 %v533, %v529
          %v590 = vpack.c.b16 %v538, %v534
          %v591 = vpack.c.b16 %v539, %v535
          %v592 = vpack.c.b16 %v540, %v536
          %v593 = vpack.c.b16 %v541, %v537
          %v594 = vpack.c.b16 %v546, %v542
          %v595 = vpack.c.b16 %v547, %v543
          %v596 = vpack.c.b16 %v548, %v544
          %v597 = vpack.c.b16 %v549, %v545
          %v598 = vpack.c.b16 %v554, %v550
          %v599 = vpack.c.b16 %v555, %v551
          %v600 = vpack.c.b16 %v556, %v552
          %v601 = vpack.c.b16 %v557, %v553
          %v602 = vpack.c.b16 %v562, %v558
          %v603 = vpack.c.b16 %v563, %v559
          %v604 = vpack.c.b16 %v564, %v560
          %v605 = vpack.c.b16 %v565, %v561
          %v606 = vpack.c.b16 %v570, %v566
          %v607 = vpack.c.b16 %v571, %v567
          %v608 = vpack.c.b16 %v572, %v568
          %v609 = vpack.c.b16 %v573, %v569
          %v610 = vpack.c.b16 %v578, %v574
          %v611 = vpack.c.b16 %v579, %v575
          %v612 = vpack.c.b16 %v580, %v576
          %v613 = vpack.c.b16 %v581, %v577
          %646 = vmatprep.subr.bf16.mxu0 %v583
          %647 = vmatpush1.bf16.msra.mxu0 %v582
          %648 = vmatprep.subr.bf16.mxu0 %v587
          %649 = vmatpush1.bf16.msra.mxu0 %v586
          %650 = vmatprep.subr.bf16.mxu0 %v591
          %651 = vmatpush1.bf16.msra.mxu0 %v590
          %652 = vmatprep.subr.bf16.mxu0 %v595
          %653 = vmatpush1.bf16.msra.mxu0 %v594
          %654 = vmatprep.subr.bf16.mxu0 %v599
          %655 = vmatpush1.bf16.msra.mxu0 %v598
          %656 = vmatprep.subr.bf16.mxu0 %v603
          %657 = vmatpush1.bf16.msra.mxu0 %v602
          %658 = vmatprep.subr.bf16.mxu0 %v607
          %659 = vmatpush1.bf16.msra.mxu0 %v606
          %660 = vmatprep.subr.bf16.mxu0 %v611
          %661 = vmatpush1.bf16.msra.mxu0 %v610
          %662 = vmatprep.subr.bf16.mxu0 0
          %663 = vmatpush1.bf16.msra.mxu0 0
          %664 = vmatprep.subr.bf16.mxu0 0
          %665 = vmatpush1.bf16.msra.mxu0 0
          %666 = vmatprep.subr.bf16.mxu0 0
          %667 = vmatpush1.bf16.msra.mxu0 0
          %668 = vmatprep.subr.bf16.mxu0 0
          %669 = vmatpush1.bf16.msra.mxu0 0
          %670 = vmatprep.subr.bf16.mxu0 0
          %671 = vmatpush1.bf16.msra.mxu0 0
          %672 = vmatprep.subr.bf16.mxu0 0
          %673 = vmatpush1.bf16.msra.mxu0 0
          %674 = vmatprep.subr.bf16.mxu0 0
          %675 = vmatpush1.bf16.msra.mxu0 0
          %676 = vmatprep.subr.bf16.mxu0 0
          %677 = vmatpush1.bf16.msra.mxu0 0
          %678 = vmatprep.mubr.bf16.mxu0 0
          %679 = vmatmul.mubr.bf16.gmra.mrb[0].mxu0 %v428
          %v680 = vpop.f32.mrb[0].mxu0
          %v681 = vadd.f32 %v469, %v680
          %v682 = vpop.f32.mrb[0].mxu0
          %v683 = vadd.f32 %v473, %v682
          %v684 = vpop.f32.mrb[0].mxu0
          %v685 = vadd.f32 %v469, %v684
          %v686 = vpop.f32.mrb[0].mxu0
          %v687 = vadd.f32 %v473, %v686
          %688 = vmatprep.mubr.bf16.mxu0 0
          %689 = vmatmul.mubr.bf16.gmra.mrb[0].mxu0 %v429
          %v690 = vpop.f32.mrb[0].mxu0
          %v691 = vadd.f32 %v469, %v690
          %v692 = vpop.f32.mrb[0].mxu0
          %v693 = vadd.f32 %v473, %v692
          %v694 = vpop.f32.mrb[0].mxu0
          %v695 = vadd.f32 %v469, %v694
          %v696 = vpop.f32.mrb[0].mxu0
          %v697 = vadd.f32 %v473, %v696
          %698 = vmatprep.mubr.bf16.mxu0 0
          %699 = vmatmul.mubr.bf16.gmra.mrb[0].mxu0 %v430
          %v700 = vpop.f32.mrb[0].mxu0
          %v701 = vadd.f32 %v469, %v700
          %v702 = vpop.f32.mrb[0].mxu0
          %v703 = vadd.f32 %v473, %v702
          %v704 = vpop.f32.mrb[0].mxu0
          %v705 = vadd.f32 %v469, %v704
          %v706 = vpop.f32.mrb[0].mxu0
          %v707 = vadd.f32 %v473, %v706
          %708 = vmatprep.mubr.bf16.mxu0 0
          %709 = vmatmul.mubr.bf16.gmra.mrb[0].mxu0 %v431
          %v710 = vpop.f32.mrb[0].mxu0
          %v711 = vadd.f32 %v469, %v710
          %v712 = vpop.f32.mrb[0].mxu0
          %v713 = vadd.f32 %v473, %v712
          %v714 = vpop.f32.mrb[0].mxu0
          %v715 = vadd.f32 %v469, %v714
          %v716 = vpop.f32.mrb[0].mxu0
          %v717 = vadd.f32 %v473, %v716
          %718 = vdwg.mxu0
          %719 = vmatprep.subr.bf16.mxu0 %v585
          %720 = vmatpush1.bf16.msra.mxu0 %v584
          %721 = vmatprep.subr.bf16.mxu0 %v589
          %722 = vmatpush1.bf16.msra.mxu0 %v588
          %723 = vmatprep.subr.bf16.mxu0 %v593
          %724 = vmatpush1.bf16.msra.mxu0 %v592
          %725 = vmatprep.subr.bf16.mxu0 %v597
          %726 = vmatpush1.bf16.msra.mxu0 %v596
          %727 = vmatprep.subr.bf16.mxu0 %v601
          %728 = vmatpush1.bf16.msra.mxu0 %v600
          %729 = vmatprep.subr.bf16.mxu0 %v605
          %730 = vmatpush1.bf16.msra.mxu0 %v604
          %731 = vmatprep.subr.bf16.mxu0 %v609
          %732 = vmatpush1.bf16.msra.mxu0 %v608
          %733 = vmatprep.subr.bf16.mxu0 %v613
          %734 = vmatpush1.bf16.msra.mxu0 %v612
          %735 = vmatprep.subr.bf16.mxu0 0
          %736 = vmatpush1.bf16.msra.mxu0 0
          %737 = vmatprep.subr.bf16.mxu0 0
          %738 = vmatpush1.bf16.msra.mxu0 0
          %739 = vmatprep.subr.bf16.mxu0 0
          %740 = vmatpush1.bf16.msra.mxu0 0
          %741 = vmatprep.subr.bf16.mxu0 0
          %742 = vmatpush1.bf16.msra.mxu0 0
          %743 = vmatprep.subr.bf16.mxu0 0
          %744 = vmatpush1.bf16.msra.mxu0 0
          %745 = vmatprep.subr.bf16.mxu0 0
          %746 = vmatpush1.bf16.msra.mxu0 0
          %747 = vmatprep.subr.bf16.mxu0 0
          %748 = vmatpush1.bf16.msra.mxu0 0
          %749 = vmatprep.subr.bf16.mxu0 0
          %750 = vmatpush1.bf16.msra.mxu0 0
          %751 = vmatprep.mubr.bf16.mxu0 0
          %752 = vmatmul.mubr.bf16.gmra.mrb[0].mxu0 %v428
          %v753 = vpop.f32.mrb[0].mxu0
          %v754 = vadd.f32 %v477, %v753
          %v755 = vpop.f32.mrb[0].mxu0
          %v756 = vadd.f32 %v481, %v755
          %v757 = vpop.f32.mrb[0].mxu0
          %v758 = vadd.f32 %v477, %v757
          %v759 = vpop.f32.mrb[0].mxu0
          %v760 = vadd.f32 %v481, %v759
          %761 = vmatprep.mubr.bf16.mxu0 0
          %762 = vmatmul.mubr.bf16.gmra.mrb[0].mxu0 %v429
          %v763 = vpop.f32.mrb[0].mxu0
          %v764 = vadd.f32 %v477, %v763
          %v765 = vpop.f32.mrb[0].mxu0
          %v766 = vadd.f32 %v481, %v765
          %v767 = vpop.f32.mrb[0].mxu0
          %v768 = vadd.f32 %v477, %v767
          %v769 = vpop.f32.mrb[0].mxu0
          %v770 = vadd.f32 %v481, %v769
          %771 = vmatprep.mubr.bf16.mxu0 0
          %772 = vmatmul.mubr.bf16.gmra.mrb[0].mxu0 %v430
          %v773 = vpop.f32.mrb[0].mxu0
          %v774 = vadd.f32 %v477, %v773
          %v775 = vpop.f32.mrb[0].mxu0
          %v776 = vadd.f32 %v481, %v775
          %v777 = vpop.f32.mrb[0].mxu0
          %v778 = vadd.f32 %v477, %v777
          %v779 = vpop.f32.mrb[0].mxu0
          %v780 = vadd.f32 %v481, %v779
          %781 = vmatprep.mubr.bf16.mxu0 0
          %782 = vmatmul.mubr.bf16.gmra.mrb[0].mxu0 %v431
          %v783 = vpop.f32.mrb[0].mxu0
          %v784 = vadd.f32 %v477, %v783
          %v785 = vpop.f32.mrb[0].mxu0
          %v786 = vadd.f32 %v481, %v785
          %v787 = vpop.f32.mrb[0].mxu0
          %v788 = vadd.f32 %v477, %v787
          %v789 = vpop.f32.mrb[0].mxu0
          %v790 = vadd.f32 %v481, %v789
          %791 = vdwg.mxu0
          %792 = vst [vmem:[#allocation3] sm:$0xff] %v681
          %793 = vst [vmem:[#allocation3 + $0x8] sm:$0xff] %v683
          %794 = vst [vmem:[#allocation3 + $0x10] sm:$0xff] %v754
          %795 = vst [vmem:[#allocation3 + $0x18] sm:$0xff] %v756
          %796 = vst [vmem:[#allocation3 + $0x20] sm:$0xff] %v685
          %797 = vst [vmem:[#allocation3 + $0x28] sm:$0xff] %v687
          %798 = vst [vmem:[#allocation3 + $0x30] sm:$0xff] %v758
          %799 = vst [vmem:[#allocation3 + $0x38] sm:$0xff] %v760
          %800 = vst [vmem:[#allocation3 + $0x40] sm:$0xff] %v691
          %801 = vst [vmem:[#allocation3 + $0x48] sm:$0xff] %v693
          %802 = vst [vmem:[#allocation3 + $0x50] sm:$0xff] %v764
          %803 = vst [vmem:[#allocation3 + $0x58] sm:$0xff] %v766
          %804 = vst [vmem:[#allocation3 + $0x60] sm:$0xff] %v695
          %805 = vst [vmem:[#allocation3 + $0x68] sm:$0xff] %v697
          %806 = vst [vmem:[#allocation3 + $0x70] sm:$0xff] %v768
          %807 = vst [vmem:[#allocation3 + $0x78] sm:$0xff] %v770
          %808 = vst [vmem:[#allocation3 + $0x80] sm:$0xff] %v701
          %809 = vst [vmem:[#allocation3 + $0x88] sm:$0xff] %v703
          %810 = vst [vmem:[#allocation3 + $0x90] sm:$0xff] %v774
          %811 = vst [vmem:[#allocation3 + $0x98] sm:$0xff] %v776
          %812 = vst [vmem:[#allocation3 + $0xa0] sm:$0xff] %v705
          %813 = vst [vmem:[#allocation3 + $0xa8] sm:$0xff] %v707
          %814 = vst [vmem:[#allocation3 + $0xb0] sm:$0xff] %v778
          %815 = vst [vmem:[#allocation3 + $0xb8] sm:$0xff] %v780
          %816 = vst [vmem:[#allocation3 + $0xc0] sm:$0xff] %v711
          %817 = vst [vmem:[#allocation3 + $0xc8] sm:$0xff] %v713
          %818 = vst [vmem:[#allocation3 + $0xd0] sm:$0xff] %v784
          %819 = vst [vmem:[#allocation3 + $0xd8] sm:$0xff] %v786
          %820 = vst [vmem:[#allocation3 + $0xe0] sm:$0xff] %v715
          %821 = vst [vmem:[#allocation3 + $0xe8] sm:$0xff] %v717
          %822 = vst [vmem:[#allocation3 + $0xf0] sm:$0xff] %v788
          %823 = vst [vmem:[#allocation3 + $0xf8] sm:$0xff] %v790
        $region60: #{lstm_net_forward.1} parent=43 // pred_fallthru
          _
        %v824 = vld [vmem:[#allocation3] sm:$0xff]
        %v825 = vld [vmem:[#allocation3 + $0x8] sm:$0xff]
        %v826 = vld [vmem:[#allocation3 + $0x10] sm:$0xff]
        %v827 = vld [vmem:[#allocation3 + $0x18] sm:$0xff]
        %v828 = vld [vmem:[%s298] sm:$0xff]
        %v829 = vld [vmem:[%s298 + $0x8] sm:$0xff]
        %v830 = vld [vmem:[%s298 + $0x10] sm:$0xff]
        %v831 = vld [vmem:[%s298 + $0x18] sm:$0xff]
        %v832 = vld [vmem:[%s298 + $0x20] sm:$0xff]
        %v833 = vld [vmem:[%s298 + $0x28] sm:$0xff]
        %v834 = vld [vmem:[%s298 + $0x30] sm:$0xff]
        %v835 = vld [vmem:[%s298 + $0x38] sm:$0xff]
        %v836 = vld [vmem:[%s298 + $0x40] sm:$0xff]
        %v837 = vld [vmem:[%s298 + $0x48] sm:$0xff]
        %v838 = vld [vmem:[%s298 + $0x50] sm:$0xff]
        %v839 = vld [vmem:[%s298 + $0x58] sm:$0xff]
        %v840 = vld [vmem:[%s298 + $0x60] sm:$0xff]
        %v841 = vld [vmem:[%s298 + $0x68] sm:$0xff]
        %v842 = vld [vmem:[%s298 + $0x70] sm:$0xff]
        %v843 = vld [vmem:[%s298 + $0x78] sm:$0xff]
        %v844 = vld [vmem:[%s298 + $0x80] sm:$0xff]
        %v845 = vld [vmem:[%s298 + $0x88] sm:$0xff]
        %v846 = vld [vmem:[%s298 + $0x90] sm:$0xff]
        %v847 = vld [vmem:[%s298 + $0x98] sm:$0xff]
        %v848 = vld [vmem:[%s298 + $0xa0] sm:$0xff]
        %v849 = vld [vmem:[%s298 + $0xa8] sm:$0xff]
        %v850 = vld [vmem:[%s298 + $0xb0] sm:$0xff]
        %v851 = vld [vmem:[%s298 + $0xb8] sm:$0xff]
        %v852 = vld [vmem:[%s298 + $0xc0] sm:$0xff]
        %v853 = vld [vmem:[%s298 + $0xc8] sm:$0xff]
        %v854 = vld [vmem:[%s298 + $0xd0] sm:$0xff]
        %v855 = vld [vmem:[%s298 + $0xd8] sm:$0xff]
        %v856 = vld [vmem:[%s298 + $0xe0] sm:$0xff]
        %v857 = vld [vmem:[%s298 + $0xe8] sm:$0xff]
        %v858 = vld [vmem:[%s298 + $0xf0] sm:$0xff]
        %v859 = vld [vmem:[%s298 + $0xf8] sm:$0xff]
        %v892 = vunpack.c.l.b16 %v828
        %v893 = vunpack.c.h.b16 %v828
        %v894 = vunpack.c.l.b16 %v829
        %v895 = vunpack.c.h.b16 %v829
        %v896 = vunpack.c.l.b16 %v830
        %v897 = vunpack.c.h.b16 %v830
        %v898 = vunpack.c.l.b16 %v831
        %v899 = vunpack.c.h.b16 %v831
        %v900 = vunpack.c.l.b16 %v832
        %v901 = vunpack.c.h.b16 %v832
        %v902 = vunpack.c.l.b16 %v833
        %v903 = vunpack.c.h.b16 %v833
        %v904 = vunpack.c.l.b16 %v834
        %v905 = vunpack.c.h.b16 %v834
        %v906 = vunpack.c.l.b16 %v835
        %v907 = vunpack.c.h.b16 %v835
        %v908 = vunpack.c.l.b16 %v836
        %v909 = vunpack.c.h.b16 %v836
        %v910 = vunpack.c.l.b16 %v837
        %v911 = vunpack.c.h.b16 %v837
        %v912 = vunpack.c.l.b16 %v838
        %v913 = vunpack.c.h.b16 %v838
        %v914 = vunpack.c.l.b16 %v839
        %v915 = vunpack.c.h.b16 %v839
        %v916 = vunpack.c.l.b16 %v840
        %v917 = vunpack.c.h.b16 %v840
        %v918 = vunpack.c.l.b16 %v841
        %v919 = vunpack.c.h.b16 %v841
        %v920 = vunpack.c.l.b16 %v842
        %v921 = vunpack.c.h.b16 %v842
        %v922 = vunpack.c.l.b16 %v843
        %v923 = vunpack.c.h.b16 %v843
        %v924 = vunpack.c.l.b16 %v844
        %v925 = vunpack.c.h.b16 %v844
        %v926 = vunpack.c.l.b16 %v845
        %v927 = vunpack.c.h.b16 %v845
        %v928 = vunpack.c.l.b16 %v846
        %v929 = vunpack.c.h.b16 %v846
        %v930 = vunpack.c.l.b16 %v847
        %v931 = vunpack.c.h.b16 %v847
        %v932 = vunpack.c.l.b16 %v848
        %v933 = vunpack.c.h.b16 %v848
        %v934 = vunpack.c.l.b16 %v849
        %v935 = vunpack.c.h.b16 %v849
        %v936 = vunpack.c.l.b16 %v850
        %v937 = vunpack.c.h.b16 %v850
        %v938 = vunpack.c.l.b16 %v851
        %v939 = vunpack.c.h.b16 %v851
        %v940 = vunpack.c.l.b16 %v852
        %v941 = vunpack.c.h.b16 %v852
        %v942 = vunpack.c.l.b16 %v853
        %v943 = vunpack.c.h.b16 %v853
        %v944 = vunpack.c.l.b16 %v854
        %v945 = vunpack.c.h.b16 %v854
        %v946 = vunpack.c.l.b16 %v855
        %v947 = vunpack.c.h.b16 %v855
        %v948 = vunpack.c.l.b16 %v856
        %v949 = vunpack.c.h.b16 %v856
        %v950 = vunpack.c.l.b16 %v857
        %v951 = vunpack.c.h.b16 %v857
        %v952 = vunpack.c.l.b16 %v858
        %v953 = vunpack.c.h.b16 %v858
        %v954 = vunpack.c.l.b16 %v859
        %v955 = vunpack.c.h.b16 %v859
        %v956 = vpack.c.b16 %v896, %v892
        %v957 = vpack.c.b16 %v897, %v893
        %v958 = vpack.c.b16 %v898, %v894
        %v959 = vpack.c.b16 %v899, %v895
        %v960 = vpack.c.b16 %v904, %v900
        %v961 = vpack.c.b16 %v905, %v901
        %v962 = vpack.c.b16 %v906, %v902
        %v963 = vpack.c.b16 %v907, %v903
        %v964 = vpack.c.b16 %v912, %v908
        %v965 = vpack.c.b16 %v913, %v909
        %v966 = vpack.c.b16 %v914, %v910
        %v967 = vpack.c.b16 %v915, %v911
        %v968 = vpack.c.b16 %v920, %v916
        %v969 = vpack.c.b16 %v921, %v917
        %v970 = vpack.c.b16 %v922, %v918
        %v971 = vpack.c.b16 %v923, %v919
        %v972 = vpack.c.b16 %v928, %v924
        %v973 = vpack.c.b16 %v929, %v925
        %v974 = vpack.c.b16 %v930, %v926
        %v975 = vpack.c.b16 %v931, %v927
        %v976 = vpack.c.b16 %v936, %v932
        %v977 = vpack.c.b16 %v937, %v933
        %v978 = vpack.c.b16 %v938, %v934
        %v979 = vpack.c.b16 %v939, %v935
        %v980 = vpack.c.b16 %v944, %v940
        %v981 = vpack.c.b16 %v945, %v941
        %v982 = vpack.c.b16 %v946, %v942
        %v983 = vpack.c.b16 %v947, %v943
        %v984 = vpack.c.b16 %v952, %v948
        %v985 = vpack.c.b16 %v953, %v949
        %v986 = vpack.c.b16 %v954, %v950
        %v987 = vpack.c.b16 %v955, %v951
        %1020 = vmatprep.subr.bf16.mxu0 %v957
        %1021 = vmatpush1.bf16.msra.mxu0 %v956
        %1022 = vmatprep.subr.bf16.mxu0 %v961
        %1023 = vmatpush1.bf16.msra.mxu0 %v960
        %1024 = vmatprep.subr.bf16.mxu0 %v965
        %1025 = vmatpush1.bf16.msra.mxu0 %v964
        %1026 = vmatprep.subr.bf16.mxu0 %v969
        %1027 = vmatpush1.bf16.msra.mxu0 %v968
        %1028 = vmatprep.subr.bf16.mxu0 %v973
        %1029 = vmatpush1.bf16.msra.mxu0 %v972
        %1030 = vmatprep.subr.bf16.mxu0 %v977
        %1031 = vmatpush1.bf16.msra.mxu0 %v976
        %1032 = vmatprep.subr.bf16.mxu0 %v981
        %1033 = vmatpush1.bf16.msra.mxu0 %v980
        %1034 = vmatprep.subr.bf16.mxu0 %v985
        %1035 = vmatpush1.bf16.msra.mxu0 %v984
        %1036 = vmatprep.subr.bf16.mxu0 0
        %1037 = vmatpush1.bf16.msra.mxu0 0
        %1038 = vmatprep.subr.bf16.mxu0 0
        %1039 = vmatpush1.bf16.msra.mxu0 0
        %1040 = vmatprep.subr.bf16.mxu0 0
        %1041 = vmatpush1.bf16.msra.mxu0 0
        %1042 = vmatprep.subr.bf16.mxu0 0
        %1043 = vmatpush1.bf16.msra.mxu0 0
        %1044 = vmatprep.subr.bf16.mxu0 0
        %1045 = vmatpush1.bf16.msra.mxu0 0
        %1046 = vmatprep.subr.bf16.mxu0 0
        %1047 = vmatpush1.bf16.msra.mxu0 0
        %1048 = vmatprep.subr.bf16.mxu0 0
        %1049 = vmatpush1.bf16.msra.mxu0 0
        %1050 = vmatprep.subr.bf16.mxu0 0
        %1051 = vmatpush1.bf16.msra.mxu0 0
        %1052 = vmatprep.mubr.bf16.mxu0 0
        %1053 = vmatmul.mubr.bf16.gmra.mrb[0].mxu0 0
        %v1054 = vpop.f32.mrb[0].mxu0
        %v1055 = vadd.f32 0.0, %v1054
        %v1056 = vpop.f32.mrb[0].mxu0
        %v1057 = vadd.f32 0.0, %v1056
        %v1058 = vpop.f32.mrb[0].mxu0
        %v1059 = vpop.f32.mrb[0].mxu0
        %1060 = vdwg.mxu0
        %1061 = vmatprep.subr.bf16.mxu0 %v959
        %1062 = vmatpush1.bf16.msra.mxu0 %v958
        %1063 = vmatprep.subr.bf16.mxu0 %v963
        %1064 = vmatpush1.bf16.msra.mxu0 %v962
        %1065 = vmatprep.subr.bf16.mxu0 %v967
        %1066 = vmatpush1.bf16.msra.mxu0 %v966
        %1067 = vmatprep.subr.bf16.mxu0 %v971
        %1068 = vmatpush1.bf16.msra.mxu0 %v970
        %1069 = vmatprep.subr.bf16.mxu0 %v975
        %1070 = vmatpush1.bf16.msra.mxu0 %v974
        %1071 = vmatprep.subr.bf16.mxu0 %v979
        %1072 = vmatpush1.bf16.msra.mxu0 %v978
        %1073 = vmatprep.subr.bf16.mxu0 %v983
        %1074 = vmatpush1.bf16.msra.mxu0 %v982
        %1075 = vmatprep.subr.bf16.mxu0 %v987
        %1076 = vmatpush1.bf16.msra.mxu0 %v986
        %1077 = vmatprep.subr.bf16.mxu0 0
        %1078 = vmatpush1.bf16.msra.mxu0 0
        %1079 = vmatprep.subr.bf16.mxu0 0
        %1080 = vmatpush1.bf16.msra.mxu0 0
        %1081 = vmatprep.subr.bf16.mxu0 0
        %1082 = vmatpush1.bf16.msra.mxu0 0
        %1083 = vmatprep.subr.bf16.mxu0 0
        %1084 = vmatpush1.bf16.msra.mxu0 0
        %1085 = vmatprep.subr.bf16.mxu0 0
        %1086 = vmatpush1.bf16.msra.mxu0 0
        %1087 = vmatprep.subr.bf16.mxu0 0
        %1088 = vmatpush1.bf16.msra.mxu0 0
        %1089 = vmatprep.subr.bf16.mxu0 0
        %1090 = vmatpush1.bf16.msra.mxu0 0
        %1091 = vmatprep.subr.bf16.mxu0 0
        %1092 = vmatpush1.bf16.msra.mxu0 0
        %1093 = vmatprep.mubr.bf16.mxu0 0
        %1094 = vmatmul.mubr.bf16.gmra.mrb[0].mxu0 0
        %v1095 = vpop.f32.mrb[0].mxu0
        %v1096 = vadd.f32 0.0, %v1095
        %v1097 = vpop.f32.mrb[0].mxu0
        %v1098 = vadd.f32 0.0, %v1097
        %v1099 = vpop.f32.mrb[0].mxu0
        %v1100 = vpop.f32.mrb[0].mxu0
        %1101 = vdwg.mxu0
        %v1102 = vadd.f32 %v824, %v1055
        %v1103 = vadd.f32 %v825, %v1057
        %v1104 = vadd.f32 %v826, %v1096
        %v1105 = vadd.f32 %v827, %v1098
        %v1106 = vmul.f32 %v1102, 0.5
        %v1107 = vtanh.pop %v1106
        %v1108 = vadd.f32 %v1107, 1.0
        %v1109 = vmul.f32 %v1108, 0.5
        %v1110 = vmul.f32 %v1103, 0.5
        %v1111 = vtanh.pop %v1110
        %v1112 = vadd.f32 %v1111, 1.0
        %v1113 = vmul.f32 %v1112, 0.5
        %v1114 = vtanh.pop %v1104
        %v1115 = vmul.f32 %v1105, 0.5
        %v1116 = vtanh.pop %v1115
        %v1117 = vadd.f32 %v1116, 1.0
        %v1118 = vmul.f32 %v1117, 0.5
        %v1119 = vmul.f32 %v1113, 0.0
        %v1120 = vmul.f32 %v1109, %v1114
        %v1121 = vadd.f32 %v1119, %v1120
        %v1122 = vtanh.pop %v1121
        %v1123 = vmul.f32 %v1118, %v1122
        %1124 = vst [vmem:[#allocation2] sm:$0xff] %v1123
        %v1125 = vld [vmem:[#allocation3 + $0x20] sm:$0xff]
        %v1126 = vld [vmem:[#allocation3 + $0x28] sm:$0xff]
        %v1127 = vld [vmem:[#allocation3 + $0x30] sm:$0xff]
        %v1128 = vld [vmem:[#allocation3 + $0x38] sm:$0xff]
        %v1129 = vpack.c.bf16 %v1123, %v1123
        %v1130 = vld [vmem:[%s298] sm:$0xff]
        %v1131 = vld [vmem:[%s298 + $0x8] sm:$0xff]
        %v1132 = vld [vmem:[%s298 + $0x10] sm:$0xff]
        %v1133 = vld [vmem:[%s298 + $0x18] sm:$0xff]
        %v1134 = vld [vmem:[%s298 + $0x20] sm:$0xff]
        %v1135 = vld [vmem:[%s298 + $0x28] sm:$0xff]
        %v1136 = vld [vmem:[%s298 + $0x30] sm:$0xff]
        %v1137 = vld [vmem:[%s298 + $0x38] sm:$0xff]
        %v1138 = vld [vmem:[%s298 + $0x40] sm:$0xff]
        %v1139 = vld [vmem:[%s298 + $0x48] sm:$0xff]
        %v1140 = vld [vmem:[%s298 + $0x50] sm:$0xff]
        %v1141 = vld [vmem:[%s298 + $0x58] sm:$0xff]
        %v1142 = vld [vmem:[%s298 + $0x60] sm:$0xff]
        %v1143 = vld [vmem:[%s298 + $0x68] sm:$0xff]
        %v1144 = vld [vmem:[%s298 + $0x70] sm:$0xff]
        %v1145 = vld [vmem:[%s298 + $0x78] sm:$0xff]
        %v1146 = vld [vmem:[%s298 + $0x80] sm:$0xff]
        %v1147 = vld [vmem:[%s298 + $0x88] sm:$0xff]
        %v1148 = vld [vmem:[%s298 + $0x90] sm:$0xff]
        %v1149 = vld [vmem:[%s298 + $0x98] sm:$0xff]
        %v1150 = vld [vmem:[%s298 + $0xa0] sm:$0xff]
        %v1151 = vld [vmem:[%s298 + $0xa8] sm:$0xff]
        %v1152 = vld [vmem:[%s298 + $0xb0] sm:$0xff]
        %v1153 = vld [vmem:[%s298 + $0xb8] sm:$0xff]
        %v1154 = vld [vmem:[%s298 + $0xc0] sm:$0xff]
        %v1155 = vld [vmem:[%s298 + $0xc8] sm:$0xff]
        %v1156 = vld [vmem:[%s298 + $0xd0] sm:$0xff]
        %v1157 = vld [vmem:[%s298 + $0xd8] sm:$0xff]
        %v1158 = vld [vmem:[%s298 + $0xe0] sm:$0xff]
        %v1159 = vld [vmem:[%s298 + $0xe8] sm:$0xff]
        %v1160 = vld [vmem:[%s298 + $0xf0] sm:$0xff]
        %v1161 = vld [vmem:[%s298 + $0xf8] sm:$0xff]
        %v1194 = vunpack.c.l.b16 %v1130
        %v1195 = vunpack.c.h.b16 %v1130
        %v1196 = vunpack.c.l.b16 %v1131
        %v1197 = vunpack.c.h.b16 %v1131
        %v1198 = vunpack.c.l.b16 %v1132
        %v1199 = vunpack.c.h.b16 %v1132
        %v1200 = vunpack.c.l.b16 %v1133
        %v1201 = vunpack.c.h.b16 %v1133
        %v1202 = vunpack.c.l.b16 %v1134
        %v1203 = vunpack.c.h.b16 %v1134
        %v1204 = vunpack.c.l.b16 %v1135
        %v1205 = vunpack.c.h.b16 %v1135
        %v1206 = vunpack.c.l.b16 %v1136
        %v1207 = vunpack.c.h.b16 %v1136
        %v1208 = vunpack.c.l.b16 %v1137
        %v1209 = vunpack.c.h.b16 %v1137
        %v1210 = vunpack.c.l.b16 %v1138
        %v1211 = vunpack.c.h.b16 %v1138
        %v1212 = vunpack.c.l.b16 %v1139
        %v1213 = vunpack.c.h.b16 %v1139
        %v1214 = vunpack.c.l.b16 %v1140
        %v1215 = vunpack.c.h.b16 %v1140
        %v1216 = vunpack.c.l.b16 %v1141
        %v1217 = vunpack.c.h.b16 %v1141
        %v1218 = vunpack.c.l.b16 %v1142
        %v1219 = vunpack.c.h.b16 %v1142
        %v1220 = vunpack.c.l.b16 %v1143
        %v1221 = vunpack.c.h.b16 %v1143
        %v1222 = vunpack.c.l.b16 %v1144
        %v1223 = vunpack.c.h.b16 %v1144
        %v1224 = vunpack.c.l.b16 %v1145
        %v1225 = vunpack.c.h.b16 %v1145
        %v1226 = vunpack.c.l.b16 %v1146
        %v1227 = vunpack.c.h.b16 %v1146
        %v1228 = vunpack.c.l.b16 %v1147
        %v1229 = vunpack.c.h.b16 %v1147
        %v1230 = vunpack.c.l.b16 %v1148
        %v1231 = vunpack.c.h.b16 %v1148
        %v1232 = vunpack.c.l.b16 %v1149
        %v1233 = vunpack.c.h.b16 %v1149
        %v1234 = vunpack.c.l.b16 %v1150
        %v1235 = vunpack.c.h.b16 %v1150
        %v1236 = vunpack.c.l.b16 %v1151
        %v1237 = vunpack.c.h.b16 %v1151
        %v1238 = vunpack.c.l.b16 %v1152
        %v1239 = vunpack.c.h.b16 %v1152
        %v1240 = vunpack.c.l.b16 %v1153
        %v1241 = vunpack.c.h.b16 %v1153
        %v1242 = vunpack.c.l.b16 %v1154
        %v1243 = vunpack.c.h.b16 %v1154
        %v1244 = vunpack.c.l.b16 %v1155
        %v1245 = vunpack.c.h.b16 %v1155
        %v1246 = vunpack.c.l.b16 %v1156
        %v1247 = vunpack.c.h.b16 %v1156
        %v1248 = vunpack.c.l.b16 %v1157
        %v1249 = vunpack.c.h.b16 %v1157
        %v1250 = vunpack.c.l.b16 %v1158
        %v1251 = vunpack.c.h.b16 %v1158
        %v1252 = vunpack.c.l.b16 %v1159
        %v1253 = vunpack.c.h.b16 %v1159
        %v1254 = vunpack.c.l.b16 %v1160
        %v1255 = vunpack.c.h.b16 %v1160
        %v1256 = vunpack.c.l.b16 %v1161
        %v1257 = vunpack.c.h.b16 %v1161
        %v1258 = vpack.c.b16 %v1198, %v1194
        %v1259 = vpack.c.b16 %v1199, %v1195
        %v1260 = vpack.c.b16 %v1200, %v1196
        %v1261 = vpack.c.b16 %v1201, %v1197
        %v1262 = vpack.c.b16 %v1206, %v1202
        %v1263 = vpack.c.b16 %v1207, %v1203
        %v1264 = vpack.c.b16 %v1208, %v1204
        %v1265 = vpack.c.b16 %v1209, %v1205
        %v1266 = vpack.c.b16 %v1214, %v1210
        %v1267 = vpack.c.b16 %v1215, %v1211
        %v1268 = vpack.c.b16 %v1216, %v1212
        %v1269 = vpack.c.b16 %v1217, %v1213
        %v1270 = vpack.c.b16 %v1222, %v1218
        %v1271 = vpack.c.b16 %v1223, %v1219
        %v1272 = vpack.c.b16 %v1224, %v1220
        %v1273 = vpack.c.b16 %v1225, %v1221
        %v1274 = vpack.c.b16 %v1230, %v1226
        %v1275 = vpack.c.b16 %v1231, %v1227
        %v1276 = vpack.c.b16 %v1232, %v1228
        %v1277 = vpack.c.b16 %v1233, %v1229
        %v1278 = vpack.c.b16 %v1238, %v1234
        %v1279 = vpack.c.b16 %v1239, %v1235
        %v1280 = vpack.c.b16 %v1240, %v1236
        %v1281 = vpack.c.b16 %v1241, %v1237
        %v1282 = vpack.c.b16 %v1246, %v1242
        %v1283 = vpack.c.b16 %v1247, %v1243
        %v1284 = vpack.c.b16 %v1248, %v1244
        %v1285 = vpack.c.b16 %v1249, %v1245
        %v1286 = vpack.c.b16 %v1254, %v1250
        %v1287 = vpack.c.b16 %v1255, %v1251
        %v1288 = vpack.c.b16 %v1256, %v1252
        %v1289 = vpack.c.b16 %v1257, %v1253
        %1322 = vmatprep.subr.bf16.mxu0 %v1259
        %1323 = vmatpush1.bf16.msra.mxu0 %v1258
        %1324 = vmatprep.subr.bf16.mxu0 %v1263
        %1325 = vmatpush1.bf16.msra.mxu0 %v1262
        %1326 = vmatprep.subr.bf16.mxu0 %v1267
        %1327 = vmatpush1.bf16.msra.mxu0 %v1266
        %1328 = vmatprep.subr.bf16.mxu0 %v1271
        %1329 = vmatpush1.bf16.msra.mxu0 %v1270
        %1330 = vmatprep.subr.bf16.mxu0 %v1275
        %1331 = vmatpush1.bf16.msra.mxu0 %v1274
        %1332 = vmatprep.subr.bf16.mxu0 %v1279
        %1333 = vmatpush1.bf16.msra.mxu0 %v1278
        %1334 = vmatprep.subr.bf16.mxu0 %v1283
        %1335 = vmatpush1.bf16.msra.mxu0 %v1282
        %1336 = vmatprep.subr.bf16.mxu0 %v1287
        %1337 = vmatpush1.bf16.msra.mxu0 %v1286
        %1338 = vmatprep.subr.bf16.mxu0 0
        %1339 = vmatpush1.bf16.msra.mxu0 0
        %1340 = vmatprep.subr.bf16.mxu0 0
        %1341 = vmatpush1.bf16.msra.mxu0 0
        %1342 = vmatprep.subr.bf16.mxu0 0
        %1343 = vmatpush1.bf16.msra.mxu0 0
        %1344 = vmatprep.subr.bf16.mxu0 0
        %1345 = vmatpush1.bf16.msra.mxu0 0
        %1346 = vmatprep.subr.bf16.mxu0 0
        %1347 = vmatpush1.bf16.msra.mxu0 0
        %1348 = vmatprep.subr.bf16.mxu0 0
        %1349 = vmatpush1.bf16.msra.mxu0 0
        %1350 = vmatprep.subr.bf16.mxu0 0
        %1351 = vmatpush1.bf16.msra.mxu0 0
        %1352 = vmatprep.subr.bf16.mxu0 0
        %1353 = vmatpush1.bf16.msra.mxu0 0
        %1354 = vmatprep.mubr.bf16.mxu0 0
        %1355 = vmatmul.mubr.bf16.gmra.mrb[0].mxu0 %v1129
        %v1356 = vpop.f32.mrb[0].mxu0
        %v1357 = vadd.f32 0.0, %v1356
        %v1358 = vpop.f32.mrb[0].mxu0
        %v1359 = vadd.f32 0.0, %v1358
        %v1360 = vpop.f32.mrb[0].mxu0
        %v1361 = vpop.f32.mrb[0].mxu0
        %1362 = vdwg.mxu0
        %1363 = vmatprep.subr.bf16.mxu0 %v1261
        %1364 = vmatpush1.bf16.msra.mxu0 %v1260
        %1365 = vmatprep.subr.bf16.mxu0 %v1265
        %1366 = vmatpush1.bf16.msra.mxu0 %v1264
        %1367 = vmatprep.subr.bf16.mxu0 %v1269
        %1368 = vmatpush1.bf16.msra.mxu0 %v1268
        %1369 = vmatprep.subr.bf16.mxu0 %v1273
        %1370 = vmatpush1.bf16.msra.mxu0 %v1272
        %1371 = vmatprep.subr.bf16.mxu0 %v1277
        %1372 = vmatpush1.bf16.msra.mxu0 %v1276
        %1373 = vmatprep.subr.bf16.mxu0 %v1281
        %1374 = vmatpush1.bf16.msra.mxu0 %v1280
        %1375 = vmatprep.subr.bf16.mxu0 %v1285
        %1376 = vmatpush1.bf16.msra.mxu0 %v1284
        %1377 = vmatprep.subr.bf16.mxu0 %v1289
        %1378 = vmatpush1.bf16.msra.mxu0 %v1288
        %1379 = vmatprep.subr.bf16.mxu0 0
        %1380 = vmatpush1.bf16.msra.mxu0 0
        %1381 = vmatprep.subr.bf16.mxu0 0
        %1382 = vmatpush1.bf16.msra.mxu0 0
        %1383 = vmatprep.subr.bf16.mxu0 0
        %1384 = vmatpush1.bf16.msra.mxu0 0
        %1385 = vmatprep.subr.bf16.mxu0 0
        %1386 = vmatpush1.bf16.msra.mxu0 0
        %1387 = vmatprep.subr.bf16.mxu0 0
        %1388 = vmatpush1.bf16.msra.mxu0 0
        %1389 = vmatprep.subr.bf16.mxu0 0
        %1390 = vmatpush1.bf16.msra.mxu0 0
        %1391 = vmatprep.subr.bf16.mxu0 0
        %1392 = vmatpush1.bf16.msra.mxu0 0
        %1393 = vmatprep.subr.bf16.mxu0 0
        %1394 = vmatpush1.bf16.msra.mxu0 0
        %1395 = vmatprep.mubr.bf16.mxu0 0
        %1396 = vmatmul.mubr.bf16.gmra.mrb[0].mxu0 %v1129
        %v1397 = vpop.f32.mrb[0].mxu0
        %v1398 = vadd.f32 0.0, %v1397
        %v1399 = vpop.f32.mrb[0].mxu0
        %v1400 = vadd.f32 0.0, %v1399
        %v1401 = vpop.f32.mrb[0].mxu0
        %v1402 = vpop.f32.mrb[0].mxu0
        %1403 = vdwg.mxu0
        %v1404 = vadd.f32 %v1125, %v1357
        %v1405 = vadd.f32 %v1126, %v1359
        %v1406 = vadd.f32 %v1127, %v1398
        %v1407 = vadd.f32 %v1128, %v1400
        %v1408 = vmul.f32 %v1404, 0.5
        %v1409 = vtanh.pop %v1408
        %v1410 = vadd.f32 %v1409, 1.0
        %v1411 = vmul.f32 %v1410, 0.5
        %v1412 = vmul.f32 %v1405, 0.5
        %v1413 = vtanh.pop %v1412
        %v1414 = vadd.f32 %v1413, 1.0
        %v1415 = vmul.f32 %v1414, 0.5
        %v1416 = vtanh.pop %v1406
        %v1417 = vmul.f32 %v1407, 0.5
        %v1418 = vtanh.pop %v1417
        %v1419 = vadd.f32 %v1418, 1.0
        %v1420 = vmul.f32 %v1419, 0.5
        %v1421 = vmul.f32 %v1415, %v1121
        %v1422 = vmul.f32 %v1411, %v1416
        %v1423 = vadd.f32 %v1421, %v1422
        %v1424 = vtanh.pop %v1423
        %v1425 = vmul.f32 %v1420, %v1424
        %1426 = vst [vmem:[#allocation2 + $0x8] sm:$0xff] %v1425
        %v1427 = vld [vmem:[#allocation3 + $0x40] sm:$0xff]
        %v1428 = vld [vmem:[#allocation3 + $0x48] sm:$0xff]
        %v1429 = vld [vmem:[#allocation3 + $0x50] sm:$0xff]
        %v1430 = vld [vmem:[#allocation3 + $0x58] sm:$0xff]
        %v1431 = vpack.c.bf16 %v1425, %v1425
        %v1432 = vld [vmem:[%s298] sm:$0xff]
        %v1433 = vld [vmem:[%s298 + $0x8] sm:$0xff]
        %v1434 = vld [vmem:[%s298 + $0x10] sm:$0xff]
        %v1435 = vld [vmem:[%s298 + $0x18] sm:$0xff]
        %v1436 = vld [vmem:[%s298 + $0x20] sm:$0xff]
        %v1437 = vld [vmem:[%s298 + $0x28] sm:$0xff]
        %v1438 = vld [vmem:[%s298 + $0x30] sm:$0xff]
        %v1439 = vld [vmem:[%s298 + $0x38] sm:$0xff]
        %v1440 = vld [vmem:[%s298 + $0x40] sm:$0xff]
        %v1441 = vld [vmem:[%s298 + $0x48] sm:$0xff]
        %v1442 = vld [vmem:[%s298 + $0x50] sm:$0xff]
        %v1443 = vld [vmem:[%s298 + $0x58] sm:$0xff]
        %v1444 = vld [vmem:[%s298 + $0x60] sm:$0xff]
        %v1445 = vld [vmem:[%s298 + $0x68] sm:$0xff]
        %v1446 = vld [vmem:[%s298 + $0x70] sm:$0xff]
        %v1447 = vld [vmem:[%s298 + $0x78] sm:$0xff]
        %v1448 = vld [vmem:[%s298 + $0x80] sm:$0xff]
        %v1449 = vld [vmem:[%s298 + $0x88] sm:$0xff]
        %v1450 = vld [vmem:[%s298 + $0x90] sm:$0xff]
        %v1451 = vld [vmem:[%s298 + $0x98] sm:$0xff]
        %v1452 = vld [vmem:[%s298 + $0xa0] sm:$0xff]
        %v1453 = vld [vmem:[%s298 + $0xa8] sm:$0xff]
        %v1454 = vld [vmem:[%s298 + $0xb0] sm:$0xff]
        %v1455 = vld [vmem:[%s298 + $0xb8] sm:$0xff]
        %v1456 = vld [vmem:[%s298 + $0xc0] sm:$0xff]
        %v1457 = vld [vmem:[%s298 + $0xc8] sm:$0xff]
        %v1458 = vld [vmem:[%s298 + $0xd0] sm:$0xff]
        %v1459 = vld [vmem:[%s298 + $0xd8] sm:$0xff]
        %v1460 = vld [vmem:[%s298 + $0xe0] sm:$0xff]
        %v1461 = vld [vmem:[%s298 + $0xe8] sm:$0xff]
        %v1462 = vld [vmem:[%s298 + $0xf0] sm:$0xff]
        %v1463 = vld [vmem:[%s298 + $0xf8] sm:$0xff]
        %v1496 = vunpack.c.l.b16 %v1432
        %v1497 = vunpack.c.h.b16 %v1432
        %v1498 = vunpack.c.l.b16 %v1433
        %v1499 = vunpack.c.h.b16 %v1433
        %v1500 = vunpack.c.l.b16 %v1434
        %v1501 = vunpack.c.h.b16 %v1434
        %v1502 = vunpack.c.l.b16 %v1435
        %v1503 = vunpack.c.h.b16 %v1435
        %v1504 = vunpack.c.l.b16 %v1436
        %v1505 = vunpack.c.h.b16 %v1436
        %v1506 = vunpack.c.l.b16 %v1437
        %v1507 = vunpack.c.h.b16 %v1437
        %v1508 = vunpack.c.l.b16 %v1438
        %v1509 = vunpack.c.h.b16 %v1438
        %v1510 = vunpack.c.l.b16 %v1439
        %v1511 = vunpack.c.h.b16 %v1439
        %v1512 = vunpack.c.l.b16 %v1440
        %v1513 = vunpack.c.h.b16 %v1440
        %v1514 = vunpack.c.l.b16 %v1441
        %v1515 = vunpack.c.h.b16 %v1441
        %v1516 = vunpack.c.l.b16 %v1442
        %v1517 = vunpack.c.h.b16 %v1442
        %v1518 = vunpack.c.l.b16 %v1443
        %v1519 = vunpack.c.h.b16 %v1443
        %v1520 = vunpack.c.l.b16 %v1444
        %v1521 = vunpack.c.h.b16 %v1444
        %v1522 = vunpack.c.l.b16 %v1445
        %v1523 = vunpack.c.h.b16 %v1445
        %v1524 = vunpack.c.l.b16 %v1446
        %v1525 = vunpack.c.h.b16 %v1446
        %v1526 = vunpack.c.l.b16 %v1447
        %v1527 = vunpack.c.h.b16 %v1447
        %v1528 = vunpack.c.l.b16 %v1448
        %v1529 = vunpack.c.h.b16 %v1448
        %v1530 = vunpack.c.l.b16 %v1449
        %v1531 = vunpack.c.h.b16 %v1449
        %v1532 = vunpack.c.l.b16 %v1450
        %v1533 = vunpack.c.h.b16 %v1450
        %v1534 = vunpack.c.l.b16 %v1451
        %v1535 = vunpack.c.h.b16 %v1451
        %v1536 = vunpack.c.l.b16 %v1452
        %v1537 = vunpack.c.h.b16 %v1452
        %v1538 = vunpack.c.l.b16 %v1453
        %v1539 = vunpack.c.h.b16 %v1453
        %v1540 = vunpack.c.l.b16 %v1454
        %v1541 = vunpack.c.h.b16 %v1454
        %v1542 = vunpack.c.l.b16 %v1455
        %v1543 = vunpack.c.h.b16 %v1455
        %v1544 = vunpack.c.l.b16 %v1456
        %v1545 = vunpack.c.h.b16 %v1456
        %v1546 = vunpack.c.l.b16 %v1457
        %v1547 = vunpack.c.h.b16 %v1457
        %v1548 = vunpack.c.l.b16 %v1458
        %v1549 = vunpack.c.h.b16 %v1458
        %v1550 = vunpack.c.l.b16 %v1459
        %v1551 = vunpack.c.h.b16 %v1459
        %v1552 = vunpack.c.l.b16 %v1460
        %v1553 = vunpack.c.h.b16 %v1460
        %v1554 = vunpack.c.l.b16 %v1461
        %v1555 = vunpack.c.h.b16 %v1461
        %v1556 = vunpack.c.l.b16 %v1462
        %v1557 = vunpack.c.h.b16 %v1462
        %v1558 = vunpack.c.l.b16 %v1463
        %v1559 = vunpack.c.h.b16 %v1463
        %v1560 = vpack.c.b16 %v1500, %v1496
        %v1561 = vpack.c.b16 %v1501, %v1497
        %v1562 = vpack.c.b16 %v1502, %v1498
        %v1563 = vpack.c.b16 %v1503, %v1499
        %v1564 = vpack.c.b16 %v1508, %v1504
        %v1565 = vpack.c.b16 %v1509, %v1505
        %v1566 = vpack.c.b16 %v1510, %v1506
        %v1567 = vpack.c.b16 %v1511, %v1507
        %v1568 = vpack.c.b16 %v1516, %v1512
        %v1569 = vpack.c.b16 %v1517, %v1513
        %v1570 = vpack.c.b16 %v1518, %v1514
        %v1571 = vpack.c.b16 %v1519, %v1515
        %v1572 = vpack.c.b16 %v1524, %v1520
        %v1573 = vpack.c.b16 %v1525, %v1521
        %v1574 = vpack.c.b16 %v1526, %v1522
        %v1575 = vpack.c.b16 %v1527, %v1523
        %v1576 = vpack.c.b16 %v1532, %v1528
        %v1577 = vpack.c.b16 %v1533, %v1529
        %v1578 = vpack.c.b16 %v1534, %v1530
        %v1579 = vpack.c.b16 %v1535, %v1531
        %v1580 = vpack.c.b16 %v1540, %v1536
        %v1581 = vpack.c.b16 %v1541, %v1537
        %v1582 = vpack.c.b16 %v1542, %v1538
        %v1583 = vpack.c.b16 %v1543, %v1539
        %v1584 = vpack.c.b16 %v1548, %v1544
        %v1585 = vpack.c.b16 %v1549, %v1545
        %v1586 = vpack.c.b16 %v1550, %v1546
        %v1587 = vpack.c.b16 %v1551, %v1547
        %v1588 = vpack.c.b16 %v1556, %v1552
        %v1589 = vpack.c.b16 %v1557, %v1553
        %v1590 = vpack.c.b16 %v1558, %v1554
        %v1591 = vpack.c.b16 %v1559, %v1555
        %1624 = vmatprep.subr.bf16.mxu0 %v1561
        %1625 = vmatpush1.bf16.msra.mxu0 %v1560
        %1626 = vmatprep.subr.bf16.mxu0 %v1565
        %1627 = vmatpush1.bf16.msra.mxu0 %v1564
        %1628 = vmatprep.subr.bf16.mxu0 %v1569
        %1629 = vmatpush1.bf16.msra.mxu0 %v1568
        %1630 = vmatprep.subr.bf16.mxu0 %v1573
        %1631 = vmatpush1.bf16.msra.mxu0 %v1572
        %1632 = vmatprep.subr.bf16.mxu0 %v1577
        %1633 = vmatpush1.bf16.msra.mxu0 %v1576
        %1634 = vmatprep.subr.bf16.mxu0 %v1581
        %1635 = vmatpush1.bf16.msra.mxu0 %v1580
        %1636 = vmatprep.subr.bf16.mxu0 %v1585
        %1637 = vmatpush1.bf16.msra.mxu0 %v1584
        %1638 = vmatprep.subr.bf16.mxu0 %v1589
        %1639 = vmatpush1.bf16.msra.mxu0 %v1588
        %1640 = vmatprep.subr.bf16.mxu0 0
        %1641 = vmatpush1.bf16.msra.mxu0 0
        %1642 = vmatprep.subr.bf16.mxu0 0
        %1643 = vmatpush1.bf16.msra.mxu0 0
        %1644 = vmatprep.subr.bf16.mxu0 0
        %1645 = vmatpush1.bf16.msra.mxu0 0
        %1646 = vmatprep.subr.bf16.mxu0 0
        %1647 = vmatpush1.bf16.msra.mxu0 0
        %1648 = vmatprep.subr.bf16.mxu0 0
        %1649 = vmatpush1.bf16.msra.mxu0 0
        %1650 = vmatprep.subr.bf16.mxu0 0
        %1651 = vmatpush1.bf16.msra.mxu0 0
        %1652 = vmatprep.subr.bf16.mxu0 0
        %1653 = vmatpush1.bf16.msra.mxu0 0
        %1654 = vmatprep.subr.bf16.mxu0 0
        %1655 = vmatpush1.bf16.msra.mxu0 0
        %1656 = vmatprep.mubr.bf16.mxu0 0
        %1657 = vmatmul.mubr.bf16.gmra.mrb[0].mxu0 %v1431
        %v1658 = vpop.f32.mrb[0].mxu0
        %v1659 = vadd.f32 0.0, %v1658
        %v1660 = vpop.f32.mrb[0].mxu0
        %v1661 = vadd.f32 0.0, %v1660
        %v1662 = vpop.f32.mrb[0].mxu0
        %v1663 = vpop.f32.mrb[0].mxu0
        %1664 = vdwg.mxu0
        %1665 = vmatprep.subr.bf16.mxu0 %v1563
        %1666 = vmatpush1.bf16.msra.mxu0 %v1562
        %1667 = vmatprep.subr.bf16.mxu0 %v1567
        %1668 = vmatpush1.bf16.msra.mxu0 %v1566
        %1669 = vmatprep.subr.bf16.mxu0 %v1571
        %1670 = vmatpush1.bf16.msra.mxu0 %v1570
        %1671 = vmatprep.subr.bf16.mxu0 %v1575
        %1672 = vmatpush1.bf16.msra.mxu0 %v1574
        %1673 = vmatprep.subr.bf16.mxu0 %v1579
        %1674 = vmatpush1.bf16.msra.mxu0 %v1578
        %1675 = vmatprep.subr.bf16.mxu0 %v1583
        %1676 = vmatpush1.bf16.msra.mxu0 %v1582
        %1677 = vmatprep.subr.bf16.mxu0 %v1587
        %1678 = vmatpush1.bf16.msra.mxu0 %v1586
        %1679 = vmatprep.subr.bf16.mxu0 %v1591
        %1680 = vmatpush1.bf16.msra.mxu0 %v1590
        %1681 = vmatprep.subr.bf16.mxu0 0
        %1682 = vmatpush1.bf16.msra.mxu0 0
        %1683 = vmatprep.subr.bf16.mxu0 0
        %1684 = vmatpush1.bf16.msra.mxu0 0
        %1685 = vmatprep.subr.bf16.mxu0 0
        %1686 = vmatpush1.bf16.msra.mxu0 0
        %1687 = vmatprep.subr.bf16.mxu0 0
        %1688 = vmatpush1.bf16.msra.mxu0 0
        %1689 = vmatprep.subr.bf16.mxu0 0
        %1690 = vmatpush1.bf16.msra.mxu0 0
        %1691 = vmatprep.subr.bf16.mxu0 0
        %1692 = vmatpush1.bf16.msra.mxu0 0
        %1693 = vmatprep.subr.bf16.mxu0 0
        %1694 = vmatpush1.bf16.msra.mxu0 0
        %1695 = vmatprep.subr.bf16.mxu0 0
        %1696 = vmatpush1.bf16.msra.mxu0 0
        %1697 = vmatprep.mubr.bf16.mxu0 0
        %1698 = vmatmul.mubr.bf16.gmra.mrb[0].mxu0 %v1431
        %v1699 = vpop.f32.mrb[0].mxu0
        %v1700 = vadd.f32 0.0, %v1699
        %v1701 = vpop.f32.mrb[0].mxu0
        %v1702 = vadd.f32 0.0, %v1701
        %v1703 = vpop.f32.mrb[0].mxu0
        %v1704 = vpop.f32.mrb[0].mxu0
        %1705 = vdwg.mxu0
        %v1706 = vadd.f32 %v1427, %v1659
        %v1707 = vadd.f32 %v1428, %v1661
        %v1708 = vadd.f32 %v1429, %v1700
        %v1709 = vadd.f32 %v1430, %v1702
        %v1710 = vmul.f32 %v1706, 0.5
        %v1711 = vtanh.pop %v1710
        %v1712 = vadd.f32 %v1711, 1.0
        %v1713 = vmul.f32 %v1712, 0.5
        %v1714 = vmul.f32 %v1707, 0.5
        %v1715 = vtanh.pop %v1714
        %v1716 = vadd.f32 %v1715, 1.0
        %v1717 = vmul.f32 %v1716, 0.5
        %v1718 = vtanh.pop %v1708
        %v1719 = vmul.f32 %v1709, 0.5
        %v1720 = vtanh.pop %v1719
        %v1721 = vadd.f32 %v1720, 1.0
        %v1722 = vmul.f32 %v1721, 0.5
        %v1723 = vmul.f32 %v1717, %v1423
        %v1724 = vmul.f32 %v1713, %v1718
        %v1725 = vadd.f32 %v1723, %v1724
        %v1726 = vtanh.pop %v1725
        %v1727 = vmul.f32 %v1722, %v1726
        %1728 = vst [vmem:[#allocation2 + $0x10] sm:$0xff] %v1727
        %v1729 = vld [vmem:[#allocation3 + $0x60] sm:$0xff]
        %v1730 = vld [vmem:[#allocation3 + $0x68] sm:$0xff]
        %v1731 = vld [vmem:[#allocation3 + $0x70] sm:$0xff]
        %v1732 = vld [vmem:[#allocation3 + $0x78] sm:$0xff]
        %v1733 = vpack.c.bf16 %v1727, %v1727
        %v1734 = vld [vmem:[%s298] sm:$0xff]
        %v1735 = vld [vmem:[%s298 + $0x8] sm:$0xff]
        %v1736 = vld [vmem:[%s298 + $0x10] sm:$0xff]
        %v1737 = vld [vmem:[%s298 + $0x18] sm:$0xff]
        %v1738 = vld [vmem:[%s298 + $0x20] sm:$0xff]
        %v1739 = vld [vmem:[%s298 + $0x28] sm:$0xff]
        %v1740 = vld [vmem:[%s298 + $0x30] sm:$0xff]
        %v1741 = vld [vmem:[%s298 + $0x38] sm:$0xff]
        %v1742 = vld [vmem:[%s298 + $0x40] sm:$0xff]
        %v1743 = vld [vmem:[%s298 + $0x48] sm:$0xff]
        %v1744 = vld [vmem:[%s298 + $0x50] sm:$0xff]
        %v1745 = vld [vmem:[%s298 + $0x58] sm:$0xff]
        %v1746 = vld [vmem:[%s298 + $0x60] sm:$0xff]
        %v1747 = vld [vmem:[%s298 + $0x68] sm:$0xff]
        %v1748 = vld [vmem:[%s298 + $0x70] sm:$0xff]
        %v1749 = vld [vmem:[%s298 + $0x78] sm:$0xff]
        %v1750 = vld [vmem:[%s298 + $0x80] sm:$0xff]
        %v1751 = vld [vmem:[%s298 + $0x88] sm:$0xff]
        %v1752 = vld [vmem:[%s298 + $0x90] sm:$0xff]
        %v1753 = vld [vmem:[%s298 + $0x98] sm:$0xff]
        %v1754 = vld [vmem:[%s298 + $0xa0] sm:$0xff]
        %v1755 = vld [vmem:[%s298 + $0xa8] sm:$0xff]
        %v1756 = vld [vmem:[%s298 + $0xb0] sm:$0xff]
        %v1757 = vld [vmem:[%s298 + $0xb8] sm:$0xff]
        %v1758 = vld [vmem:[%s298 + $0xc0] sm:$0xff]
        %v1759 = vld [vmem:[%s298 + $0xc8] sm:$0xff]
        %v1760 = vld [vmem:[%s298 + $0xd0] sm:$0xff]
        %v1761 = vld [vmem:[%s298 + $0xd8] sm:$0xff]
        %v1762 = vld [vmem:[%s298 + $0xe0] sm:$0xff]
        %v1763 = vld [vmem:[%s298 + $0xe8] sm:$0xff]
        %v1764 = vld [vmem:[%s298 + $0xf0] sm:$0xff]
        %v1765 = vld [vmem:[%s298 + $0xf8] sm:$0xff]
        %v1798 = vunpack.c.l.b16 %v1734
        %v1799 = vunpack.c.h.b16 %v1734
        %v1800 = vunpack.c.l.b16 %v1735
        %v1801 = vunpack.c.h.b16 %v1735
        %v1802 = vunpack.c.l.b16 %v1736
        %v1803 = vunpack.c.h.b16 %v1736
        %v1804 = vunpack.c.l.b16 %v1737
        %v1805 = vunpack.c.h.b16 %v1737
        %v1806 = vunpack.c.l.b16 %v1738
        %v1807 = vunpack.c.h.b16 %v1738
        %v1808 = vunpack.c.l.b16 %v1739
        %v1809 = vunpack.c.h.b16 %v1739
        %v1810 = vunpack.c.l.b16 %v1740
        %v1811 = vunpack.c.h.b16 %v1740
        %v1812 = vunpack.c.l.b16 %v1741
        %v1813 = vunpack.c.h.b16 %v1741
        %v1814 = vunpack.c.l.b16 %v1742
        %v1815 = vunpack.c.h.b16 %v1742
        %v1816 = vunpack.c.l.b16 %v1743
        %v1817 = vunpack.c.h.b16 %v1743
        %v1818 = vunpack.c.l.b16 %v1744
        %v1819 = vunpack.c.h.b16 %v1744
        %v1820 = vunpack.c.l.b16 %v1745
        %v1821 = vunpack.c.h.b16 %v1745
        %v1822 = vunpack.c.l.b16 %v1746
        %v1823 = vunpack.c.h.b16 %v1746
        %v1824 = vunpack.c.l.b16 %v1747
        %v1825 = vunpack.c.h.b16 %v1747
        %v1826 = vunpack.c.l.b16 %v1748
        %v1827 = vunpack.c.h.b16 %v1748
        %v1828 = vunpack.c.l.b16 %v1749
        %v1829 = vunpack.c.h.b16 %v1749
        %v1830 = vunpack.c.l.b16 %v1750
        %v1831 = vunpack.c.h.b16 %v1750
        %v1832 = vunpack.c.l.b16 %v1751
        %v1833 = vunpack.c.h.b16 %v1751
        %v1834 = vunpack.c.l.b16 %v1752
        %v1835 = vunpack.c.h.b16 %v1752
        %v1836 = vunpack.c.l.b16 %v1753
        %v1837 = vunpack.c.h.b16 %v1753
        %v1838 = vunpack.c.l.b16 %v1754
        %v1839 = vunpack.c.h.b16 %v1754
        %v1840 = vunpack.c.l.b16 %v1755
        %v1841 = vunpack.c.h.b16 %v1755
        %v1842 = vunpack.c.l.b16 %v1756
        %v1843 = vunpack.c.h.b16 %v1756
        %v1844 = vunpack.c.l.b16 %v1757
        %v1845 = vunpack.c.h.b16 %v1757
        %v1846 = vunpack.c.l.b16 %v1758
        %v1847 = vunpack.c.h.b16 %v1758
        %v1848 = vunpack.c.l.b16 %v1759
        %v1849 = vunpack.c.h.b16 %v1759
        %v1850 = vunpack.c.l.b16 %v1760
        %v1851 = vunpack.c.h.b16 %v1760
        %v1852 = vunpack.c.l.b16 %v1761
        %v1853 = vunpack.c.h.b16 %v1761
        %v1854 = vunpack.c.l.b16 %v1762
        %v1855 = vunpack.c.h.b16 %v1762
        %v1856 = vunpack.c.l.b16 %v1763
        %v1857 = vunpack.c.h.b16 %v1763
        %v1858 = vunpack.c.l.b16 %v1764
        %v1859 = vunpack.c.h.b16 %v1764
        %v1860 = vunpack.c.l.b16 %v1765
        %v1861 = vunpack.c.h.b16 %v1765
        %v1862 = vpack.c.b16 %v1802, %v1798
        %v1863 = vpack.c.b16 %v1803, %v1799
        %v1864 = vpack.c.b16 %v1804, %v1800
        %v1865 = vpack.c.b16 %v1805, %v1801
        %v1866 = vpack.c.b16 %v1810, %v1806
        %v1867 = vpack.c.b16 %v1811, %v1807
        %v1868 = vpack.c.b16 %v1812, %v1808
        %v1869 = vpack.c.b16 %v1813, %v1809
        %v1870 = vpack.c.b16 %v1818, %v1814
        %v1871 = vpack.c.b16 %v1819, %v1815
        %v1872 = vpack.c.b16 %v1820, %v1816
        %v1873 = vpack.c.b16 %v1821, %v1817
        %v1874 = vpack.c.b16 %v1826, %v1822
        %v1875 = vpack.c.b16 %v1827, %v1823
        %v1876 = vpack.c.b16 %v1828, %v1824
        %v1877 = vpack.c.b16 %v1829, %v1825
        %v1878 = vpack.c.b16 %v1834, %v1830
        %v1879 = vpack.c.b16 %v1835, %v1831
        %v1880 = vpack.c.b16 %v1836, %v1832
        %v1881 = vpack.c.b16 %v1837, %v1833
        %v1882 = vpack.c.b16 %v1842, %v1838
        %v1883 = vpack.c.b16 %v1843, %v1839
        %v1884 = vpack.c.b16 %v1844, %v1840
        %v1885 = vpack.c.b16 %v1845, %v1841
        %v1886 = vpack.c.b16 %v1850, %v1846
        %v1887 = vpack.c.b16 %v1851, %v1847
        %v1888 = vpack.c.b16 %v1852, %v1848
        %v1889 = vpack.c.b16 %v1853, %v1849
        %v1890 = vpack.c.b16 %v1858, %v1854
        %v1891 = vpack.c.b16 %v1859, %v1855
        %v1892 = vpack.c.b16 %v1860, %v1856
        %v1893 = vpack.c.b16 %v1861, %v1857
        %1926 = vmatprep.subr.bf16.mxu0 %v1863
        %1927 = vmatpush1.bf16.msra.mxu0 %v1862
        %1928 = vmatprep.subr.bf16.mxu0 %v1867
        %1929 = vmatpush1.bf16.msra.mxu0 %v1866
        %1930 = vmatprep.subr.bf16.mxu0 %v1871
        %1931 = vmatpush1.bf16.msra.mxu0 %v1870
        %1932 = vmatprep.subr.bf16.mxu0 %v1875
        %1933 = vmatpush1.bf16.msra.mxu0 %v1874
        %1934 = vmatprep.subr.bf16.mxu0 %v1879
        %1935 = vmatpush1.bf16.msra.mxu0 %v1878
        %1936 = vmatprep.subr.bf16.mxu0 %v1883
        %1937 = vmatpush1.bf16.msra.mxu0 %v1882
        %1938 = vmatprep.subr.bf16.mxu0 %v1887
        %1939 = vmatpush1.bf16.msra.mxu0 %v1886
        %1940 = vmatprep.subr.bf16.mxu0 %v1891
        %1941 = vmatpush1.bf16.msra.mxu0 %v1890
        %1942 = vmatprep.subr.bf16.mxu0 0
        %1943 = vmatpush1.bf16.msra.mxu0 0
        %1944 = vmatprep.subr.bf16.mxu0 0
        %1945 = vmatpush1.bf16.msra.mxu0 0
        %1946 = vmatprep.subr.bf16.mxu0 0
        %1947 = vmatpush1.bf16.msra.mxu0 0
        %1948 = vmatprep.subr.bf16.mxu0 0
        %1949 = vmatpush1.bf16.msra.mxu0 0
        %1950 = vmatprep.subr.bf16.mxu0 0
        %1951 = vmatpush1.bf16.msra.mxu0 0
        %1952 = vmatprep.subr.bf16.mxu0 0
        %1953 = vmatpush1.bf16.msra.mxu0 0
        %1954 = vmatprep.subr.bf16.mxu0 0
        %1955 = vmatpush1.bf16.msra.mxu0 0
        %1956 = vmatprep.subr.bf16.mxu0 0
        %1957 = vmatpush1.bf16.msra.mxu0 0
        %1958 = vmatprep.mubr.bf16.mxu0 0
        %1959 = vmatmul.mubr.bf16.gmra.mrb[0].mxu0 %v1733
        %v1960 = vpop.f32.mrb[0].mxu0
        %v1961 = vadd.f32 0.0, %v1960
        %v1962 = vpop.f32.mrb[0].mxu0
        %v1963 = vadd.f32 0.0, %v1962
        %v1964 = vpop.f32.mrb[0].mxu0
        %v1965 = vpop.f32.mrb[0].mxu0
        %1966 = vdwg.mxu0
        %1967 = vmatprep.subr.bf16.mxu0 %v1865
        %1968 = vmatpush1.bf16.msra.mxu0 %v1864
        %1969 = vmatprep.subr.bf16.mxu0 %v1869
        %1970 = vmatpush1.bf16.msra.mxu0 %v1868
        %1971 = vmatprep.subr.bf16.mxu0 %v1873
        %1972 = vmatpush1.bf16.msra.mxu0 %v1872
        %1973 = vmatprep.subr.bf16.mxu0 %v1877
        %1974 = vmatpush1.bf16.msra.mxu0 %v1876
        %1975 = vmatprep.subr.bf16.mxu0 %v1881
        %1976 = vmatpush1.bf16.msra.mxu0 %v1880
        %1977 = vmatprep.subr.bf16.mxu0 %v1885
        %1978 = vmatpush1.bf16.msra.mxu0 %v1884
        %1979 = vmatprep.subr.bf16.mxu0 %v1889
        %1980 = vmatpush1.bf16.msra.mxu0 %v1888
        %1981 = vmatprep.subr.bf16.mxu0 %v1893
        %1982 = vmatpush1.bf16.msra.mxu0 %v1892
        %1983 = vmatprep.subr.bf16.mxu0 0
        %1984 = vmatpush1.bf16.msra.mxu0 0
        %1985 = vmatprep.subr.bf16.mxu0 0
        %1986 = vmatpush1.bf16.msra.mxu0 0
        %1987 = vmatprep.subr.bf16.mxu0 0
        %1988 = vmatpush1.bf16.msra.mxu0 0
        %1989 = vmatprep.subr.bf16.mxu0 0
        %1990 = vmatpush1.bf16.msra.mxu0 0
        %1991 = vmatprep.subr.bf16.mxu0 0
        %1992 = vmatpush1.bf16.msra.mxu0 0
        %1993 = vmatprep.subr.bf16.mxu0 0
        %1994 = vmatpush1.bf16.msra.mxu0 0
        %1995 = vmatprep.subr.bf16.mxu0 0
        %1996 = vmatpush1.bf16.msra.mxu0 0
        %1997 = vmatprep.subr.bf16.mxu0 0
        %1998 = vmatpush1.bf16.msra.mxu0 0
        %1999 = vmatprep.mubr.bf16.mxu0 0
        %2000 = vmatmul.mubr.bf16.gmra.mrb[0].mxu0 %v1733
        %v2001 = vpop.f32.mrb[0].mxu0
        %v2002 = vadd.f32 0.0, %v2001
        %v2003 = vpop.f32.mrb[0].mxu0
        %v2004 = vadd.f32 0.0, %v2003
        %v2005 = vpop.f32.mrb[0].mxu0
        %v2006 = vpop.f32.mrb[0].mxu0
        %2007 = vdwg.mxu0
        %v2008 = vadd.f32 %v1729, %v1961
        %v2009 = vadd.f32 %v1730, %v1963
        %v2010 = vadd.f32 %v1731, %v2002
        %v2011 = vadd.f32 %v1732, %v2004
        %v2012 = vmul.f32 %v2008, 0.5
        %v2013 = vtanh.pop %v2012
        %v2014 = vadd.f32 %v2013, 1.0
        %v2015 = vmul.f32 %v2014, 0.5
        %v2016 = vmul.f32 %v2009, 0.5
        %v2017 = vtanh.pop %v2016
        %v2018 = vadd.f32 %v2017, 1.0
        %v2019 = vmul.f32 %v2018, 0.5
        %v2020 = vtanh.pop %v2010
        %v2021 = vmul.f32 %v2011, 0.5
        %v2022 = vtanh.pop %v2021
        %v2023 = vadd.f32 %v2022, 1.0
        %v2024 = vmul.f32 %v2023, 0.5
        %v2025 = vmul.f32 %v2019, %v1725
        %v2026 = vmul.f32 %v2015, %v2020
        %v2027 = vadd.f32 %v2025, %v2026
        %v2028 = vtanh.pop %v2027
        %v2029 = vmul.f32 %v2024, %v2028
        %2030 = vst [vmem:[#allocation2 + $0x18] sm:$0xff] %v2029
        %v2031 = vld [vmem:[#allocation3 + $0x80] sm:$0xff]
        %v2032 = vld [vmem:[#allocation3 + $0x88] sm:$0xff]
        %v2033 = vld [vmem:[#allocation3 + $0x90] sm:$0xff]
        %v2034 = vld [vmem:[#allocation3 + $0x98] sm:$0xff]
        %v2035 = vpack.c.bf16 %v2029, %v2029
        %v2036 = vld [vmem:[%s298] sm:$0xff]
        %v2037 = vld [vmem:[%s298 + $0x8] sm:$0xff]
        %v2038 = vld [vmem:[%s298 + $0x10] sm:$0xff]
        %v2039 = vld [vmem:[%s298 + $0x18] sm:$0xff]
        %v2040 = vld [vmem:[%s298 + $0x20] sm:$0xff]
        %v2041 = vld [vmem:[%s298 + $0x28] sm:$0xff]
        %v2042 = vld [vmem:[%s298 + $0x30] sm:$0xff]
        %v2043 = vld [vmem:[%s298 + $0x38] sm:$0xff]
        %v2044 = vld [vmem:[%s298 + $0x40] sm:$0xff]
        %v2045 = vld [vmem:[%s298 + $0x48] sm:$0xff]
        %v2046 = vld [vmem:[%s298 + $0x50] sm:$0xff]
        %v2047 = vld [vmem:[%s298 + $0x58] sm:$0xff]
        %v2048 = vld [vmem:[%s298 + $0x60] sm:$0xff]
        %v2049 = vld [vmem:[%s298 + $0x68] sm:$0xff]
        %v2050 = vld [vmem:[%s298 + $0x70] sm:$0xff]
        %v2051 = vld [vmem:[%s298 + $0x78] sm:$0xff]
        %v2052 = vld [vmem:[%s298 + $0x80] sm:$0xff]
        %v2053 = vld [vmem:[%s298 + $0x88] sm:$0xff]
        %v2054 = vld [vmem:[%s298 + $0x90] sm:$0xff]
        %v2055 = vld [vmem:[%s298 + $0x98] sm:$0xff]
        %v2056 = vld [vmem:[%s298 + $0xa0] sm:$0xff]
        %v2057 = vld [vmem:[%s298 + $0xa8] sm:$0xff]
        %v2058 = vld [vmem:[%s298 + $0xb0] sm:$0xff]
        %v2059 = vld [vmem:[%s298 + $0xb8] sm:$0xff]
        %v2060 = vld [vmem:[%s298 + $0xc0] sm:$0xff]
        %v2061 = vld [vmem:[%s298 + $0xc8] sm:$0xff]
        %v2062 = vld [vmem:[%s298 + $0xd0] sm:$0xff]
        %v2063 = vld [vmem:[%s298 + $0xd8] sm:$0xff]
        %v2064 = vld [vmem:[%s298 + $0xe0] sm:$0xff]
        %v2065 = vld [vmem:[%s298 + $0xe8] sm:$0xff]
        %v2066 = vld [vmem:[%s298 + $0xf0] sm:$0xff]
        %v2067 = vld [vmem:[%s298 + $0xf8] sm:$0xff]
        %v2100 = vunpack.c.l.b16 %v2036
        %v2101 = vunpack.c.h.b16 %v2036
        %v2102 = vunpack.c.l.b16 %v2037
        %v2103 = vunpack.c.h.b16 %v2037
        %v2104 = vunpack.c.l.b16 %v2038
        %v2105 = vunpack.c.h.b16 %v2038
        %v2106 = vunpack.c.l.b16 %v2039
        %v2107 = vunpack.c.h.b16 %v2039
        %v2108 = vunpack.c.l.b16 %v2040
        %v2109 = vunpack.c.h.b16 %v2040
        %v2110 = vunpack.c.l.b16 %v2041
        %v2111 = vunpack.c.h.b16 %v2041
        %v2112 = vunpack.c.l.b16 %v2042
        %v2113 = vunpack.c.h.b16 %v2042
        %v2114 = vunpack.c.l.b16 %v2043
        %v2115 = vunpack.c.h.b16 %v2043
        %v2116 = vunpack.c.l.b16 %v2044
        %v2117 = vunpack.c.h.b16 %v2044
        %v2118 = vunpack.c.l.b16 %v2045
        %v2119 = vunpack.c.h.b16 %v2045
        %v2120 = vunpack.c.l.b16 %v2046
        %v2121 = vunpack.c.h.b16 %v2046
        %v2122 = vunpack.c.l.b16 %v2047
        %v2123 = vunpack.c.h.b16 %v2047
        %v2124 = vunpack.c.l.b16 %v2048
        %v2125 = vunpack.c.h.b16 %v2048
        %v2126 = vunpack.c.l.b16 %v2049
        %v2127 = vunpack.c.h.b16 %v2049
        %v2128 = vunpack.c.l.b16 %v2050
        %v2129 = vunpack.c.h.b16 %v2050
        %v2130 = vunpack.c.l.b16 %v2051
        %v2131 = vunpack.c.h.b16 %v2051
        %v2132 = vunpack.c.l.b16 %v2052
        %v2133 = vunpack.c.h.b16 %v2052
        %v2134 = vunpack.c.l.b16 %v2053
        %v2135 = vunpack.c.h.b16 %v2053
        %v2136 = vunpack.c.l.b16 %v2054
        %v2137 = vunpack.c.h.b16 %v2054
        %v2138 = vunpack.c.l.b16 %v2055
        %v2139 = vunpack.c.h.b16 %v2055
        %v2140 = vunpack.c.l.b16 %v2056
        %v2141 = vunpack.c.h.b16 %v2056
        %v2142 = vunpack.c.l.b16 %v2057
        %v2143 = vunpack.c.h.b16 %v2057
        %v2144 = vunpack.c.l.b16 %v2058
        %v2145 = vunpack.c.h.b16 %v2058
        %v2146 = vunpack.c.l.b16 %v2059
        %v2147 = vunpack.c.h.b16 %v2059
        %v2148 = vunpack.c.l.b16 %v2060
        %v2149 = vunpack.c.h.b16 %v2060
        %v2150 = vunpack.c.l.b16 %v2061
        %v2151 = vunpack.c.h.b16 %v2061
        %v2152 = vunpack.c.l.b16 %v2062
        %v2153 = vunpack.c.h.b16 %v2062
        %v2154 = vunpack.c.l.b16 %v2063
        %v2155 = vunpack.c.h.b16 %v2063
        %v2156 = vunpack.c.l.b16 %v2064
        %v2157 = vunpack.c.h.b16 %v2064
        %v2158 = vunpack.c.l.b16 %v2065
        %v2159 = vunpack.c.h.b16 %v2065
        %v2160 = vunpack.c.l.b16 %v2066
        %v2161 = vunpack.c.h.b16 %v2066
        %v2162 = vunpack.c.l.b16 %v2067
        %v2163 = vunpack.c.h.b16 %v2067
        %v2164 = vpack.c.b16 %v2104, %v2100
        %v2165 = vpack.c.b16 %v2105, %v2101
        %v2166 = vpack.c.b16 %v2106, %v2102
        %v2167 = vpack.c.b16 %v2107, %v2103
        %v2168 = vpack.c.b16 %v2112, %v2108
        %v2169 = vpack.c.b16 %v2113, %v2109
        %v2170 = vpack.c.b16 %v2114, %v2110
        %v2171 = vpack.c.b16 %v2115, %v2111
        %v2172 = vpack.c.b16 %v2120, %v2116
        %v2173 = vpack.c.b16 %v2121, %v2117
        %v2174 = vpack.c.b16 %v2122, %v2118
        %v2175 = vpack.c.b16 %v2123, %v2119
        %v2176 = vpack.c.b16 %v2128, %v2124
        %v2177 = vpack.c.b16 %v2129, %v2125
        %v2178 = vpack.c.b16 %v2130, %v2126
        %v2179 = vpack.c.b16 %v2131, %v2127
        %v2180 = vpack.c.b16 %v2136, %v2132
        %v2181 = vpack.c.b16 %v2137, %v2133
        %v2182 = vpack.c.b16 %v2138, %v2134
        %v2183 = vpack.c.b16 %v2139, %v2135
        %v2184 = vpack.c.b16 %v2144, %v2140
        %v2185 = vpack.c.b16 %v2145, %v2141
        %v2186 = vpack.c.b16 %v2146, %v2142
        %v2187 = vpack.c.b16 %v2147, %v2143
        %v2188 = vpack.c.b16 %v2152, %v2148
        %v2189 = vpack.c.b16 %v2153, %v2149
        %v2190 = vpack.c.b16 %v2154, %v2150
        %v2191 = vpack.c.b16 %v2155, %v2151
        %v2192 = vpack.c.b16 %v2160, %v2156
        %v2193 = vpack.c.b16 %v2161, %v2157
        %v2194 = vpack.c.b16 %v2162, %v2158
        %v2195 = vpack.c.b16 %v2163, %v2159
        %2228 = vmatprep.subr.bf16.mxu0 %v2165
        %2229 = vmatpush1.bf16.msra.mxu0 %v2164
        %2230 = vmatprep.subr.bf16.mxu0 %v2169
        %2231 = vmatpush1.bf16.msra.mxu0 %v2168
        %2232 = vmatprep.subr.bf16.mxu0 %v2173
        %2233 = vmatpush1.bf16.msra.mxu0 %v2172
        %2234 = vmatprep.subr.bf16.mxu0 %v2177
        %2235 = vmatpush1.bf16.msra.mxu0 %v2176
        %2236 = vmatprep.subr.bf16.mxu0 %v2181
        %2237 = vmatpush1.bf16.msra.mxu0 %v2180
        %2238 = vmatprep.subr.bf16.mxu0 %v2185
        %2239 = vmatpush1.bf16.msra.mxu0 %v2184
        %2240 = vmatprep.subr.bf16.mxu0 %v2189
        %2241 = vmatpush1.bf16.msra.mxu0 %v2188
        %2242 = vmatprep.subr.bf16.mxu0 %v2193
        %2243 = vmatpush1.bf16.msra.mxu0 %v2192
        %2244 = vmatprep.subr.bf16.mxu0 0
        %2245 = vmatpush1.bf16.msra.mxu0 0
        %2246 = vmatprep.subr.bf16.mxu0 0
        %2247 = vmatpush1.bf16.msra.mxu0 0
        %2248 = vmatprep.subr.bf16.mxu0 0
        %2249 = vmatpush1.bf16.msra.mxu0 0
        %2250 = vmatprep.subr.bf16.mxu0 0
        %2251 = vmatpush1.bf16.msra.mxu0 0
        %2252 = vmatprep.subr.bf16.mxu0 0
        %2253 = vmatpush1.bf16.msra.mxu0 0
        %2254 = vmatprep.subr.bf16.mxu0 0
        %2255 = vmatpush1.bf16.msra.mxu0 0
        %2256 = vmatprep.subr.bf16.mxu0 0
        %2257 = vmatpush1.bf16.msra.mxu0 0
        %2258 = vmatprep.subr.bf16.mxu0 0
        %2259 = vmatpush1.bf16.msra.mxu0 0
        %2260 = vmatprep.mubr.bf16.mxu0 0
        %2261 = vmatmul.mubr.bf16.gmra.mrb[0].mxu0 %v2035
        %v2262 = vpop.f32.mrb[0].mxu0
        %v2263 = vadd.f32 0.0, %v2262
        %v2264 = vpop.f32.mrb[0].mxu0
        %v2265 = vadd.f32 0.0, %v2264
        %v2266 = vpop.f32.mrb[0].mxu0
        %v2267 = vpop.f32.mrb[0].mxu0
        %2268 = vdwg.mxu0
        %2269 = vmatprep.subr.bf16.mxu0 %v2167
        %2270 = vmatpush1.bf16.msra.mxu0 %v2166
        %2271 = vmatprep.subr.bf16.mxu0 %v2171
        %2272 = vmatpush1.bf16.msra.mxu0 %v2170
        %2273 = vmatprep.subr.bf16.mxu0 %v2175
        %2274 = vmatpush1.bf16.msra.mxu0 %v2174
        %2275 = vmatprep.subr.bf16.mxu0 %v2179
        %2276 = vmatpush1.bf16.msra.mxu0 %v2178
        %2277 = vmatprep.subr.bf16.mxu0 %v2183
        %2278 = vmatpush1.bf16.msra.mxu0 %v2182
        %2279 = vmatprep.subr.bf16.mxu0 %v2187
        %2280 = vmatpush1.bf16.msra.mxu0 %v2186
        %2281 = vmatprep.subr.bf16.mxu0 %v2191
        %2282 = vmatpush1.bf16.msra.mxu0 %v2190
        %2283 = vmatprep.subr.bf16.mxu0 %v2195
        %2284 = vmatpush1.bf16.msra.mxu0 %v2194
        %2285 = vmatprep.subr.bf16.mxu0 0
        %2286 = vmatpush1.bf16.msra.mxu0 0
        %2287 = vmatprep.subr.bf16.mxu0 0
        %2288 = vmatpush1.bf16.msra.mxu0 0
        %2289 = vmatprep.subr.bf16.mxu0 0
        %2290 = vmatpush1.bf16.msra.mxu0 0
        %2291 = vmatprep.subr.bf16.mxu0 0
        %2292 = vmatpush1.bf16.msra.mxu0 0
        %2293 = vmatprep.subr.bf16.mxu0 0
        %2294 = vmatpush1.bf16.msra.mxu0 0
        %2295 = vmatprep.subr.bf16.mxu0 0
        %2296 = vmatpush1.bf16.msra.mxu0 0
        %2297 = vmatprep.subr.bf16.mxu0 0
        %2298 = vmatpush1.bf16.msra.mxu0 0
        %2299 = vmatprep.subr.bf16.mxu0 0
        %2300 = vmatpush1.bf16.msra.mxu0 0
        %2301 = vmatprep.mubr.bf16.mxu0 0
        %2302 = vmatmul.mubr.bf16.gmra.mrb[0].mxu0 %v2035
        %v2303 = vpop.f32.mrb[0].mxu0
        %v2304 = vadd.f32 0.0, %v2303
        %v2305 = vpop.f32.mrb[0].mxu0
        %v2306 = vadd.f32 0.0, %v2305
        %v2307 = vpop.f32.mrb[0].mxu0
        %v2308 = vpop.f32.mrb[0].mxu0
        %2309 = vdwg.mxu0
        %v2310 = vadd.f32 %v2031, %v2263
        %v2311 = vadd.f32 %v2032, %v2265
        %v2312 = vadd.f32 %v2033, %v2304
        %v2313 = vadd.f32 %v2034, %v2306
        %v2314 = vmul.f32 %v2310, 0.5
        %v2315 = vtanh.pop %v2314
        %v2316 = vadd.f32 %v2315, 1.0
        %v2317 = vmul.f32 %v2316, 0.5
        %v2318 = vmul.f32 %v2311, 0.5
        %v2319 = vtanh.pop %v2318
        %v2320 = vadd.f32 %v2319, 1.0
        %v2321 = vmul.f32 %v2320, 0.5
        %v2322 = vtanh.pop %v2312
        %v2323 = vmul.f32 %v2313, 0.5
        %v2324 = vtanh.pop %v2323
        %v2325 = vadd.f32 %v2324, 1.0
        %v2326 = vmul.f32 %v2325, 0.5
        %v2327 = vmul.f32 %v2321, %v2027
        %v2328 = vmul.f32 %v2317, %v2322
        %v2329 = vadd.f32 %v2327, %v2328
        %v2330 = vtanh.pop %v2329
        %v2331 = vmul.f32 %v2326, %v2330
        %2332 = vst [vmem:[#allocation2 + $0x20] sm:$0xff] %v2331
        %v2333 = vld [vmem:[#allocation3 + $0xa0] sm:$0xff]
        %v2334 = vld [vmem:[#allocation3 + $0xa8] sm:$0xff]
        %v2335 = vld [vmem:[#allocation3 + $0xb0] sm:$0xff]
        %v2336 = vld [vmem:[#allocation3 + $0xb8] sm:$0xff]
        %v2337 = vpack.c.bf16 %v2331, %v2331
        %v2338 = vld [vmem:[%s298] sm:$0xff]
        %v2339 = vld [vmem:[%s298 + $0x8] sm:$0xff]
        %v2340 = vld [vmem:[%s298 + $0x10] sm:$0xff]
        %v2341 = vld [vmem:[%s298 + $0x18] sm:$0xff]
        %v2342 = vld [vmem:[%s298 + $0x20] sm:$0xff]
        %v2343 = vld [vmem:[%s298 + $0x28] sm:$0xff]
        %v2344 = vld [vmem:[%s298 + $0x30] sm:$0xff]
        %v2345 = vld [vmem:[%s298 + $0x38] sm:$0xff]
        %v2346 = vld [vmem:[%s298 + $0x40] sm:$0xff]
        %v2347 = vld [vmem:[%s298 + $0x48] sm:$0xff]
        %v2348 = vld [vmem:[%s298 + $0x50] sm:$0xff]
        %v2349 = vld [vmem:[%s298 + $0x58] sm:$0xff]
        %v2350 = vld [vmem:[%s298 + $0x60] sm:$0xff]
        %v2351 = vld [vmem:[%s298 + $0x68] sm:$0xff]
        %v2352 = vld [vmem:[%s298 + $0x70] sm:$0xff]
        %v2353 = vld [vmem:[%s298 + $0x78] sm:$0xff]
        %v2354 = vld [vmem:[%s298 + $0x80] sm:$0xff]
        %v2355 = vld [vmem:[%s298 + $0x88] sm:$0xff]
        %v2356 = vld [vmem:[%s298 + $0x90] sm:$0xff]
        %v2357 = vld [vmem:[%s298 + $0x98] sm:$0xff]
        %v2358 = vld [vmem:[%s298 + $0xa0] sm:$0xff]
        %v2359 = vld [vmem:[%s298 + $0xa8] sm:$0xff]
        %v2360 = vld [vmem:[%s298 + $0xb0] sm:$0xff]
        %v2361 = vld [vmem:[%s298 + $0xb8] sm:$0xff]
        %v2362 = vld [vmem:[%s298 + $0xc0] sm:$0xff]
        %v2363 = vld [vmem:[%s298 + $0xc8] sm:$0xff]
        %v2364 = vld [vmem:[%s298 + $0xd0] sm:$0xff]
        %v2365 = vld [vmem:[%s298 + $0xd8] sm:$0xff]
        %v2366 = vld [vmem:[%s298 + $0xe0] sm:$0xff]
        %v2367 = vld [vmem:[%s298 + $0xe8] sm:$0xff]
        %v2368 = vld [vmem:[%s298 + $0xf0] sm:$0xff]
        %v2369 = vld [vmem:[%s298 + $0xf8] sm:$0xff]
        %v2402 = vunpack.c.l.b16 %v2338
        %v2403 = vunpack.c.h.b16 %v2338
        %v2404 = vunpack.c.l.b16 %v2339
        %v2405 = vunpack.c.h.b16 %v2339
        %v2406 = vunpack.c.l.b16 %v2340
        %v2407 = vunpack.c.h.b16 %v2340
        %v2408 = vunpack.c.l.b16 %v2341
        %v2409 = vunpack.c.h.b16 %v2341
        %v2410 = vunpack.c.l.b16 %v2342
        %v2411 = vunpack.c.h.b16 %v2342
        %v2412 = vunpack.c.l.b16 %v2343
        %v2413 = vunpack.c.h.b16 %v2343
        %v2414 = vunpack.c.l.b16 %v2344
        %v2415 = vunpack.c.h.b16 %v2344
        %v2416 = vunpack.c.l.b16 %v2345
        %v2417 = vunpack.c.h.b16 %v2345
        %v2418 = vunpack.c.l.b16 %v2346
        %v2419 = vunpack.c.h.b16 %v2346
        %v2420 = vunpack.c.l.b16 %v2347
        %v2421 = vunpack.c.h.b16 %v2347
        %v2422 = vunpack.c.l.b16 %v2348
        %v2423 = vunpack.c.h.b16 %v2348
        %v2424 = vunpack.c.l.b16 %v2349
        %v2425 = vunpack.c.h.b16 %v2349
        %v2426 = vunpack.c.l.b16 %v2350
        %v2427 = vunpack.c.h.b16 %v2350
        %v2428 = vunpack.c.l.b16 %v2351
        %v2429 = vunpack.c.h.b16 %v2351
        %v2430 = vunpack.c.l.b16 %v2352
        %v2431 = vunpack.c.h.b16 %v2352
        %v2432 = vunpack.c.l.b16 %v2353
        %v2433 = vunpack.c.h.b16 %v2353
        %v2434 = vunpack.c.l.b16 %v2354
        %v2435 = vunpack.c.h.b16 %v2354
        %v2436 = vunpack.c.l.b16 %v2355
        %v2437 = vunpack.c.h.b16 %v2355
        %v2438 = vunpack.c.l.b16 %v2356
        %v2439 = vunpack.c.h.b16 %v2356
        %v2440 = vunpack.c.l.b16 %v2357
        %v2441 = vunpack.c.h.b16 %v2357
        %v2442 = vunpack.c.l.b16 %v2358
        %v2443 = vunpack.c.h.b16 %v2358
        %v2444 = vunpack.c.l.b16 %v2359
        %v2445 = vunpack.c.h.b16 %v2359
        %v2446 = vunpack.c.l.b16 %v2360
        %v2447 = vunpack.c.h.b16 %v2360
        %v2448 = vunpack.c.l.b16 %v2361
        %v2449 = vunpack.c.h.b16 %v2361
        %v2450 = vunpack.c.l.b16 %v2362
        %v2451 = vunpack.c.h.b16 %v2362
        %v2452 = vunpack.c.l.b16 %v2363
        %v2453 = vunpack.c.h.b16 %v2363
        %v2454 = vunpack.c.l.b16 %v2364
        %v2455 = vunpack.c.h.b16 %v2364
        %v2456 = vunpack.c.l.b16 %v2365
        %v2457 = vunpack.c.h.b16 %v2365
        %v2458 = vunpack.c.l.b16 %v2366
        %v2459 = vunpack.c.h.b16 %v2366
        %v2460 = vunpack.c.l.b16 %v2367
        %v2461 = vunpack.c.h.b16 %v2367
        %v2462 = vunpack.c.l.b16 %v2368
        %v2463 = vunpack.c.h.b16 %v2368
        %v2464 = vunpack.c.l.b16 %v2369
        %v2465 = vunpack.c.h.b16 %v2369
        %v2466 = vpack.c.b16 %v2406, %v2402
        %v2467 = vpack.c.b16 %v2407, %v2403
        %v2468 = vpack.c.b16 %v2408, %v2404
        %v2469 = vpack.c.b16 %v2409, %v2405
        %v2470 = vpack.c.b16 %v2414, %v2410
        %v2471 = vpack.c.b16 %v2415, %v2411
        %v2472 = vpack.c.b16 %v2416, %v2412
        %v2473 = vpack.c.b16 %v2417, %v2413
        %v2474 = vpack.c.b16 %v2422, %v2418
        %v2475 = vpack.c.b16 %v2423, %v2419
        %v2476 = vpack.c.b16 %v2424, %v2420
        %v2477 = vpack.c.b16 %v2425, %v2421
        %v2478 = vpack.c.b16 %v2430, %v2426
        %v2479 = vpack.c.b16 %v2431, %v2427
        %v2480 = vpack.c.b16 %v2432, %v2428
        %v2481 = vpack.c.b16 %v2433, %v2429
        %v2482 = vpack.c.b16 %v2438, %v2434
        %v2483 = vpack.c.b16 %v2439, %v2435
        %v2484 = vpack.c.b16 %v2440, %v2436
        %v2485 = vpack.c.b16 %v2441, %v2437
        %v2486 = vpack.c.b16 %v2446, %v2442
        %v2487 = vpack.c.b16 %v2447, %v2443
        %v2488 = vpack.c.b16 %v2448, %v2444
        %v2489 = vpack.c.b16 %v2449, %v2445
        %v2490 = vpack.c.b16 %v2454, %v2450
        %v2491 = vpack.c.b16 %v2455, %v2451
        %v2492 = vpack.c.b16 %v2456, %v2452
        %v2493 = vpack.c.b16 %v2457, %v2453
        %v2494 = vpack.c.b16 %v2462, %v2458
        %v2495 = vpack.c.b16 %v2463, %v2459
        %v2496 = vpack.c.b16 %v2464, %v2460
        %v2497 = vpack.c.b16 %v2465, %v2461
        %2530 = vmatprep.subr.bf16.mxu0 %v2467
        %2531 = vmatpush1.bf16.msra.mxu0 %v2466
        %2532 = vmatprep.subr.bf16.mxu0 %v2471
        %2533 = vmatpush1.bf16.msra.mxu0 %v2470
        %2534 = vmatprep.subr.bf16.mxu0 %v2475
        %2535 = vmatpush1.bf16.msra.mxu0 %v2474
        %2536 = vmatprep.subr.bf16.mxu0 %v2479
        %2537 = vmatpush1.bf16.msra.mxu0 %v2478
        %2538 = vmatprep.subr.bf16.mxu0 %v2483
        %2539 = vmatpush1.bf16.msra.mxu0 %v2482
        %2540 = vmatprep.subr.bf16.mxu0 %v2487
        %2541 = vmatpush1.bf16.msra.mxu0 %v2486
        %2542 = vmatprep.subr.bf16.mxu0 %v2491
        %2543 = vmatpush1.bf16.msra.mxu0 %v2490
        %2544 = vmatprep.subr.bf16.mxu0 %v2495
        %2545 = vmatpush1.bf16.msra.mxu0 %v2494
        %2546 = vmatprep.subr.bf16.mxu0 0
        %2547 = vmatpush1.bf16.msra.mxu0 0
        %2548 = vmatprep.subr.bf16.mxu0 0
        %2549 = vmatpush1.bf16.msra.mxu0 0
        %2550 = vmatprep.subr.bf16.mxu0 0
        %2551 = vmatpush1.bf16.msra.mxu0 0
        %2552 = vmatprep.subr.bf16.mxu0 0
        %2553 = vmatpush1.bf16.msra.mxu0 0
        %2554 = vmatprep.subr.bf16.mxu0 0
        %2555 = vmatpush1.bf16.msra.mxu0 0
        %2556 = vmatprep.subr.bf16.mxu0 0
        %2557 = vmatpush1.bf16.msra.mxu0 0
        %2558 = vmatprep.subr.bf16.mxu0 0
        %2559 = vmatpush1.bf16.msra.mxu0 0
        %2560 = vmatprep.subr.bf16.mxu0 0
        %2561 = vmatpush1.bf16.msra.mxu0 0
        %2562 = vmatprep.mubr.bf16.mxu0 0
        %2563 = vmatmul.mubr.bf16.gmra.mrb[0].mxu0 %v2337
        %v2564 = vpop.f32.mrb[0].mxu0
        %v2565 = vadd.f32 0.0, %v2564
        %v2566 = vpop.f32.mrb[0].mxu0
        %v2567 = vadd.f32 0.0, %v2566
        %v2568 = vpop.f32.mrb[0].mxu0
        %v2569 = vpop.f32.mrb[0].mxu0
        %2570 = vdwg.mxu0
        %2571 = vmatprep.subr.bf16.mxu0 %v2469
        %2572 = vmatpush1.bf16.msra.mxu0 %v2468
        %2573 = vmatprep.subr.bf16.mxu0 %v2473
        %2574 = vmatpush1.bf16.msra.mxu0 %v2472
        %2575 = vmatprep.subr.bf16.mxu0 %v2477
        %2576 = vmatpush1.bf16.msra.mxu0 %v2476
        %2577 = vmatprep.subr.bf16.mxu0 %v2481
        %2578 = vmatpush1.bf16.msra.mxu0 %v2480
        %2579 = vmatprep.subr.bf16.mxu0 %v2485
        %2580 = vmatpush1.bf16.msra.mxu0 %v2484
        %2581 = vmatprep.subr.bf16.mxu0 %v2489
        %2582 = vmatpush1.bf16.msra.mxu0 %v2488
        %2583 = vmatprep.subr.bf16.mxu0 %v2493
        %2584 = vmatpush1.bf16.msra.mxu0 %v2492
        %2585 = vmatprep.subr.bf16.mxu0 %v2497
        %2586 = vmatpush1.bf16.msra.mxu0 %v2496
        %2587 = vmatprep.subr.bf16.mxu0 0
        %2588 = vmatpush1.bf16.msra.mxu0 0
        %2589 = vmatprep.subr.bf16.mxu0 0
        %2590 = vmatpush1.bf16.msra.mxu0 0
        %2591 = vmatprep.subr.bf16.mxu0 0
        %2592 = vmatpush1.bf16.msra.mxu0 0
        %2593 = vmatprep.subr.bf16.mxu0 0
        %2594 = vmatpush1.bf16.msra.mxu0 0
        %2595 = vmatprep.subr.bf16.mxu0 0
        %2596 = vmatpush1.bf16.msra.mxu0 0
        %2597 = vmatprep.subr.bf16.mxu0 0
        %2598 = vmatpush1.bf16.msra.mxu0 0
        %2599 = vmatprep.subr.bf16.mxu0 0
        %2600 = vmatpush1.bf16.msra.mxu0 0
        %2601 = vmatprep.subr.bf16.mxu0 0
        %2602 = vmatpush1.bf16.msra.mxu0 0
        %2603 = vmatprep.mubr.bf16.mxu0 0
        %2604 = vmatmul.mubr.bf16.gmra.mrb[0].mxu0 %v2337
        %v2605 = vpop.f32.mrb[0].mxu0
        %v2606 = vadd.f32 0.0, %v2605
        %v2607 = vpop.f32.mrb[0].mxu0
        %v2608 = vadd.f32 0.0, %v2607
        %v2609 = vpop.f32.mrb[0].mxu0
        %v2610 = vpop.f32.mrb[0].mxu0
        %2611 = vdwg.mxu0
        %v2612 = vadd.f32 %v2333, %v2565
        %v2613 = vadd.f32 %v2334, %v2567
        %v2614 = vadd.f32 %v2335, %v2606
        %v2615 = vadd.f32 %v2336, %v2608
        %v2616 = vmul.f32 %v2612, 0.5
        %v2617 = vtanh.pop %v2616
        %v2618 = vadd.f32 %v2617, 1.0
        %v2619 = vmul.f32 %v2618, 0.5
        %v2620 = vmul.f32 %v2613, 0.5
        %v2621 = vtanh.pop %v2620
        %v2622 = vadd.f32 %v2621, 1.0
        %v2623 = vmul.f32 %v2622, 0.5
        %v2624 = vtanh.pop %v2614
        %v2625 = vmul.f32 %v2615, 0.5
        %v2626 = vtanh.pop %v2625
        %v2627 = vadd.f32 %v2626, 1.0
        %v2628 = vmul.f32 %v2627, 0.5
        %v2629 = vmul.f32 %v2623, %v2329
        %v2630 = vmul.f32 %v2619, %v2624
        %v2631 = vadd.f32 %v2629, %v2630
        %v2632 = vtanh.pop %v2631
        %v2633 = vmul.f32 %v2628, %v2632
        %2634 = vst [vmem:[#allocation2 + $0x28] sm:$0xff] %v2633
        %v2635 = vld [vmem:[#allocation3 + $0xc0] sm:$0xff]
        %v2636 = vld [vmem:[#allocation3 + $0xc8] sm:$0xff]
        %v2637 = vld [vmem:[#allocation3 + $0xd0] sm:$0xff]
        %v2638 = vld [vmem:[#allocation3 + $0xd8] sm:$0xff]
        %v2639 = vpack.c.bf16 %v2633, %v2633
        %v2640 = vld [vmem:[%s298] sm:$0xff]
        %v2641 = vld [vmem:[%s298 + $0x8] sm:$0xff]
        %v2642 = vld [vmem:[%s298 + $0x10] sm:$0xff]
        %v2643 = vld [vmem:[%s298 + $0x18] sm:$0xff]
        %v2644 = vld [vmem:[%s298 + $0x20] sm:$0xff]
        %v2645 = vld [vmem:[%s298 + $0x28] sm:$0xff]
        %v2646 = vld [vmem:[%s298 + $0x30] sm:$0xff]
        %v2647 = vld [vmem:[%s298 + $0x38] sm:$0xff]
        %v2648 = vld [vmem:[%s298 + $0x40] sm:$0xff]
        %v2649 = vld [vmem:[%s298 + $0x48] sm:$0xff]
        %v2650 = vld [vmem:[%s298 + $0x50] sm:$0xff]
        %v2651 = vld [vmem:[%s298 + $0x58] sm:$0xff]
        %v2652 = vld [vmem:[%s298 + $0x60] sm:$0xff]
        %v2653 = vld [vmem:[%s298 + $0x68] sm:$0xff]
        %v2654 = vld [vmem:[%s298 + $0x70] sm:$0xff]
        %v2655 = vld [vmem:[%s298 + $0x78] sm:$0xff]
        %v2656 = vld [vmem:[%s298 + $0x80] sm:$0xff]
        %v2657 = vld [vmem:[%s298 + $0x88] sm:$0xff]
        %v2658 = vld [vmem:[%s298 + $0x90] sm:$0xff]
        %v2659 = vld [vmem:[%s298 + $0x98] sm:$0xff]
        %v2660 = vld [vmem:[%s298 + $0xa0] sm:$0xff]
        %v2661 = vld [vmem:[%s298 + $0xa8] sm:$0xff]
        %v2662 = vld [vmem:[%s298 + $0xb0] sm:$0xff]
        %v2663 = vld [vmem:[%s298 + $0xb8] sm:$0xff]
        %v2664 = vld [vmem:[%s298 + $0xc0] sm:$0xff]
        %v2665 = vld [vmem:[%s298 + $0xc8] sm:$0xff]
        %v2666 = vld [vmem:[%s298 + $0xd0] sm:$0xff]
        %v2667 = vld [vmem:[%s298 + $0xd8] sm:$0xff]
        %v2668 = vld [vmem:[%s298 + $0xe0] sm:$0xff]
        %v2669 = vld [vmem:[%s298 + $0xe8] sm:$0xff]
        %v2670 = vld [vmem:[%s298 + $0xf0] sm:$0xff]
        %v2671 = vld [vmem:[%s298 + $0xf8] sm:$0xff]
        %v2704 = vunpack.c.l.b16 %v2640
        %v2705 = vunpack.c.h.b16 %v2640
        %v2706 = vunpack.c.l.b16 %v2641
        %v2707 = vunpack.c.h.b16 %v2641
        %v2708 = vunpack.c.l.b16 %v2642
        %v2709 = vunpack.c.h.b16 %v2642
        %v2710 = vunpack.c.l.b16 %v2643
        %v2711 = vunpack.c.h.b16 %v2643
        %v2712 = vunpack.c.l.b16 %v2644
        %v2713 = vunpack.c.h.b16 %v2644
        %v2714 = vunpack.c.l.b16 %v2645
        %v2715 = vunpack.c.h.b16 %v2645
        %v2716 = vunpack.c.l.b16 %v2646
        %v2717 = vunpack.c.h.b16 %v2646
        %v2718 = vunpack.c.l.b16 %v2647
        %v2719 = vunpack.c.h.b16 %v2647
        %v2720 = vunpack.c.l.b16 %v2648
        %v2721 = vunpack.c.h.b16 %v2648
        %v2722 = vunpack.c.l.b16 %v2649
        %v2723 = vunpack.c.h.b16 %v2649
        %v2724 = vunpack.c.l.b16 %v2650
        %v2725 = vunpack.c.h.b16 %v2650
        %v2726 = vunpack.c.l.b16 %v2651
        %v2727 = vunpack.c.h.b16 %v2651
        %v2728 = vunpack.c.l.b16 %v2652
        %v2729 = vunpack.c.h.b16 %v2652
        %v2730 = vunpack.c.l.b16 %v2653
        %v2731 = vunpack.c.h.b16 %v2653
        %v2732 = vunpack.c.l.b16 %v2654
        %v2733 = vunpack.c.h.b16 %v2654
        %v2734 = vunpack.c.l.b16 %v2655
        %v2735 = vunpack.c.h.b16 %v2655
        %v2736 = vunpack.c.l.b16 %v2656
        %v2737 = vunpack.c.h.b16 %v2656
        %v2738 = vunpack.c.l.b16 %v2657
        %v2739 = vunpack.c.h.b16 %v2657
        %v2740 = vunpack.c.l.b16 %v2658
        %v2741 = vunpack.c.h.b16 %v2658
        %v2742 = vunpack.c.l.b16 %v2659
        %v2743 = vunpack.c.h.b16 %v2659
        %v2744 = vunpack.c.l.b16 %v2660
        %v2745 = vunpack.c.h.b16 %v2660
        %v2746 = vunpack.c.l.b16 %v2661
        %v2747 = vunpack.c.h.b16 %v2661
        %v2748 = vunpack.c.l.b16 %v2662
        %v2749 = vunpack.c.h.b16 %v2662
        %v2750 = vunpack.c.l.b16 %v2663
        %v2751 = vunpack.c.h.b16 %v2663
        %v2752 = vunpack.c.l.b16 %v2664
        %v2753 = vunpack.c.h.b16 %v2664
        %v2754 = vunpack.c.l.b16 %v2665
        %v2755 = vunpack.c.h.b16 %v2665
        %v2756 = vunpack.c.l.b16 %v2666
        %v2757 = vunpack.c.h.b16 %v2666
        %v2758 = vunpack.c.l.b16 %v2667
        %v2759 = vunpack.c.h.b16 %v2667
        %v2760 = vunpack.c.l.b16 %v2668
        %v2761 = vunpack.c.h.b16 %v2668
        %v2762 = vunpack.c.l.b16 %v2669
        %v2763 = vunpack.c.h.b16 %v2669
        %v2764 = vunpack.c.l.b16 %v2670
        %v2765 = vunpack.c.h.b16 %v2670
        %v2766 = vunpack.c.l.b16 %v2671
        %v2767 = vunpack.c.h.b16 %v2671
        %v2768 = vpack.c.b16 %v2708, %v2704
        %v2769 = vpack.c.b16 %v2709, %v2705
        %v2770 = vpack.c.b16 %v2710, %v2706
        %v2771 = vpack.c.b16 %v2711, %v2707
        %v2772 = vpack.c.b16 %v2716, %v2712
        %v2773 = vpack.c.b16 %v2717, %v2713
        %v2774 = vpack.c.b16 %v2718, %v2714
        %v2775 = vpack.c.b16 %v2719, %v2715
        %v2776 = vpack.c.b16 %v2724, %v2720
        %v2777 = vpack.c.b16 %v2725, %v2721
        %v2778 = vpack.c.b16 %v2726, %v2722
        %v2779 = vpack.c.b16 %v2727, %v2723
        %v2780 = vpack.c.b16 %v2732, %v2728
        %v2781 = vpack.c.b16 %v2733, %v2729
        %v2782 = vpack.c.b16 %v2734, %v2730
        %v2783 = vpack.c.b16 %v2735, %v2731
        %v2784 = vpack.c.b16 %v2740, %v2736
        %v2785 = vpack.c.b16 %v2741, %v2737
        %v2786 = vpack.c.b16 %v2742, %v2738
        %v2787 = vpack.c.b16 %v2743, %v2739
        %v2788 = vpack.c.b16 %v2748, %v2744
        %v2789 = vpack.c.b16 %v2749, %v2745
        %v2790 = vpack.c.b16 %v2750, %v2746
        %v2791 = vpack.c.b16 %v2751, %v2747
        %v2792 = vpack.c.b16 %v2756, %v2752
        %v2793 = vpack.c.b16 %v2757, %v2753
        %v2794 = vpack.c.b16 %v2758, %v2754
        %v2795 = vpack.c.b16 %v2759, %v2755
        %v2796 = vpack.c.b16 %v2764, %v2760
        %v2797 = vpack.c.b16 %v2765, %v2761
        %v2798 = vpack.c.b16 %v2766, %v2762
        %v2799 = vpack.c.b16 %v2767, %v2763
        %2832 = vmatprep.subr.bf16.mxu0 %v2769
        %2833 = vmatpush1.bf16.msra.mxu0 %v2768
        %2834 = vmatprep.subr.bf16.mxu0 %v2773
        %2835 = vmatpush1.bf16.msra.mxu0 %v2772
        %2836 = vmatprep.subr.bf16.mxu0 %v2777
        %2837 = vmatpush1.bf16.msra.mxu0 %v2776
        %2838 = vmatprep.subr.bf16.mxu0 %v2781
        %2839 = vmatpush1.bf16.msra.mxu0 %v2780
        %2840 = vmatprep.subr.bf16.mxu0 %v2785
        %2841 = vmatpush1.bf16.msra.mxu0 %v2784
        %2842 = vmatprep.subr.bf16.mxu0 %v2789
        %2843 = vmatpush1.bf16.msra.mxu0 %v2788
        %2844 = vmatprep.subr.bf16.mxu0 %v2793
        %2845 = vmatpush1.bf16.msra.mxu0 %v2792
        %2846 = vmatprep.subr.bf16.mxu0 %v2797
        %2847 = vmatpush1.bf16.msra.mxu0 %v2796
        %2848 = vmatprep.subr.bf16.mxu0 0
        %2849 = vmatpush1.bf16.msra.mxu0 0
        %2850 = vmatprep.subr.bf16.mxu0 0
        %2851 = vmatpush1.bf16.msra.mxu0 0
        %2852 = vmatprep.subr.bf16.mxu0 0
        %2853 = vmatpush1.bf16.msra.mxu0 0
        %2854 = vmatprep.subr.bf16.mxu0 0
        %2855 = vmatpush1.bf16.msra.mxu0 0
        %2856 = vmatprep.subr.bf16.mxu0 0
        %2857 = vmatpush1.bf16.msra.mxu0 0
        %2858 = vmatprep.subr.bf16.mxu0 0
        %2859 = vmatpush1.bf16.msra.mxu0 0
        %2860 = vmatprep.subr.bf16.mxu0 0
        %2861 = vmatpush1.bf16.msra.mxu0 0
        %2862 = vmatprep.subr.bf16.mxu0 0
        %2863 = vmatpush1.bf16.msra.mxu0 0
        %2864 = vmatprep.mubr.bf16.mxu0 0
        %2865 = vmatmul.mubr.bf16.gmra.mrb[0].mxu0 %v2639
        %v2866 = vpop.f32.mrb[0].mxu0
        %v2867 = vadd.f32 0.0, %v2866
        %v2868 = vpop.f32.mrb[0].mxu0
        %v2869 = vadd.f32 0.0, %v2868
        %v2870 = vpop.f32.mrb[0].mxu0
        %v2871 = vpop.f32.mrb[0].mxu0
        %2872 = vdwg.mxu0
        %2873 = vmatprep.subr.bf16.mxu0 %v2771
        %2874 = vmatpush1.bf16.msra.mxu0 %v2770
        %2875 = vmatprep.subr.bf16.mxu0 %v2775
        %2876 = vmatpush1.bf16.msra.mxu0 %v2774
        %2877 = vmatprep.subr.bf16.mxu0 %v2779
        %2878 = vmatpush1.bf16.msra.mxu0 %v2778
        %2879 = vmatprep.subr.bf16.mxu0 %v2783
        %2880 = vmatpush1.bf16.msra.mxu0 %v2782
        %2881 = vmatprep.subr.bf16.mxu0 %v2787
        %2882 = vmatpush1.bf16.msra.mxu0 %v2786
        %2883 = vmatprep.subr.bf16.mxu0 %v2791
        %2884 = vmatpush1.bf16.msra.mxu0 %v2790
        %2885 = vmatprep.subr.bf16.mxu0 %v2795
        %2886 = vmatpush1.bf16.msra.mxu0 %v2794
        %2887 = vmatprep.subr.bf16.mxu0 %v2799
        %2888 = vmatpush1.bf16.msra.mxu0 %v2798
        %2889 = vmatprep.subr.bf16.mxu0 0
        %2890 = vmatpush1.bf16.msra.mxu0 0
        %2891 = vmatprep.subr.bf16.mxu0 0
        %2892 = vmatpush1.bf16.msra.mxu0 0
        %2893 = vmatprep.subr.bf16.mxu0 0
        %2894 = vmatpush1.bf16.msra.mxu0 0
        %2895 = vmatprep.subr.bf16.mxu0 0
        %2896 = vmatpush1.bf16.msra.mxu0 0
        %2897 = vmatprep.subr.bf16.mxu0 0
        %2898 = vmatpush1.bf16.msra.mxu0 0
        %2899 = vmatprep.subr.bf16.mxu0 0
        %2900 = vmatpush1.bf16.msra.mxu0 0
        %2901 = vmatprep.subr.bf16.mxu0 0
        %2902 = vmatpush1.bf16.msra.mxu0 0
        %2903 = vmatprep.subr.bf16.mxu0 0
        %2904 = vmatpush1.bf16.msra.mxu0 0
        %2905 = vmatprep.mubr.bf16.mxu0 0
        %2906 = vmatmul.mubr.bf16.gmra.mrb[0].mxu0 %v2639
        %v2907 = vpop.f32.mrb[0].mxu0
        %v2908 = vadd.f32 0.0, %v2907
        %v2909 = vpop.f32.mrb[0].mxu0
        %v2910 = vadd.f32 0.0, %v2909
        %v2911 = vpop.f32.mrb[0].mxu0
        %v2912 = vpop.f32.mrb[0].mxu0
        %2913 = vdwg.mxu0
        %v2914 = vadd.f32 %v2635, %v2867
        %v2915 = vadd.f32 %v2636, %v2869
        %v2916 = vadd.f32 %v2637, %v2908
        %v2917 = vadd.f32 %v2638, %v2910
        %v2918 = vmul.f32 %v2914, 0.5
        %v2919 = vtanh.pop %v2918
        %v2920 = vadd.f32 %v2919, 1.0
        %v2921 = vmul.f32 %v2920, 0.5
        %v2922 = vmul.f32 %v2915, 0.5
        %v2923 = vtanh.pop %v2922
        %v2924 = vadd.f32 %v2923, 1.0
        %v2925 = vmul.f32 %v2924, 0.5
        %v2926 = vtanh.pop %v2916
        %v2927 = vmul.f32 %v2917, 0.5
        %v2928 = vtanh.pop %v2927
        %v2929 = vadd.f32 %v2928, 1.0
        %v2930 = vmul.f32 %v2929, 0.5
        %v2931 = vmul.f32 %v2925, %v2631
        %v2932 = vmul.f32 %v2921, %v2926
        %v2933 = vadd.f32 %v2931, %v2932
        %v2934 = vtanh.pop %v2933
        %v2935 = vmul.f32 %v2930, %v2934
        %2936 = vst [vmem:[#allocation2 + $0x30] sm:$0xff] %v2935
        %v2937 = vld [vmem:[#allocation3 + $0xe0] sm:$0xff]
        %v2938 = vld [vmem:[#allocation3 + $0xe8] sm:$0xff]
        %v2939 = vld [vmem:[#allocation3 + $0xf0] sm:$0xff]
        %v2940 = vld [vmem:[#allocation3 + $0xf8] sm:$0xff]
        %v2941 = vpack.c.bf16 %v2935, %v2935
        %v2942 = vld [vmem:[%s298] sm:$0xff]
        %v2943 = vld [vmem:[%s298 + $0x8] sm:$0xff]
        %v2944 = vld [vmem:[%s298 + $0x10] sm:$0xff]
        %v2945 = vld [vmem:[%s298 + $0x18] sm:$0xff]
        %v2946 = vld [vmem:[%s298 + $0x20] sm:$0xff]
        %v2947 = vld [vmem:[%s298 + $0x28] sm:$0xff]
        %v2948 = vld [vmem:[%s298 + $0x30] sm:$0xff]
        %v2949 = vld [vmem:[%s298 + $0x38] sm:$0xff]
        %v2950 = vld [vmem:[%s298 + $0x40] sm:$0xff]
        %v2951 = vld [vmem:[%s298 + $0x48] sm:$0xff]
        %v2952 = vld [vmem:[%s298 + $0x50] sm:$0xff]
        %v2953 = vld [vmem:[%s298 + $0x58] sm:$0xff]
        %v2954 = vld [vmem:[%s298 + $0x60] sm:$0xff]
        %v2955 = vld [vmem:[%s298 + $0x68] sm:$0xff]
        %v2956 = vld [vmem:[%s298 + $0x70] sm:$0xff]
        %v2957 = vld [vmem:[%s298 + $0x78] sm:$0xff]
        %v2958 = vld [vmem:[%s298 + $0x80] sm:$0xff]
        %v2959 = vld [vmem:[%s298 + $0x88] sm:$0xff]
        %v2960 = vld [vmem:[%s298 + $0x90] sm:$0xff]
        %v2961 = vld [vmem:[%s298 + $0x98] sm:$0xff]
        %v2962 = vld [vmem:[%s298 + $0xa0] sm:$0xff]
        %v2963 = vld [vmem:[%s298 + $0xa8] sm:$0xff]
        %v2964 = vld [vmem:[%s298 + $0xb0] sm:$0xff]
        %v2965 = vld [vmem:[%s298 + $0xb8] sm:$0xff]
        %v2966 = vld [vmem:[%s298 + $0xc0] sm:$0xff]
        %v2967 = vld [vmem:[%s298 + $0xc8] sm:$0xff]
        %v2968 = vld [vmem:[%s298 + $0xd0] sm:$0xff]
        %v2969 = vld [vmem:[%s298 + $0xd8] sm:$0xff]
        %v2970 = vld [vmem:[%s298 + $0xe0] sm:$0xff]
        %v2971 = vld [vmem:[%s298 + $0xe8] sm:$0xff]
        %v2972 = vld [vmem:[%s298 + $0xf0] sm:$0xff]
        %v2973 = vld [vmem:[%s298 + $0xf8] sm:$0xff]
        %v3006 = vunpack.c.l.b16 %v2942
        %v3007 = vunpack.c.h.b16 %v2942
        %v3008 = vunpack.c.l.b16 %v2943
        %v3009 = vunpack.c.h.b16 %v2943
        %v3010 = vunpack.c.l.b16 %v2944
        %v3011 = vunpack.c.h.b16 %v2944
        %v3012 = vunpack.c.l.b16 %v2945
        %v3013 = vunpack.c.h.b16 %v2945
        %v3014 = vunpack.c.l.b16 %v2946
        %v3015 = vunpack.c.h.b16 %v2946
        %v3016 = vunpack.c.l.b16 %v2947
        %v3017 = vunpack.c.h.b16 %v2947
        %v3018 = vunpack.c.l.b16 %v2948
        %v3019 = vunpack.c.h.b16 %v2948
        %v3020 = vunpack.c.l.b16 %v2949
        %v3021 = vunpack.c.h.b16 %v2949
        %v3022 = vunpack.c.l.b16 %v2950
        %v3023 = vunpack.c.h.b16 %v2950
        %v3024 = vunpack.c.l.b16 %v2951
        %v3025 = vunpack.c.h.b16 %v2951
        %v3026 = vunpack.c.l.b16 %v2952
        %v3027 = vunpack.c.h.b16 %v2952
        %v3028 = vunpack.c.l.b16 %v2953
        %v3029 = vunpack.c.h.b16 %v2953
        %v3030 = vunpack.c.l.b16 %v2954
        %v3031 = vunpack.c.h.b16 %v2954
        %v3032 = vunpack.c.l.b16 %v2955
        %v3033 = vunpack.c.h.b16 %v2955
        %v3034 = vunpack.c.l.b16 %v2956
        %v3035 = vunpack.c.h.b16 %v2956
        %v3036 = vunpack.c.l.b16 %v2957
        %v3037 = vunpack.c.h.b16 %v2957
        %v3038 = vunpack.c.l.b16 %v2958
        %v3039 = vunpack.c.h.b16 %v2958
        %v3040 = vunpack.c.l.b16 %v2959
        %v3041 = vunpack.c.h.b16 %v2959
        %v3042 = vunpack.c.l.b16 %v2960
        %v3043 = vunpack.c.h.b16 %v2960
        %v3044 = vunpack.c.l.b16 %v2961
        %v3045 = vunpack.c.h.b16 %v2961
        %v3046 = vunpack.c.l.b16 %v2962
        %v3047 = vunpack.c.h.b16 %v2962
        %v3048 = vunpack.c.l.b16 %v2963
        %v3049 = vunpack.c.h.b16 %v2963
        %v3050 = vunpack.c.l.b16 %v2964
        %v3051 = vunpack.c.h.b16 %v2964
        %v3052 = vunpack.c.l.b16 %v2965
        %v3053 = vunpack.c.h.b16 %v2965
        %v3054 = vunpack.c.l.b16 %v2966
        %v3055 = vunpack.c.h.b16 %v2966
        %v3056 = vunpack.c.l.b16 %v2967
        %v3057 = vunpack.c.h.b16 %v2967
        %v3058 = vunpack.c.l.b16 %v2968
        %v3059 = vunpack.c.h.b16 %v2968
        %v3060 = vunpack.c.l.b16 %v2969
        %v3061 = vunpack.c.h.b16 %v2969
        %v3062 = vunpack.c.l.b16 %v2970
        %v3063 = vunpack.c.h.b16 %v2970
        %v3064 = vunpack.c.l.b16 %v2971
        %v3065 = vunpack.c.h.b16 %v2971
        %v3066 = vunpack.c.l.b16 %v2972
        %v3067 = vunpack.c.h.b16 %v2972
        %v3068 = vunpack.c.l.b16 %v2973
        %v3069 = vunpack.c.h.b16 %v2973
        %v3070 = vpack.c.b16 %v3010, %v3006
        %v3071 = vpack.c.b16 %v3011, %v3007
        %v3072 = vpack.c.b16 %v3012, %v3008
        %v3073 = vpack.c.b16 %v3013, %v3009
        %v3074 = vpack.c.b16 %v3018, %v3014
        %v3075 = vpack.c.b16 %v3019, %v3015
        %v3076 = vpack.c.b16 %v3020, %v3016
        %v3077 = vpack.c.b16 %v3021, %v3017
        %v3078 = vpack.c.b16 %v3026, %v3022
        %v3079 = vpack.c.b16 %v3027, %v3023
        %v3080 = vpack.c.b16 %v3028, %v3024
        %v3081 = vpack.c.b16 %v3029, %v3025
        %v3082 = vpack.c.b16 %v3034, %v3030
        %v3083 = vpack.c.b16 %v3035, %v3031
        %v3084 = vpack.c.b16 %v3036, %v3032
        %v3085 = vpack.c.b16 %v3037, %v3033
        %v3086 = vpack.c.b16 %v3042, %v3038
        %v3087 = vpack.c.b16 %v3043, %v3039
        %v3088 = vpack.c.b16 %v3044, %v3040
        %v3089 = vpack.c.b16 %v3045, %v3041
        %v3090 = vpack.c.b16 %v3050, %v3046
        %v3091 = vpack.c.b16 %v3051, %v3047
        %v3092 = vpack.c.b16 %v3052, %v3048
        %v3093 = vpack.c.b16 %v3053, %v3049
        %v3094 = vpack.c.b16 %v3058, %v3054
        %v3095 = vpack.c.b16 %v3059, %v3055
        %v3096 = vpack.c.b16 %v3060, %v3056
        %v3097 = vpack.c.b16 %v3061, %v3057
        %v3098 = vpack.c.b16 %v3066, %v3062
        %v3099 = vpack.c.b16 %v3067, %v3063
        %v3100 = vpack.c.b16 %v3068, %v3064
        %v3101 = vpack.c.b16 %v3069, %v3065
        %3134 = vmatprep.subr.bf16.mxu0 %v3071
        %3135 = vmatpush1.bf16.msra.mxu0 %v3070
        %3136 = vmatprep.subr.bf16.mxu0 %v3075
        %3137 = vmatpush1.bf16.msra.mxu0 %v3074
        %3138 = vmatprep.subr.bf16.mxu0 %v3079
        %3139 = vmatpush1.bf16.msra.mxu0 %v3078
        %3140 = vmatprep.subr.bf16.mxu0 %v3083
        %3141 = vmatpush1.bf16.msra.mxu0 %v3082
        %3142 = vmatprep.subr.bf16.mxu0 %v3087
        %3143 = vmatpush1.bf16.msra.mxu0 %v3086
        %3144 = vmatprep.subr.bf16.mxu0 %v3091
        %3145 = vmatpush1.bf16.msra.mxu0 %v3090
        %3146 = vmatprep.subr.bf16.mxu0 %v3095
        %3147 = vmatpush1.bf16.msra.mxu0 %v3094
        %3148 = vmatprep.subr.bf16.mxu0 %v3099
        %3149 = vmatpush1.bf16.msra.mxu0 %v3098
        %3150 = vmatprep.subr.bf16.mxu0 0
        %3151 = vmatpush1.bf16.msra.mxu0 0
        %3152 = vmatprep.subr.bf16.mxu0 0
        %3153 = vmatpush1.bf16.msra.mxu0 0
        %3154 = vmatprep.subr.bf16.mxu0 0
        %3155 = vmatpush1.bf16.msra.mxu0 0
        %3156 = vmatprep.subr.bf16.mxu0 0
        %3157 = vmatpush1.bf16.msra.mxu0 0
        %3158 = vmatprep.subr.bf16.mxu0 0
        %3159 = vmatpush1.bf16.msra.mxu0 0
        %3160 = vmatprep.subr.bf16.mxu0 0
        %3161 = vmatpush1.bf16.msra.mxu0 0
        %3162 = vmatprep.subr.bf16.mxu0 0
        %3163 = vmatpush1.bf16.msra.mxu0 0
        %3164 = vmatprep.subr.bf16.mxu0 0
        %3165 = vmatpush1.bf16.msra.mxu0 0
        %3166 = vmatprep.mubr.bf16.mxu0 0
        %3167 = vmatmul.mubr.bf16.gmra.mrb[0].mxu0 %v2941
        %v3168 = vpop.f32.mrb[0].mxu0
        %v3169 = vadd.f32 0.0, %v3168
        %v3170 = vpop.f32.mrb[0].mxu0
        %v3171 = vadd.f32 0.0, %v3170
        %v3172 = vpop.f32.mrb[0].mxu0
        %v3173 = vpop.f32.mrb[0].mxu0
        %3174 = vdwg.mxu0
        %3175 = vmatprep.subr.bf16.mxu0 %v3073
        %3176 = vmatpush1.bf16.msra.mxu0 %v3072
        %3177 = vmatprep.subr.bf16.mxu0 %v3077
        %3178 = vmatpush1.bf16.msra.mxu0 %v3076
        %3179 = vmatprep.subr.bf16.mxu0 %v3081
        %3180 = vmatpush1.bf16.msra.mxu0 %v3080
        %3181 = vmatprep.subr.bf16.mxu0 %v3085
        %3182 = vmatpush1.bf16.msra.mxu0 %v3084
        %3183 = vmatprep.subr.bf16.mxu0 %v3089
        %3184 = vmatpush1.bf16.msra.mxu0 %v3088
        %3185 = vmatprep.subr.bf16.mxu0 %v3093
        %3186 = vmatpush1.bf16.msra.mxu0 %v3092
        %3187 = vmatprep.subr.bf16.mxu0 %v3097
        %3188 = vmatpush1.bf16.msra.mxu0 %v3096
        %3189 = vmatprep.subr.bf16.mxu0 %v3101
        %3190 = vmatpush1.bf16.msra.mxu0 %v3100
        %3191 = vmatprep.subr.bf16.mxu0 0
        %3192 = vmatpush1.bf16.msra.mxu0 0
        %3193 = vmatprep.subr.bf16.mxu0 0
        %3194 = vmatpush1.bf16.msra.mxu0 0
        %3195 = vmatprep.subr.bf16.mxu0 0
        %3196 = vmatpush1.bf16.msra.mxu0 0
        %3197 = vmatprep.subr.bf16.mxu0 0
        %3198 = vmatpush1.bf16.msra.mxu0 0
        %3199 = vmatprep.subr.bf16.mxu0 0
        %3200 = vmatpush1.bf16.msra.mxu0 0
        %3201 = vmatprep.subr.bf16.mxu0 0
        %3202 = vmatpush1.bf16.msra.mxu0 0
        %3203 = vmatprep.subr.bf16.mxu0 0
        %3204 = vmatpush1.bf16.msra.mxu0 0
        %3205 = vmatprep.subr.bf16.mxu0 0
        %3206 = vmatpush1.bf16.msra.mxu0 0
        %3207 = vmatprep.mubr.bf16.mxu0 0
        %3208 = vmatmul.mubr.bf16.gmra.mrb[0].mxu0 %v2941
        %v3209 = vpop.f32.mrb[0].mxu0
        %v3210 = vadd.f32 0.0, %v3209
        %v3211 = vpop.f32.mrb[0].mxu0
        %v3212 = vadd.f32 0.0, %v3211
        %v3213 = vpop.f32.mrb[0].mxu0
        %v3214 = vpop.f32.mrb[0].mxu0
        %3215 = vdwg.mxu0
        %v3216 = vadd.f32 %v2937, %v3169
        %v3217 = vadd.f32 %v2938, %v3171
        %v3218 = vadd.f32 %v2939, %v3210
        %v3219 = vadd.f32 %v2940, %v3212
        %v3220 = vmul.f32 %v3216, 0.5
        %v3221 = vtanh.pop %v3220
        %v3222 = vadd.f32 %v3221, 1.0
        %v3223 = vmul.f32 %v3222, 0.5
        %v3224 = vmul.f32 %v3217, 0.5
        %v3225 = vtanh.pop %v3224
        %v3226 = vadd.f32 %v3225, 1.0
        %v3227 = vmul.f32 %v3226, 0.5
        %v3228 = vtanh.pop %v3218
        %v3229 = vmul.f32 %v3219, 0.5
        %v3230 = vtanh.pop %v3229
        %v3231 = vadd.f32 %v3230, 1.0
        %v3232 = vmul.f32 %v3231, 0.5
        %v3233 = vmul.f32 %v3227, %v2933
        %v3234 = vmul.f32 %v3223, %v3228
        %v3235 = vadd.f32 %v3233, %v3234
        %v3236 = vtanh.pop %v3235
        %v3237 = vmul.f32 %v3232, %v3236
        %3238 = vst [vmem:[#allocation2 + $0x38] sm:$0xff] %v3237
        %p3239 = scmp.eq.s32.totalorder %s23, 3
        // Predicated region
        $region61: #{lstm_net_forward.1} parent=43 // pred_check
          %p3240 = pneg %p3239
        $region62: #{lstm_net_forward.1} parent=43 // pred_check_branch
          %3242 = sbr.rel (%p3240) target = $region64
        $region63: #{lstm_net_forward.1} parent=43 // pred_region
          %v3243 = vtanh.pop %v3237
          %v3244 = vpack.c.bf16 %v3243, %v3243
          %v3245 = vld [vmem:[%s4] sm:$0xf]
          %v3246 = vld [vmem:[%s4 + $0x4] sm:$0xf]
          %v3247 = vld [vmem:[%s4 + $0x8] sm:$0xf]
          %v3248 = vld [vmem:[%s4 + $0xc] sm:$0xf]
          %v3249 = vld [vmem:[%s4 + $0x10] sm:$0xf]
          %v3250 = vld [vmem:[%s4 + $0x14] sm:$0xf]
          %v3251 = vld [vmem:[%s4 + $0x18] sm:$0xf]
          %v3252 = vld [vmem:[%s4 + $0x1c] sm:$0xf]
          %v3253 = vld [vmem:[%s4 + $0x20] sm:$0xf]
          %v3254 = vld [vmem:[%s4 + $0x24] sm:$0xf]
          %v3255 = vld [vmem:[%s4 + $0x28] sm:$0xf]
          %v3256 = vld [vmem:[%s4 + $0x2c] sm:$0xf]
          %v3257 = vld [vmem:[%s4 + $0x30] sm:$0xf]
          %v3258 = vld [vmem:[%s4 + $0x34] sm:$0xf]
          %v3259 = vld [vmem:[%s4 + $0x38] sm:$0xf]
          %v3260 = vld [vmem:[%s4 + $0x3c] sm:$0xf]
          %v3261 = vld [vmem:[%s5] sm:$0x1]
          %v3263 = vlaneseq
          %v3264 = vshrl.u32 %v3263, 7
          %v3265 = vsub.s32 0, %v3264
          %v3266 = vrot.slane %v3261, %v3265
          %v3284 = vunpack.c.l.b16 %v3245
          %v3285 = vunpack.c.l.b16 %v3246
          %v3286 = vunpack.c.l.b16 %v3247
          %v3287 = vunpack.c.l.b16 %v3248
          %v3288 = vunpack.c.l.b16 %v3249
          %v3289 = vunpack.c.l.b16 %v3250
          %v3290 = vunpack.c.l.b16 %v3251
          %v3291 = vunpack.c.l.b16 %v3252
          %v3292 = vunpack.c.l.b16 %v3253
          %v3293 = vunpack.c.l.b16 %v3254
          %v3294 = vunpack.c.l.b16 %v3255
          %v3295 = vunpack.c.l.b16 %v3256
          %v3296 = vunpack.c.l.b16 %v3257
          %v3297 = vunpack.c.l.b16 %v3258
          %v3298 = vunpack.c.l.b16 %v3259
          %v3299 = vunpack.c.l.b16 %v3260
          %v3300 = vpack.c.b16 %v3285, %v3284
          %v3301 = vpack.c.b16 %v3287, %v3286
          %v3302 = vpack.c.b16 %v3289, %v3288
          %v3303 = vpack.c.b16 %v3291, %v3290
          %v3304 = vpack.c.b16 %v3293, %v3292
          %v3305 = vpack.c.b16 %v3295, %v3294
          %v3306 = vpack.c.b16 %v3297, %v3296
          %v3307 = vpack.c.b16 %v3299, %v3298
          %3316 = vmatprep.subr.bf16.mxu0 0
          %3317 = vmatpush1.bf16.msra.mxu0 %v3300
          %3318 = vmatprep.subr.bf16.mxu0 0
          %3319 = vmatpush1.bf16.msra.mxu0 %v3301
          %3320 = vmatprep.subr.bf16.mxu0 0
          %3321 = vmatpush1.bf16.msra.mxu0 %v3302
          %3322 = vmatprep.subr.bf16.mxu0 0
          %3323 = vmatpush1.bf16.msra.mxu0 %v3303
          %3324 = vmatprep.subr.bf16.mxu0 0
          %3325 = vmatpush1.bf16.msra.mxu0 %v3304
          %3326 = vmatprep.subr.bf16.mxu0 0
          %3327 = vmatpush1.bf16.msra.mxu0 %v3305
          %3328 = vmatprep.subr.bf16.mxu0 0
          %3329 = vmatpush1.bf16.msra.mxu0 %v3306
          %3330 = vmatprep.subr.bf16.mxu0 0
          %3331 = vmatpush1.bf16.msra.mxu0 %v3307
          %3332 = vmatprep.subr.bf16.mxu0 0
          %3333 = vmatpush1.bf16.msra.mxu0 0
          %3334 = vmatprep.subr.bf16.mxu0 0
          %3335 = vmatpush1.bf16.msra.mxu0 0
          %3336 = vmatprep.subr.bf16.mxu0 0
          %3337 = vmatpush1.bf16.msra.mxu0 0
          %3338 = vmatprep.subr.bf16.mxu0 0
          %3339 = vmatpush1.bf16.msra.mxu0 0
          %3340 = vmatprep.subr.bf16.mxu0 0
          %3341 = vmatpush1.bf16.msra.mxu0 0
          %3342 = vmatprep.subr.bf16.mxu0 0
          %3343 = vmatpush1.bf16.msra.mxu0 0
          %3344 = vmatprep.subr.bf16.mxu0 0
          %3345 = vmatpush1.bf16.msra.mxu0 0
          %3346 = vmatprep.subr.bf16.mxu0 0
          %3347 = vmatpush1.bf16.msra.mxu0 0
          %3348 = vmatprep.mubr.bf16.mxu0 0
          %3349 = vmatmul.mubr.bf16.gmra.mrb[0].mxu0 %v3244
          %v3350 = vpop.f32.mrb[0].mxu0
          %v3351 = vadd.f32 %v3266, %v3350
          %v3352 = vpop.f32.mrb[0].mxu0
          %v3353 = vpop.f32.mrb[0].mxu0
          %v3354 = vpop.f32.mrb[0].mxu0
          %3355 = vdwg.mxu0
          %v3356 = vtanh.pop %v3351
          %v3357 = vpack.c.bf16 %v3356, %v3356
          %s3358 = scalar_lea.vmem %s4, 64
          %v3359 = vld [vmem:[%s3358] sm:$0xf]
          %v3360 = vld [vmem:[%s3358 + $0x4] sm:$0xf]
          %v3361 = vld [vmem:[%s3358 + $0x8] sm:$0xf]
          %v3362 = vld [vmem:[%s3358 + $0xc] sm:$0xf]
          %v3363 = vld [vmem:[%s3358 + $0x10] sm:$0xf]
          %v3364 = vld [vmem:[%s3358 + $0x14] sm:$0xf]
          %v3365 = vld [vmem:[%s3358 + $0x18] sm:$0xf]
          %v3366 = vld [vmem:[%s3358 + $0x1c] sm:$0xf]
          %v3367 = vld [vmem:[%s3358 + $0x20] sm:$0xf]
          %v3368 = vld [vmem:[%s3358 + $0x24] sm:$0xf]
          %v3369 = vld [vmem:[%s3358 + $0x28] sm:$0xf]
          %v3370 = vld [vmem:[%s3358 + $0x2c] sm:$0xf]
          %v3371 = vld [vmem:[%s3358 + $0x30] sm:$0xf]
          %v3372 = vld [vmem:[%s3358 + $0x34] sm:$0xf]
          %v3373 = vld [vmem:[%s3358 + $0x38] sm:$0xf]
          %v3374 = vld [vmem:[%s3358 + $0x3c] sm:$0xf]
          %s3375 = scalar_lea.vmem %s5, 1
          %v3376 = vld [vmem:[%s3375] sm:$0x1]
          %v3378 = vlaneseq
          %v3379 = vshrl.u32 %v3378, 7
          %v3380 = vsub.s32 0, %v3379
          %v3381 = vrot.slane %v3376, %v3380
          %v3399 = vunpack.c.l.b16 %v3359
          %v3400 = vunpack.c.l.b16 %v3360
          %v3401 = vunpack.c.l.b16 %v3361
          %v3402 = vunpack.c.l.b16 %v3362
          %v3403 = vunpack.c.l.b16 %v3363
          %v3404 = vunpack.c.l.b16 %v3364
          %v3405 = vunpack.c.l.b16 %v3365
          %v3406 = vunpack.c.l.b16 %v3366
          %v3407 = vunpack.c.l.b16 %v3367
          %v3408 = vunpack.c.l.b16 %v3368
          %v3409 = vunpack.c.l.b16 %v3369
          %v3410 = vunpack.c.l.b16 %v3370
          %v3411 = vunpack.c.l.b16 %v3371
          %v3412 = vunpack.c.l.b16 %v3372
          %v3413 = vunpack.c.l.b16 %v3373
          %v3414 = vunpack.c.l.b16 %v3374
          %v3415 = vpack.c.b16 %v3400, %v3399
          %v3416 = vpack.c.b16 %v3402, %v3401
          %v3417 = vpack.c.b16 %v3404, %v3403
          %v3418 = vpack.c.b16 %v3406, %v3405
          %v3419 = vpack.c.b16 %v3408, %v3407
          %v3420 = vpack.c.b16 %v3410, %v3409
          %v3421 = vpack.c.b16 %v3412, %v3411
          %v3422 = vpack.c.b16 %v3414, %v3413
          %3431 = vmatprep.subr.bf16.mxu0 0
          %3432 = vmatpush1.bf16.msra.mxu0 %v3415
          %3433 = vmatprep.subr.bf16.mxu0 0
          %3434 = vmatpush1.bf16.msra.mxu0 %v3416
          %3435 = vmatprep.subr.bf16.mxu0 0
          %3436 = vmatpush1.bf16.msra.mxu0 %v3417
          %3437 = vmatprep.subr.bf16.mxu0 0
          %3438 = vmatpush1.bf16.msra.mxu0 %v3418
          %3439 = vmatprep.subr.bf16.mxu0 0
          %3440 = vmatpush1.bf16.msra.mxu0 %v3419
          %3441 = vmatprep.subr.bf16.mxu0 0
          %3442 = vmatpush1.bf16.msra.mxu0 %v3420
          %3443 = vmatprep.subr.bf16.mxu0 0
          %3444 = vmatpush1.bf16.msra.mxu0 %v3421
          %3445 = vmatprep.subr.bf16.mxu0 0
          %3446 = vmatpush1.bf16.msra.mxu0 %v3422
          %3447 = vmatprep.subr.bf16.mxu0 0
          %3448 = vmatpush1.bf16.msra.mxu0 0
          %3449 = vmatprep.subr.bf16.mxu0 0
          %3450 = vmatpush1.bf16.msra.mxu0 0
          %3451 = vmatprep.subr.bf16.mxu0 0
          %3452 = vmatpush1.bf16.msra.mxu0 0
          %3453 = vmatprep.subr.bf16.mxu0 0
          %3454 = vmatpush1.bf16.msra.mxu0 0
          %3455 = vmatprep.subr.bf16.mxu0 0
          %3456 = vmatpush1.bf16.msra.mxu0 0
          %3457 = vmatprep.subr.bf16.mxu0 0
          %3458 = vmatpush1.bf16.msra.mxu0 0
          %3459 = vmatprep.subr.bf16.mxu0 0
          %3460 = vmatpush1.bf16.msra.mxu0 0
          %3461 = vmatprep.subr.bf16.mxu0 0
          %3462 = vmatpush1.bf16.msra.mxu0 0
          %3463 = vmatprep.mubr.bf16.mxu0 0
          %3464 = vmatmul.mubr.bf16.gmra.mrb[0].mxu0 %v3357
          %v3465 = vpop.f32.mrb[0].mxu0
          %v3466 = vadd.f32 %v3381, %v3465
          %v3467 = vpop.f32.mrb[0].mxu0
          %v3468 = vpop.f32.mrb[0].mxu0
          %v3469 = vpop.f32.mrb[0].mxu0
          %3470 = vdwg.mxu0
          %v3471 = vtanh.pop %v3466
          %v3472 = vpack.c.bf16 %v3471, %v3471
          %s3473 = scalar_lea.vmem %s4, 128
          %v3474 = vld [vmem:[%s3473] sm:$0xf]
          %v3475 = vld [vmem:[%s3473 + $0x4] sm:$0xf]
          %v3476 = vld [vmem:[%s3473 + $0x8] sm:$0xf]
          %v3477 = vld [vmem:[%s3473 + $0xc] sm:$0xf]
          %v3478 = vld [vmem:[%s3473 + $0x10] sm:$0xf]
          %v3479 = vld [vmem:[%s3473 + $0x14] sm:$0xf]
          %v3480 = vld [vmem:[%s3473 + $0x18] sm:$0xf]
          %v3481 = vld [vmem:[%s3473 + $0x1c] sm:$0xf]
          %v3482 = vld [vmem:[%s3473 + $0x20] sm:$0xf]
          %v3483 = vld [vmem:[%s3473 + $0x24] sm:$0xf]
          %v3484 = vld [vmem:[%s3473 + $0x28] sm:$0xf]
          %v3485 = vld [vmem:[%s3473 + $0x2c] sm:$0xf]
          %v3486 = vld [vmem:[%s3473 + $0x30] sm:$0xf]
          %v3487 = vld [vmem:[%s3473 + $0x34] sm:$0xf]
          %v3488 = vld [vmem:[%s3473 + $0x38] sm:$0xf]
          %v3489 = vld [vmem:[%s3473 + $0x3c] sm:$0xf]
          %s3490 = scalar_lea.vmem %s5, 2
          %v3491 = vld [vmem:[%s3490] sm:$0x1]
          %v3493 = vlaneseq
          %v3494 = vshrl.u32 %v3493, 7
          %v3495 = vsub.s32 0, %v3494
          %v3496 = vrot.slane %v3491, %v3495
          %v3514 = vunpack.c.l.b16 %v3474
          %v3515 = vunpack.c.l.b16 %v3475
          %v3516 = vunpack.c.l.b16 %v3476
          %v3517 = vunpack.c.l.b16 %v3477
          %v3518 = vunpack.c.l.b16 %v3478
          %v3519 = vunpack.c.l.b16 %v3479
          %v3520 = vunpack.c.l.b16 %v3480
          %v3521 = vunpack.c.l.b16 %v3481
          %v3522 = vunpack.c.l.b16 %v3482
          %v3523 = vunpack.c.l.b16 %v3483
          %v3524 = vunpack.c.l.b16 %v3484
          %v3525 = vunpack.c.l.b16 %v3485
          %v3526 = vunpack.c.l.b16 %v3486
          %v3527 = vunpack.c.l.b16 %v3487
          %v3528 = vunpack.c.l.b16 %v3488
          %v3529 = vunpack.c.l.b16 %v3489
          %v3530 = vpack.c.b16 %v3515, %v3514
          %v3531 = vpack.c.b16 %v3517, %v3516
          %v3532 = vpack.c.b16 %v3519, %v3518
          %v3533 = vpack.c.b16 %v3521, %v3520
          %v3534 = vpack.c.b16 %v3523, %v3522
          %v3535 = vpack.c.b16 %v3525, %v3524
          %v3536 = vpack.c.b16 %v3527, %v3526
          %v3537 = vpack.c.b16 %v3529, %v3528
          %3546 = vmatprep.subr.bf16.mxu0 0
          %3547 = vmatpush1.bf16.msra.mxu0 %v3530
          %3548 = vmatprep.subr.bf16.mxu0 0
          %3549 = vmatpush1.bf16.msra.mxu0 %v3531
          %3550 = vmatprep.subr.bf16.mxu0 0
          %3551 = vmatpush1.bf16.msra.mxu0 %v3532
          %3552 = vmatprep.subr.bf16.mxu0 0
          %3553 = vmatpush1.bf16.msra.mxu0 %v3533
          %3554 = vmatprep.subr.bf16.mxu0 0
          %3555 = vmatpush1.bf16.msra.mxu0 %v3534
          %3556 = vmatprep.subr.bf16.mxu0 0
          %3557 = vmatpush1.bf16.msra.mxu0 %v3535
          %3558 = vmatprep.subr.bf16.mxu0 0
          %3559 = vmatpush1.bf16.msra.mxu0 %v3536
          %3560 = vmatprep.subr.bf16.mxu0 0
          %3561 = vmatpush1.bf16.msra.mxu0 %v3537
          %3562 = vmatprep.subr.bf16.mxu0 0
          %3563 = vmatpush1.bf16.msra.mxu0 0
          %3564 = vmatprep.subr.bf16.mxu0 0
          %3565 = vmatpush1.bf16.msra.mxu0 0
          %3566 = vmatprep.subr.bf16.mxu0 0
          %3567 = vmatpush1.bf16.msra.mxu0 0
          %3568 = vmatprep.subr.bf16.mxu0 0
          %3569 = vmatpush1.bf16.msra.mxu0 0
          %3570 = vmatprep.subr.bf16.mxu0 0
          %3571 = vmatpush1.bf16.msra.mxu0 0
          %3572 = vmatprep.subr.bf16.mxu0 0
          %3573 = vmatpush1.bf16.msra.mxu0 0
          %3574 = vmatprep.subr.bf16.mxu0 0
          %3575 = vmatpush1.bf16.msra.mxu0 0
          %3576 = vmatprep.subr.bf16.mxu0 0
          %3577 = vmatpush1.bf16.msra.mxu0 0
          %3578 = vmatprep.mubr.bf16.mxu0 0
          %3579 = vmatmul.mubr.bf16.gmra.mrb[0].mxu0 %v3472
          %v3580 = vpop.f32.mrb[0].mxu0
          %v3581 = vadd.f32 %v3496, %v3580
          %v3582 = vpop.f32.mrb[0].mxu0
          %v3583 = vpop.f32.mrb[0].mxu0
          %v3584 = vpop.f32.mrb[0].mxu0
          %3585 = vdwg.mxu0
          %v3586 = vtanh.pop %v3581
          %v3587 = vpack.c.bf16 %v3586, %v3586
          %s3588 = scalar_lea.vmem %s4, 192
          %v3589 = vld [vmem:[%s3588] sm:$0xf]
          %v3590 = vld [vmem:[%s3588 + $0x4] sm:$0xf]
          %v3591 = vld [vmem:[%s3588 + $0x8] sm:$0xf]
          %v3592 = vld [vmem:[%s3588 + $0xc] sm:$0xf]
          %v3593 = vld [vmem:[%s3588 + $0x10] sm:$0xf]
          %v3594 = vld [vmem:[%s3588 + $0x14] sm:$0xf]
          %v3595 = vld [vmem:[%s3588 + $0x18] sm:$0xf]
          %v3596 = vld [vmem:[%s3588 + $0x1c] sm:$0xf]
          %v3597 = vld [vmem:[%s3588 + $0x20] sm:$0xf]
          %v3598 = vld [vmem:[%s3588 + $0x24] sm:$0xf]
          %v3599 = vld [vmem:[%s3588 + $0x28] sm:$0xf]
          %v3600 = vld [vmem:[%s3588 + $0x2c] sm:$0xf]
          %v3601 = vld [vmem:[%s3588 + $0x30] sm:$0xf]
          %v3602 = vld [vmem:[%s3588 + $0x34] sm:$0xf]
          %v3603 = vld [vmem:[%s3588 + $0x38] sm:$0xf]
          %v3604 = vld [vmem:[%s3588 + $0x3c] sm:$0xf]
          %s3605 = scalar_lea.vmem %s5, 3
          %v3606 = vld [vmem:[%s3605] sm:$0x1]
          %v3608 = vlaneseq
          %v3609 = vshrl.u32 %v3608, 7
          %v3610 = vsub.s32 0, %v3609
          %v3611 = vrot.slane %v3606, %v3610
          %v3629 = vunpack.c.l.b16 %v3589
          %v3630 = vunpack.c.l.b16 %v3590
          %v3631 = vunpack.c.l.b16 %v3591
          %v3632 = vunpack.c.l.b16 %v3592
          %v3633 = vunpack.c.l.b16 %v3593
          %v3634 = vunpack.c.l.b16 %v3594
          %v3635 = vunpack.c.l.b16 %v3595
          %v3636 = vunpack.c.l.b16 %v3596
          %v3637 = vunpack.c.l.b16 %v3597
          %v3638 = vunpack.c.l.b16 %v3598
          %v3639 = vunpack.c.l.b16 %v3599
          %v3640 = vunpack.c.l.b16 %v3600
          %v3641 = vunpack.c.l.b16 %v3601
          %v3642 = vunpack.c.l.b16 %v3602
          %v3643 = vunpack.c.l.b16 %v3603
          %v3644 = vunpack.c.l.b16 %v3604
          %v3645 = vpack.c.b16 %v3630, %v3629
          %v3646 = vpack.c.b16 %v3632, %v3631
          %v3647 = vpack.c.b16 %v3634, %v3633
          %v3648 = vpack.c.b16 %v3636, %v3635
          %v3649 = vpack.c.b16 %v3638, %v3637
          %v3650 = vpack.c.b16 %v3640, %v3639
          %v3651 = vpack.c.b16 %v3642, %v3641
          %v3652 = vpack.c.b16 %v3644, %v3643
          %3661 = vmatprep.subr.bf16.mxu0 0
          %3662 = vmatpush1.bf16.msra.mxu0 %v3645
          %3663 = vmatprep.subr.bf16.mxu0 0
          %3664 = vmatpush1.bf16.msra.mxu0 %v3646
          %3665 = vmatprep.subr.bf16.mxu0 0
          %3666 = vmatpush1.bf16.msra.mxu0 %v3647
          %3667 = vmatprep.subr.bf16.mxu0 0
          %3668 = vmatpush1.bf16.msra.mxu0 %v3648
          %3669 = vmatprep.subr.bf16.mxu0 0
          %3670 = vmatpush1.bf16.msra.mxu0 %v3649
          %3671 = vmatprep.subr.bf16.mxu0 0
          %3672 = vmatpush1.bf16.msra.mxu0 %v3650
          %3673 = vmatprep.subr.bf16.mxu0 0
          %3674 = vmatpush1.bf16.msra.mxu0 %v3651
          %3675 = vmatprep.subr.bf16.mxu0 0
          %3676 = vmatpush1.bf16.msra.mxu0 %v3652
          %3677 = vmatprep.subr.bf16.mxu0 0
          %3678 = vmatpush1.bf16.msra.mxu0 0
          %3679 = vmatprep.subr.bf16.mxu0 0
          %3680 = vmatpush1.bf16.msra.mxu0 0
          %3681 = vmatprep.subr.bf16.mxu0 0
          %3682 = vmatpush1.bf16.msra.mxu0 0
          %3683 = vmatprep.subr.bf16.mxu0 0
          %3684 = vmatpush1.bf16.msra.mxu0 0
          %3685 = vmatprep.subr.bf16.mxu0 0
          %3686 = vmatpush1.bf16.msra.mxu0 0
          %3687 = vmatprep.subr.bf16.mxu0 0
          %3688 = vmatpush1.bf16.msra.mxu0 0
          %3689 = vmatprep.subr.bf16.mxu0 0
          %3690 = vmatpush1.bf16.msra.mxu0 0
          %3691 = vmatprep.subr.bf16.mxu0 0
          %3692 = vmatpush1.bf16.msra.mxu0 0
          %3693 = vmatprep.mubr.bf16.mxu0 0
          %3694 = vmatmul.mubr.bf16.gmra.mrb[0].mxu0 %v3587
          %v3695 = vpop.f32.mrb[0].mxu0
          %v3696 = vadd.f32 %v3611, %v3695
          %v3697 = vpop.f32.mrb[0].mxu0
          %v3698 = vpop.f32.mrb[0].mxu0
          %v3699 = vpop.f32.mrb[0].mxu0
          %3700 = vdwg.mxu0
          %3701 = vst [vmem:[%s6] sm:$0xff] %v3696
        $region64: #{lstm_net_forward.1} parent=43 // pred_fallthru
          _
        // Predicated region
        $region65: #{lstm_net_forward.1} parent=43 // pred_check
          %p3702 = pneg %p189
        $region66: #{lstm_net_forward.1} parent=43 // pred_check_branch
          %3704 = sbr.rel (%p3702) target = $region68
        $region67: #{lstm_net_forward.1} parent=43 // pred_region
          _
        $region68: #{lstm_net_forward.1} parent=43 // pred_fallthru
          _
        // Predicated region
        $region69: #{lstm_net_forward.1} parent=43 // pred_check
          %p3705 = pneg %p189
        $region70: #{lstm_net_forward.1} parent=43 // pred_check_branch
          %3707 = sbr.rel (%p3705) target = $region72
        $region71: #{lstm_net_forward.1} parent=43 // pred_region
          _
        $region72: #{lstm_net_forward.1} parent=43 // pred_fallthru
          _
      $region44: #{lstm_net_forward.1} parent=5 // pred_fallthru
        _
      %p3708 = scmp.le.s32.totalorder 2, %s18
      // Predicated region
      $region73: #{lstm_net_forward.1} parent=5 // pred_check
        %p3709 = pneg %p3708
      $region74: #{lstm_net_forward.1} parent=5 // pred_check_branch
        %3711 = sbr.rel (%p3709) target = $region76
      $region75: #{lstm_net_forward.1} parent=5 // pred_region
        %s3712 = ssub.s32 %s18, 2
      $region76: #{lstm_net_forward.1} parent=5 // pred_fallthru
        _
    $region6: #{lstm_net_forward.1} parent=1 // loop_footer
      %s22 = sadd.s32 1, %s18
    $region7: #{lstm_net_forward.1} parent=1 // loop_footer_branch
      %17 = sbr.rel target = $region3
    $region8: #{lstm_net_forward.1} parent=1 // loop_exit
      _
    %3713 = vsyncpa [#allocation5], 1
    %s3714 = scalar_lea.sflag [#allocation5], 1
    %3715 = vsyncpa %s3714, 1
    %3716 = vsyncpa [#allocation7], 1
    %s3717 = scalar_lea.sflag [#allocation7], 1
    %3718 = vsyncpa %s3717, 1

</llo_original>
